<compile_context>
chip_gen: v6e
topology: v6e:2x2x1
jax: 0.10.0
libtpu: 0.0.40
codegen_flags: <defaults>
</compile_context>

<pallas_src>
import functools

import numpy as np
import jax
import jax.numpy as jnp
from jax import lax
from jax.experimental import pallas as pl
from jax.experimental.pallas import tpu as pltpu


# ----------------------------------------------------------------------------------
# Fused forward kernel (runs once per batch element; grid=(B,), "parallel").
# ----------------------------------------------------------------------------------
def _fused_kernel(*refs, T, Tpad, K, depth, OC, alpha):
    f32, bf16 = jnp.float32, jnp.bfloat16
    pad = (K - 1) // 2
    Ts = [T // (2 ** i) for i in range(depth)]             # valid time length per scale

    (x_ref, wp_ref, bp_ref, wspp_ref, bspp_ref, wfuse_ref, bfuse_ref) = refs[:7]
    wc_refs = refs[7:7 + depth]
    (bc_ref, wl0_ref, bl0_ref, wl1_ref, bl1_ref,
     down_ref, upf_ref, upl_ref) = refs[7 + depth:15 + depth]
    o_ref = refs[15 + depth]

    # Tiny (1, Tpad) lane index for valid-region masking (negligible VALU work).
    lane = lax.broadcasted_iota(jnp.int32, (1, Tpad), 1)

    def prelu(v):
        return jnp.where(v > 0, v, alpha * v)

    def mm(a, b):
        # bf16 MXU matmul, f32 accumulation.
        return jnp.dot(a.astype(bf16), b.astype(bf16), preferred_element_type=f32)

    def rolled_views(v):
        # view_k[:, t] == v[:, t + k - pad] for the positions we actually consume:
        # circular wrap lands in the zeroed pad region (Tpad >= T_valid + pad), so this
        # reproduces the conv's zero padding with XLU rotations instead of matmuls.
        out = []
        for k in range(K):
            s = (pad - k) % Tpad
            out.append(v if s == 0 else pltpu.roll(v, shift=s, axis=1))
        return out

    def dw_from_views(views, w4_ref, i, bias):
        # Depthwise conv (+ folded eval-BN) at full (unstrided) resolution.
        acc = bias                                          # (OC, 1) broadcasts up
        for k in range(K):
            acc = acc + w4_ref[i, k] * views[k]             # (OC,1) * (OC,Tpad), f32 VPU
        return acc

    # ------------- proj: 1x1 conv + folded BN + PReLU, then zero the pad -------------
    x0 = x_ref[0]                                           # (IC, Tpad) f32
    h = prelu(mm(wp_ref[...], x0) + bp_ref[...])            # (OC, Tpad)
    h = jnp.where(lane < Ts[0], h, 0.0)                     # keep pad region zero

    # ------------- spp_dw pyramid ([0] stride 1, rest stride 2) ----------------------
    views = rolled_views(h)
    out0 = dw_from_views(views, wspp_ref, 0, bspp_ref[0])
    outputs = [jnp.where(lane < Ts[0], out0, 0.0)]
    fuse_down = [None] * depth
    for i in range(1, depth):
        # spp_dw[i] and fuse_layers[i][0] share the rolled views of outputs[i-1] AND the
        # single stride-2 downsample matmul (sublane concat -> one deeper MXU push).
        views = rolled_views(outputs[i - 1])
        a_spp = dw_from_views(views, wspp_ref, i, bspp_ref[i])
        a_fus = dw_from_views(views, wfuse_ref, i - 1, bfuse_ref[i - 1])
        both = jnp.concatenate([a_spp, a_fus], axis=0)      # (2*OC, Tpad)
        down = mm(both, down_ref[i - 1])                    # picks t=2*d, zeroes d>=Ts[i]
        outputs.append(down[:OC])
        fuse_down[i] = down[OC:]

    # ------------- fuse + concat 1x1 convs (materialized sublane concat) -------------
    x_fuse = []
    for i in range(depth):
        branches = []
        if i - 1 >= 0:
            branches.append(fuse_down[i])                   # stride-2 conv of scale i-1
        branches.append(outputs[i])                         # same scale
        if i + 1 < depth:
            branches.append(mm(outputs[i + 1], upf_ref[i])) # nearest x2 upsample
        cat = jnp.concatenate(branches, axis=0)             # (n*OC, Tpad), n in {2,3}
        x_fuse.append(prelu(mm(wc_refs[i][...], cat) + bc_ref[i]))

    # ------------- last[0]: upsample every scale to T0, concat, 1x1 + PReLU ----------
    slabs = [x_fuse[0]]
    for i in range(1, depth):
        slabs.append(mm(x_fuse[i], upl_ref[i - 1]))         # nearest x2^i upsample
    cat = jnp.concatenate(slabs, axis=0)                    # (depth*OC, Tpad)
    z = prelu(mm(wl0_ref[...], cat) + bl0_ref[...])

    # ------------- last[1]: plain 1x1 conv, fused residual add -----------------------
    # TODO(synk): dropout_layer is None for the default dropout=-1, nothing to apply.
    y = mm(wl1_ref[...], z) + bl1_ref[...]
    o_ref[0] = (x0 + y).astype(o_ref.dtype)


# ----------------------------------------------------------------------------------
# Wrapper: grid over batch, lane-dense padded time axis, resident bf16 weights.
# ----------------------------------------------------------------------------------
def visual_subnetwork_forward(x, p, *, depth=4, kernel_size=5, alpha=0.25):
    B, IC, T = x.shape
    OC = p["wp"].shape[0]
    K = kernel_size
    pad = (K - 1) // 2
    assert depth >= 2
    assert K % 2 == 1, "odd kernel_size required (symmetric padding)"
    assert T % (2 ** (depth - 1)) == 0, "T must be divisible by 2**(depth-1)"

    # Lane-dense padded time axis, with >= pad slack so circular rolls wrap into zeros.
    Tpad = -(-T // 128) * 128
    if Tpad - T < pad:
        Tpad += 128
    Ts = [T // (2 ** i) for i in range(depth)]

    # ---- static 0/1 selection matrices (exact in bf16), built host-side -------------
    s_i = np.arange(Tpad)[:, None]
    d_i = np.arange(Tpad)[None, :]
    # down[i-1]: scale i-1 -> i, out[d] = in[2*d] for d < Ts[i] (also masks the pad).
    down = np.stack([(s_i == 2 * d_i) & (d_i < Ts[i]) for i in range(1, depth)])
    # upf[i]: scale i+1 -> i, nearest x2 (valid region only).
    upf = np.stack([(s_i == d_i // 2) & (d_i < Ts[i]) for i in range(depth - 1)])
    # upl[i-1]: scale i -> 0, nearest x2^i (valid region only).
    upl = np.stack([(s_i == d_i // (2 ** i)) & (d_i < Ts[0]) for i in range(1, depth)])
    down, upf, upl = (jnp.asarray(m, jnp.bfloat16) for m in (down, upf, upl))

    bf16 = jnp.bfloat16
    x_pad = jnp.pad(x.astype(jnp.float32), ((0, 0), (0, 0), (0, Tpad - T)))
    inputs = [x_pad,
              p["wp"].astype(bf16), p["bp"],
              p["wspp"], p["bspp"], p["wfuse"], p["bfuse"],
              *[w.astype(bf16) for w in p["wc"]], p["bc"],
              p["wl0"].astype(bf16), p["bl0"],
              p["wl1"].astype(bf16), p["bl1"],
              down, upf, upl]

    def resident(a):
        # Full-array block, same block index on every grid step -> stays in VMEM.
        nd = a.ndim

        def idx(b):
            return (0,) * nd

        return pl.BlockSpec(a.shape, idx)

    in_specs = ([pl.BlockSpec((1, IC, Tpad), lambda b: (b, 0, 0))]
                + [resident(a) for a in inputs[1:]])

    kernel = functools.partial(_fused_kernel, T=T, Tpad=Tpad, K=K,
                               depth=depth, OC=OC, alpha=alpha)
    out_pad = pl.pallas_call(
        kernel,
        out_shape=jax.ShapeDtypeStruct((B, IC, Tpad), jnp.float32),
        grid=(B,),
        in_specs=in_specs,
        out_specs=pl.BlockSpec((1, IC, Tpad), lambda b: (b, 0, 0)),
        compiler_params=pltpu.CompilerParams(
            dimension_semantics=("parallel",),           # megacore split over batch (v7x)
            vmem_limit_bytes=32 * 1024 * 1024,           # explicit; fits v5e..v7x
        ),
    )(*inputs)
    return out_pad[:, :, :T]                             # crop lane padding


# ----------------------------------------------------------------------------------
# Deterministic synthetic parameters (PyTorch-default-like init), with eval-mode
# BatchNorm and the conv bias folded into each conv's weight / bias.
# ----------------------------------------------------------------------------------
def _init_conv(key, cout, cin_per_group, k):
    kw, kb = jax.random.split(key)
    fan_in = cin_per_group * k
    bound = 1.0 / (fan_in ** 0.5)
    w = jax.random.uniform(kw, (cout, cin_per_group, k), jnp.float32, -bound, bound)
    b = jax.random.uniform(kb, (cout,), jnp.float32, -bound, bound)
    return w, b


def _init_bn(key, c, eps=1e-5):
    kg, kb, km, kv = jax.random.split(key, 4)
    gamma = 1.0 + 0.1 * jax.random.normal(kg, (c,), jnp.float32)
    beta = 0.1 * jax.random.normal(kb, (c,), jnp.float32)
    rmean = 0.1 * jax.random.normal(km, (c,), jnp.float32)
    rvar = 1.0 + 0.1 * jnp.abs(jax.random.normal(kv, (c,), jnp.float32))
    scale = gamma / jnp.sqrt(rvar + eps)
    shift = beta - rmean * scale
    return scale, shift


def build_params(key, in_chan, out_chan, depth, kernel_size):
    keys = iter(jax.random.split(key, 64))

    def conv_bn_folded(cout, cin_per_group, k, with_bn=True):
        w, b = _init_conv(next(keys), cout, cin_per_group, k)
        if with_bn:
            scale, shift = _init_bn(next(keys), cout)
        else:
            scale = jnp.ones((cout,), jnp.float32)
            shift = jnp.zeros((cout,), jnp.float32)
        w_f = w * scale[:, None, None]                    # fold BN scale into weight
        b_f = (b * scale + shift).reshape(cout, 1)        # fold conv bias + BN shift
        return w_f, b_f

    p = {}

    # proj: ConvNormAct(in_chan -> out_chan, k=1, PReLU)
    w, b = conv_bn_folded(out_chan, in_chan, 1)
    p["wp"], p["bp"] = w[:, :, 0], b

    # spp_dw: depthwise ConvNormAct (no act); [0] stride 1, rest stride 2.
    # Stored (depth, K, OC, 1) so tap weights are indexed on leading axes in-kernel.
    wspp, bspp = [], []
    for _ in range(depth):
        w, b = conv_bn_folded(out_chan, 1, kernel_size)
        wspp.append(jnp.transpose(w[:, 0, :])[:, :, None]); bspp.append(b)
    p["wspp"], p["bspp"] = jnp.stack(wspp), jnp.stack(bspp)

    # fuse_layers[i][0]: depthwise stride-2 ConvNormAct, defined for i >= 1
    wfuse, bfuse = [], []
    for _ in range(1, depth):
        w, b = conv_bn_folded(out_chan, 1, kernel_size)
        wfuse.append(jnp.transpose(w[:, 0, :])[:, :, None]); bfuse.append(b)
    p["wfuse"], p["bfuse"] = jnp.stack(wfuse), jnp.stack(bfuse)

    # concat layers: 1x1 ConvNormAct with 2*oc or 3*oc input channels, PReLU
    wc, bc = [], []
    for i in range(depth):
        mult = 2 if (i == 0 or i == depth - 1) else 3
        w, b = conv_bn_folded(out_chan, mult * out_chan, 1)
        wc.append(w[:, :, 0]); bc.append(b)
    p["wc"], p["bc"] = tuple(wc), jnp.stack(bc)

    # last: ConvNormAct(depth*oc -> oc, 1x1, PReLU) then plain Conv1d(oc -> in_chan, 1)
    w, b = conv_bn_folded(out_chan, depth * out_chan, 1)
    p["wl0"], p["bl0"] = w[:, :, 0], b
    w, b = conv_bn_folded(in_chan, out_chan, 1, with_bn=False)
    p["wl1"], p["bl1"] = w[:, :, 0], b
    return p


# ----------------------------------------------------------------------------------
# Pure-JAX reference of VisualSubnetwork.forward (same folded params, f32).
# ----------------------------------------------------------------------------------
def reference_forward(x, p, *, depth, kernel_size, alpha):
    pad = (kernel_size - 1) // 2

    def prelu(v):
        return jnp.where(v > 0, v, alpha * v)

    def conv1x1(w, b, h):                                  # w: (Cout,Cin), b: (Cout,1)
        return jnp.einsum("oc,bct->bot", w, h) + b[None]

    def dwconv(w_tap, b, h, stride):                       # w_tap: (K, C, 1)
        Bn, C, L = h.shape
        hp = jnp.pad(h, ((0, 0), (0, 0), (pad, pad)))
        Lo = (L + 2 * pad - kernel_size) // stride + 1
        out = jnp.zeros((Bn, C, Lo), jnp.float32)
        for k in range(kernel_size):
            sl = hp[:, :, k:k + (Lo - 1) * stride + 1:stride]
            out = out + w_tap[k][None] * sl
        return out + b[None]

    def upsample_to(h, L):                                 # nearest, L = f * h.shape[-1]
        return jnp.repeat(h, L // h.shape[-1], axis=-1)

    res = x
    h = prelu(conv1x1(p["wp"], p["bp"], x))
    outputs = [dwconv(p["wspp"][0], p["bspp"][0], h, 1)]
    for i in range(1, depth):
        outputs.append(dwconv(p["wspp"][i], p["bspp"][i], outputs[-1], 2))
    x_fuse = []
    for i in range(depth):
        br = []
        if i - 1 >= 0:
            br.append(dwconv(p["wfuse"][i - 1], p["bfuse"][i - 1], outputs[i - 1], 2))
        br.append(outputs[i])
        if i + 1 < depth:
            br.append(upsample_to(outputs[i + 1], outputs[i].shape[-1]))
        x_fuse.append(prelu(conv1x1(p["wc"][i], p["bc"][i], jnp.concatenate(br, axis=1))))
    L0 = outputs[0].shape[-1]
    slabs = [x_fuse[0]] + [upsample_to(x_fuse[i], L0) for i in range(1, depth)]
    z = prelu(conv1x1(p["wl0"], p["bl0"], jnp.concatenate(slabs, axis=1)))
    y = conv1x1(p["wl1"], p["bl1"], z)
    return res + y


if __name__ == "__main__":
    B, IN_CHAN, OUT_CHAN, T = 2, 16, 32, 16
    DEPTH, KSIZE, ALPHA = 4, 5, 0.25

    root = jax.random.PRNGKey(0)
    k_param, k_x = jax.random.split(root)
    params = build_params(k_param, IN_CHAN, OUT_CHAN, DEPTH, KSIZE)
    x = jax.random.normal(k_x, (B, IN_CHAN, T), jnp.float32)

    fwd = jax.jit(functools.partial(visual_subnetwork_forward,
                                    depth=DEPTH, kernel_size=KSIZE, alpha=ALPHA))
    out = jax.block_until_ready(fwd(x, params))

    assert out.shape == (B, IN_CHAN, T), out.shape
    assert bool(jnp.all(jnp.isfinite(out)))

    # Correctness vs. pure-JAX reference (kernel feeds the MXU bf16 -> small tolerance).
    ref = reference_forward(x, params, depth=DEPTH, kernel_size=KSIZE, alpha=ALPHA)
    assert jnp.allclose(out, ref, atol=5e-2, rtol=5e-2), (
        f"max abs err {float(jnp.max(jnp.abs(out - ref)))}")

    print("KERNEL_OK")
</pallas_src>

<mosaic_0001>
module attributes {stable_mosaic.version = 11 : i64} {
  func.func @_fused_kernel(%arg0: i32, %arg1: memref<1x16x128xf32, #tpu.memory_space<vmem>>, %arg2: memref<32x16xbf16, #tpu.memory_space<vmem>>, %arg3: memref<32x1xf32, #tpu.memory_space<vmem>>, %arg4: memref<4x5x32x1xf32, #tpu.memory_space<vmem>>, %arg5: memref<4x32x1xf32, #tpu.memory_space<vmem>>, %arg6: memref<3x5x32x1xf32, #tpu.memory_space<vmem>>, %arg7: memref<3x32x1xf32, #tpu.memory_space<vmem>>, %arg8: memref<32x64xbf16, #tpu.memory_space<vmem>>, %arg9: memref<32x96xbf16, #tpu.memory_space<vmem>>, %arg10: memref<32x96xbf16, #tpu.memory_space<vmem>>, %arg11: memref<32x64xbf16, #tpu.memory_space<vmem>>, %arg12: memref<4x32x1xf32, #tpu.memory_space<vmem>>, %arg13: memref<32x128xbf16, #tpu.memory_space<vmem>>, %arg14: memref<32x1xf32, #tpu.memory_space<vmem>>, %arg15: memref<16x32xbf16, #tpu.memory_space<vmem>>, %arg16: memref<16x1xf32, #tpu.memory_space<vmem>>, %arg17: memref<3x128x128xbf16, #tpu.memory_space<vmem>>, %arg18: memref<3x128x128xbf16, #tpu.memory_space<vmem>>, %arg19: memref<3x128x128xbf16, #tpu.memory_space<vmem>>, %arg20: memref<1x16x128xf32, #tpu.memory_space<vmem>>) attributes {dimension_semantics = [#tpu.dimension_semantics<parallel>], iteration_bounds = array<i64: 2>, scalar_prefetch = 0 : i64, scratch_operands = 0 : i64, tpu.core_type = #tpu.core_type<tc>, window_params = [{transform_indices = @transform_0, window_bounds = array<i64: 1, 16, 128>}, {pipeline_mode = #tpu.pipeline_mode<synchronous>, transform_indices = @transform_1, window_bounds = array<i64: 32, 16>}, {pipeline_mode = #tpu.pipeline_mode<synchronous>, transform_indices = @transform_2, window_bounds = array<i64: 32, 1>}, {pipeline_mode = #tpu.pipeline_mode<synchronous>, transform_indices = @transform_3, window_bounds = array<i64: 4, 5, 32, 1>}, {pipeline_mode = #tpu.pipeline_mode<synchronous>, transform_indices = @transform_4, window_bounds = array<i64: 4, 32, 1>}, {pipeline_mode = #tpu.pipeline_mode<synchronous>, transform_indices = @transform_5, window_bounds = array<i64: 3, 5, 32, 1>}, {pipeline_mode = #tpu.pipeline_mode<synchronous>, transform_indices = @transform_6, window_bounds = array<i64: 3, 32, 1>}, {pipeline_mode = #tpu.pipeline_mode<synchronous>, transform_indices = @transform_7, window_bounds = array<i64: 32, 64>}, {pipeline_mode = #tpu.pipeline_mode<synchronous>, transform_indices = @transform_8, window_bounds = array<i64: 32, 96>}, {pipeline_mode = #tpu.pipeline_mode<synchronous>, transform_indices = @transform_9, window_bounds = array<i64: 32, 96>}, {pipeline_mode = #tpu.pipeline_mode<synchronous>, transform_indices = @transform_10, window_bounds = array<i64: 32, 64>}, {pipeline_mode = #tpu.pipeline_mode<synchronous>, transform_indices = @transform_11, window_bounds = array<i64: 4, 32, 1>}, {pipeline_mode = #tpu.pipeline_mode<synchronous>, transform_indices = @transform_12, window_bounds = array<i64: 32, 128>}, {pipeline_mode = #tpu.pipeline_mode<synchronous>, transform_indices = @transform_13, window_bounds = array<i64: 32, 1>}, {pipeline_mode = #tpu.pipeline_mode<synchronous>, transform_indices = @transform_14, window_bounds = array<i64: 16, 32>}, {pipeline_mode = #tpu.pipeline_mode<synchronous>, transform_indices = @transform_15, window_bounds = array<i64: 16, 1>}, {pipeline_mode = #tpu.pipeline_mode<synchronous>, transform_indices = @transform_16, window_bounds = array<i64: 3, 128, 128>}, {pipeline_mode = #tpu.pipeline_mode<synchronous>, transform_indices = @transform_17, window_bounds = array<i64: 3, 128, 128>}, {pipeline_mode = #tpu.pipeline_mode<synchronous>, transform_indices = @transform_18, window_bounds = array<i64: 3, 128, 128>}, {transform_indices = @transform_19, window_bounds = array<i64: 1, 16, 128>}]} {
    %0 = tpu.iota {dimensions = array<i32: 1>} : vector<1x128xi32>
    %c0 = arith.constant 0 : index
    %c0_0 = arith.constant 0 : index
    %c0_1 = arith.constant 0 : index
    %1 = vector.load %arg1[%c0, %c0_0, %c0_1] : memref<1x16x128xf32, #tpu.memory_space<vmem>>, vector<1x16x128xf32>
    %2 = vector.shape_cast %1 : vector<1x16x128xf32> to vector<16x128xf32>
    %c0_2 = arith.constant 0 : index
    %c0_3 = arith.constant 0 : index
    %3 = vector.load %arg2[%c0_2, %c0_3] : memref<32x16xbf16, #tpu.memory_space<vmem>>, vector<32x16xbf16>
    %4 = arith.truncf %2 : vector<16x128xf32> to vector<16x128xbf16>
    %cst = arith.constant dense<0.000000e+00> : vector<32x128xf32>
    %5 = tpu.matmul %3, %4, %cst {dimension_numbers = #tpu.dot_dimension_numbers<[1], [0], [0], [1], [0, 0, 1, 1], [], []>} : vector<32x16xbf16>, vector<16x128xbf16>, vector<32x128xf32> -> vector<32x128xf32>
    %c0_4 = arith.constant 0 : index
    %c0_5 = arith.constant 0 : index
    %6 = vector.load %arg3[%c0_4, %c0_5] : memref<32x1xf32, #tpu.memory_space<vmem>>, vector<32x1xf32>
    %7 = vector.broadcast %6 : vector<32x1xf32> to vector<32x128xf32>
    %8 = arith.addf %5, %7 : vector<32x128xf32>
    %cst_6 = arith.constant 0.000000e+00 : f32
    %9 = vector.broadcast %cst_6 : f32 to vector<32x128xf32>
    %10 = arith.cmpf ogt, %8, %9 : vector<32x128xf32>
    %cst_7 = arith.constant 2.500000e-01 : f32
    %11 = vector.broadcast %cst_7 : f32 to vector<32x128xf32>
    %12 = arith.mulf %11, %8 : vector<32x128xf32>
    %13 = arith.select %10, %8, %12 : vector<32x128xi1>, vector<32x128xf32>
    %c16_i32 = arith.constant 16 : i32
    %14 = vector.broadcast %c16_i32 : i32 to vector<1x128xi32>
    %15 = arith.cmpi slt, %0, %14 : vector<1x128xi32>
    %cst_8 = arith.constant 0.000000e+00 : f32
    %16 = vector.shape_cast %15 : vector<1x128xi1> to vector<1x128xi1>
    %17 = vector.broadcast %16 : vector<1x128xi1> to vector<32x128xi1>
    %18 = vector.broadcast %cst_8 : f32 to vector<32x128xf32>
    %19 = arith.select %17, %13, %18 : vector<32x128xi1>, vector<32x128xf32>
    %c2_i32 = arith.constant 2 : i32
    %20 = tpu.dynamic_rotate %19 by %c2_i32 dim 1 : vector<32x128xf32>, i32 -> vector<32x128xf32>
    %c1_i32 = arith.constant 1 : i32
    %21 = tpu.dynamic_rotate %19 by %c1_i32 dim 1 : vector<32x128xf32>, i32 -> vector<32x128xf32>
    %c127_i32 = arith.constant 127 : i32
    %22 = tpu.dynamic_rotate %19 by %c127_i32 dim 1 : vector<32x128xf32>, i32 -> vector<32x128xf32>
    %c126_i32 = arith.constant 126 : i32
    %23 = tpu.dynamic_rotate %19 by %c126_i32 dim 1 : vector<32x128xf32>, i32 -> vector<32x128xf32>
    %c0_9 = arith.constant 0 : index
    %c0_10 = arith.constant 0 : index
    %c0_11 = arith.constant 0 : index
    %24 = vector.load %arg5[%c0_9, %c0_10, %c0_11] : memref<4x32x1xf32, #tpu.memory_space<vmem>>, vector<1x32x1xf32>
    %25 = vector.shape_cast %24 : vector<1x32x1xf32> to vector<32x1xf32>
    %c0_12 = arith.constant 0 : index
    %c0_13 = arith.constant 0 : index
    %c0_14 = arith.constant 0 : index
    %c0_15 = arith.constant 0 : index
    %26 = vector.load %arg4[%c0_12, %c0_13, %c0_14, %c0_15] : memref<4x5x32x1xf32, #tpu.memory_space<vmem>>, vector<1x1x32x1xf32>
    %27 = vector.shape_cast %26 : vector<1x1x32x1xf32> to vector<32x1xf32>
    %28 = vector.broadcast %27 : vector<32x1xf32> to vector<32x128xf32>
    %29 = arith.mulf %28, %20 : vector<32x128xf32>
    %30 = vector.broadcast %25 : vector<32x1xf32> to vector<32x128xf32>
    %31 = arith.addf %30, %29 : vector<32x128xf32>
    %c0_16 = arith.constant 0 : index
    %c1 = arith.constant 1 : index
    %c0_17 = arith.constant 0 : index
    %c0_18 = arith.constant 0 : index
    %32 = vector.load %arg4[%c0_16, %c1, %c0_17, %c0_18] : memref<4x5x32x1xf32, #tpu.memory_space<vmem>>, vector<1x1x32x1xf32>
    %33 = vector.shape_cast %32 : vector<1x1x32x1xf32> to vector<32x1xf32>
    %34 = vector.broadcast %33 : vector<32x1xf32> to vector<32x128xf32>
    %35 = arith.mulf %34, %21 : vector<32x128xf32>
    %36 = arith.addf %31, %35 : vector<32x128xf32>
    %c0_19 = arith.constant 0 : index
    %c2 = arith.constant 2 : index
    %c0_20 = arith.constant 0 : index
    %c0_21 = arith.constant 0 : index
    %37 = vector.load %arg4[%c0_19, %c2, %c0_20, %c0_21] : memref<4x5x32x1xf32, #tpu.memory_space<vmem>>, vector<1x1x32x1xf32>
    %38 = vector.shape_cast %37 : vector<1x1x32x1xf32> to vector<32x1xf32>
    %39 = vector.broadcast %38 : vector<32x1xf32> to vector<32x128xf32>
    %40 = arith.mulf %39, %19 : vector<32x128xf32>
    %41 = arith.addf %36, %40 : vector<32x128xf32>
    %c0_22 = arith.constant 0 : index
    %c3 = arith.constant 3 : index
    %c0_23 = arith.constant 0 : index
    %c0_24 = arith.constant 0 : index
    %42 = vector.load %arg4[%c0_22, %c3, %c0_23, %c0_24] : memref<4x5x32x1xf32, #tpu.memory_space<vmem>>, vector<1x1x32x1xf32>
    %43 = vector.shape_cast %42 : vector<1x1x32x1xf32> to vector<32x1xf32>
    %44 = vector.broadcast %43 : vector<32x1xf32> to vector<32x128xf32>
    %45 = arith.mulf %44, %22 : vector<32x128xf32>
    %46 = arith.addf %41, %45 : vector<32x128xf32>
    %c0_25 = arith.constant 0 : index
    %c4 = arith.constant 4 : index
    %c0_26 = arith.constant 0 : index
    %c0_27 = arith.constant 0 : index
    %47 = vector.load %arg4[%c0_25, %c4, %c0_26, %c0_27] : memref<4x5x32x1xf32, #tpu.memory_space<vmem>>, vector<1x1x32x1xf32>
    %48 = vector.shape_cast %47 : vector<1x1x32x1xf32> to vector<32x1xf32>
    %49 = vector.broadcast %48 : vector<32x1xf32> to vector<32x128xf32>
    %50 = arith.mulf %49, %23 : vector<32x128xf32>
    %51 = arith.addf %46, %50 : vector<32x128xf32>
    %c16_i32_28 = arith.constant 16 : i32
    %52 = vector.broadcast %c16_i32_28 : i32 to vector<1x128xi32>
    %53 = arith.cmpi slt, %0, %52 : vector<1x128xi32>
    %cst_29 = arith.constant 0.000000e+00 : f32
    %54 = vector.shape_cast %53 : vector<1x128xi1> to vector<1x128xi1>
    %55 = vector.broadcast %54 : vector<1x128xi1> to vector<32x128xi1>
    %56 = vector.broadcast %cst_29 : f32 to vector<32x128xf32>
    %57 = arith.select %55, %51, %56 : vector<32x128xi1>, vector<32x128xf32>
    %c2_i32_30 = arith.constant 2 : i32
    %58 = tpu.dynamic_rotate %57 by %c2_i32_30 dim 1 : vector<32x128xf32>, i32 -> vector<32x128xf32>
    %c1_i32_31 = arith.constant 1 : i32
    %59 = tpu.dynamic_rotate %57 by %c1_i32_31 dim 1 : vector<32x128xf32>, i32 -> vector<32x128xf32>
    %c127_i32_32 = arith.constant 127 : i32
    %60 = tpu.dynamic_rotate %57 by %c127_i32_32 dim 1 : vector<32x128xf32>, i32 -> vector<32x128xf32>
    %c126_i32_33 = arith.constant 126 : i32
    %61 = tpu.dynamic_rotate %57 by %c126_i32_33 dim 1 : vector<32x128xf32>, i32 -> vector<32x128xf32>
    %c1_34 = arith.constant 1 : index
    %c0_35 = arith.constant 0 : index
    %c0_36 = arith.constant 0 : index
    %62 = vector.load %arg5[%c1_34, %c0_35, %c0_36] : memref<4x32x1xf32, #tpu.memory_space<vmem>>, vector<1x32x1xf32>
    %63 = vector.shape_cast %62 : vector<1x32x1xf32> to vector<32x1xf32>
    %c1_37 = arith.constant 1 : index
    %c0_38 = arith.constant 0 : index
    %c0_39 = arith.constant 0 : index
    %c0_40 = arith.constant 0 : index
    %64 = vector.load %arg4[%c1_37, %c0_38, %c0_39, %c0_40] : memref<4x5x32x1xf32, #tpu.memory_space<vmem>>, vector<1x1x32x1xf32>
    %65 = vector.shape_cast %64 : vector<1x1x32x1xf32> to vector<32x1xf32>
    %66 = vector.broadcast %65 : vector<32x1xf32> to vector<32x128xf32>
    %67 = arith.mulf %66, %58 : vector<32x128xf32>
    %68 = vector.broadcast %63 : vector<32x1xf32> to vector<32x128xf32>
    %69 = arith.addf %68, %67 : vector<32x128xf32>
    %c1_41 = arith.constant 1 : index
    %c1_42 = arith.constant 1 : index
    %c0_43 = arith.constant 0 : index
    %c0_44 = arith.constant 0 : index
    %70 = vector.load %arg4[%c1_41, %c1_42, %c0_43, %c0_44] : memref<4x5x32x1xf32, #tpu.memory_space<vmem>>, vector<1x1x32x1xf32>
    %71 = vector.shape_cast %70 : vector<1x1x32x1xf32> to vector<32x1xf32>
    %72 = vector.broadcast %71 : vector<32x1xf32> to vector<32x128xf32>
    %73 = arith.mulf %72, %59 : vector<32x128xf32>
    %74 = arith.addf %69, %73 : vector<32x128xf32>
    %c1_45 = arith.constant 1 : index
    %c2_46 = arith.constant 2 : index
    %c0_47 = arith.constant 0 : index
    %c0_48 = arith.constant 0 : index
    %75 = vector.load %arg4[%c1_45, %c2_46, %c0_47, %c0_48] : memref<4x5x32x1xf32, #tpu.memory_space<vmem>>, vector<1x1x32x1xf32>
    %76 = vector.shape_cast %75 : vector<1x1x32x1xf32> to vector<32x1xf32>
    %77 = vector.broadcast %76 : vector<32x1xf32> to vector<32x128xf32>
    %78 = arith.mulf %77, %57 : vector<32x128xf32>
    %79 = arith.addf %74, %78 : vector<32x128xf32>
    %c1_49 = arith.constant 1 : index
    %c3_50 = arith.constant 3 : index
    %c0_51 = arith.constant 0 : index
    %c0_52 = arith.constant 0 : index
    %80 = vector.load %arg4[%c1_49, %c3_50, %c0_51, %c0_52] : memref<4x5x32x1xf32, #tpu.memory_space<vmem>>, vector<1x1x32x1xf32>
    %81 = vector.shape_cast %80 : vector<1x1x32x1xf32> to vector<32x1xf32>
    %82 = vector.broadcast %81 : vector<32x1xf32> to vector<32x128xf32>
    %83 = arith.mulf %82, %60 : vector<32x128xf32>
    %84 = arith.addf %79, %83 : vector<32x128xf32>
    %c1_53 = arith.constant 1 : index
    %c4_54 = arith.constant 4 : index
    %c0_55 = arith.constant 0 : index
    %c0_56 = arith.constant 0 : index
    %85 = vector.load %arg4[%c1_53, %c4_54, %c0_55, %c0_56] : memref<4x5x32x1xf32, #tpu.memory_space<vmem>>, vector<1x1x32x1xf32>
    %86 = vector.shape_cast %85 : vector<1x1x32x1xf32> to vector<32x1xf32>
    %87 = vector.broadcast %86 : vector<32x1xf32> to vector<32x128xf32>
    %88 = arith.mulf %87, %61 : vector<32x128xf32>
    %89 = arith.addf %84, %88 : vector<32x128xf32>
    %c0_57 = arith.constant 0 : index
    %c0_58 = arith.constant 0 : index
    %c0_59 = arith.constant 0 : index
    %90 = vector.load %arg7[%c0_57, %c0_58, %c0_59] : memref<3x32x1xf32, #tpu.memory_space<vmem>>, vector<1x32x1xf32>
    %91 = vector.shape_cast %90 : vector<1x32x1xf32> to vector<32x1xf32>
    %c0_60 = arith.constant 0 : index
    %c0_61 = arith.constant 0 : index
    %c0_62 = arith.constant 0 : index
    %c0_63 = arith.constant 0 : index
    %92 = vector.load %arg6[%c0_60, %c0_61, %c0_62, %c0_63] : memref<3x5x32x1xf32, #tpu.memory_space<vmem>>, vector<1x1x32x1xf32>
    %93 = vector.shape_cast %92 : vector<1x1x32x1xf32> to vector<32x1xf32>
    %94 = vector.broadcast %93 : vector<32x1xf32> to vector<32x128xf32>
    %95 = arith.mulf %94, %58 : vector<32x128xf32>
    %96 = vector.broadcast %91 : vector<32x1xf32> to vector<32x128xf32>
    %97 = arith.addf %96, %95 : vector<32x128xf32>
    %c0_64 = arith.constant 0 : index
    %c1_65 = arith.constant 1 : index
    %c0_66 = arith.constant 0 : index
    %c0_67 = arith.constant 0 : index
    %98 = vector.load %arg6[%c0_64, %c1_65, %c0_66, %c0_67] : memref<3x5x32x1xf32, #tpu.memory_space<vmem>>, vector<1x1x32x1xf32>
    %99 = vector.shape_cast %98 : vector<1x1x32x1xf32> to vector<32x1xf32>
    %100 = vector.broadcast %99 : vector<32x1xf32> to vector<32x128xf32>
    %101 = arith.mulf %100, %59 : vector<32x128xf32>
    %102 = arith.addf %97, %101 : vector<32x128xf32>
    %c0_68 = arith.constant 0 : index
    %c2_69 = arith.constant 2 : index
    %c0_70 = arith.constant 0 : index
    %c0_71 = arith.constant 0 : index
    %103 = vector.load %arg6[%c0_68, %c2_69, %c0_70, %c0_71] : memref<3x5x32x1xf32, #tpu.memory_space<vmem>>, vector<1x1x32x1xf32>
    %104 = vector.shape_cast %103 : vector<1x1x32x1xf32> to vector<32x1xf32>
    %105 = vector.broadcast %104 : vector<32x1xf32> to vector<32x128xf32>
    %106 = arith.mulf %105, %57 : vector<32x128xf32>
    %107 = arith.addf %102, %106 : vector<32x128xf32>
    %c0_72 = arith.constant 0 : index
    %c3_73 = arith.constant 3 : index
    %c0_74 = arith.constant 0 : index
    %c0_75 = arith.constant 0 : index
    %108 = vector.load %arg6[%c0_72, %c3_73, %c0_74, %c0_75] : memref<3x5x32x1xf32, #tpu.memory_space<vmem>>, vector<1x1x32x1xf32>
    %109 = vector.shape_cast %108 : vector<1x1x32x1xf32> to vector<32x1xf32>
    %110 = vector.broadcast %109 : vector<32x1xf32> to vector<32x128xf32>
    %111 = arith.mulf %110, %60 : vector<32x128xf32>
    %112 = arith.addf %107, %111 : vector<32x128xf32>
    %c0_76 = arith.constant 0 : index
    %c4_77 = arith.constant 4 : index
    %c0_78 = arith.constant 0 : index
    %c0_79 = arith.constant 0 : index
    %113 = vector.load %arg6[%c0_76, %c4_77, %c0_78, %c0_79] : memref<3x5x32x1xf32, #tpu.memory_space<vmem>>, vector<1x1x32x1xf32>
    %114 = vector.shape_cast %113 : vector<1x1x32x1xf32> to vector<32x1xf32>
    %115 = vector.broadcast %114 : vector<32x1xf32> to vector<32x128xf32>
    %116 = arith.mulf %115, %61 : vector<32x128xf32>
    %117 = arith.addf %112, %116 : vector<32x128xf32>
    %118 = tpu.concatenate %89, %117 in 0 : vector<32x128xf32>, vector<32x128xf32> -> vector<64x128xf32>
    %c0_80 = arith.constant 0 : index
    %c0_81 = arith.constant 0 : index
    %c0_82 = arith.constant 0 : index
    %119 = vector.load %arg17[%c0_80, %c0_81, %c0_82] : memref<3x128x128xbf16, #tpu.memory_space<vmem>>, vector<1x128x128xbf16>
    %120 = vector.shape_cast %119 : vector<1x128x128xbf16> to vector<128x128xbf16>
    %121 = arith.truncf %118 : vector<64x128xf32> to vector<64x128xbf16>
    %cst_83 = arith.constant dense<0.000000e+00> : vector<64x128xf32>
    %122 = tpu.matmul %121, %120, %cst_83 {dimension_numbers = #tpu.dot_dimension_numbers<[1], [0], [0], [1], [0, 0, 1, 1], [], []>} : vector<64x128xbf16>, vector<128x128xbf16>, vector<64x128xf32> -> vector<64x128xf32>
    %123 = vector.extract_strided_slice %122 {offsets = [0, 0], sizes = [32, 128], strides = [1, 1]} : vector<64x128xf32> to vector<32x128xf32>
    %124 = vector.extract_strided_slice %122 {offsets = [32, 0], sizes = [32, 128], strides = [1, 1]} : vector<64x128xf32> to vector<32x128xf32>
    %c2_i32_84 = arith.constant 2 : i32
    %125 = tpu.dynamic_rotate %123 by %c2_i32_84 dim 1 : vector<32x128xf32>, i32 -> vector<32x128xf32>
    %c1_i32_85 = arith.constant 1 : i32
    %126 = tpu.dynamic_rotate %123 by %c1_i32_85 dim 1 : vector<32x128xf32>, i32 -> vector<32x128xf32>
    %c127_i32_86 = arith.constant 127 : i32
    %127 = tpu.dynamic_rotate %123 by %c127_i32_86 dim 1 : vector<32x128xf32>, i32 -> vector<32x128xf32>
    %c126_i32_87 = arith.constant 126 : i32
    %128 = tpu.dynamic_rotate %123 by %c126_i32_87 dim 1 : vector<32x128xf32>, i32 -> vector<32x128xf32>
    %c2_88 = arith.constant 2 : index
    %c0_89 = arith.constant 0 : index
    %c0_90 = arith.constant 0 : index
    %129 = vector.load %arg5[%c2_88, %c0_89, %c0_90] : memref<4x32x1xf32, #tpu.memory_space<vmem>>, vector<1x32x1xf32>
    %130 = vector.shape_cast %129 : vector<1x32x1xf32> to vector<32x1xf32>
    %c2_91 = arith.constant 2 : index
    %c0_92 = arith.constant 0 : index
    %c0_93 = arith.constant 0 : index
    %c0_94 = arith.constant 0 : index
    %131 = vector.load %arg4[%c2_91, %c0_92, %c0_93, %c0_94] : memref<4x5x32x1xf32, #tpu.memory_space<vmem>>, vector<1x1x32x1xf32>
    %132 = vector.shape_cast %131 : vector<1x1x32x1xf32> to vector<32x1xf32>
    %133 = vector.broadcast %132 : vector<32x1xf32> to vector<32x128xf32>
    %134 = arith.mulf %133, %125 : vector<32x128xf32>
    %135 = vector.broadcast %130 : vector<32x1xf32> to vector<32x128xf32>
    %136 = arith.addf %135, %134 : vector<32x128xf32>
    %c2_95 = arith.constant 2 : index
    %c1_96 = arith.constant 1 : index
    %c0_97 = arith.constant 0 : index
    %c0_98 = arith.constant 0 : index
    %137 = vector.load %arg4[%c2_95, %c1_96, %c0_97, %c0_98] : memref<4x5x32x1xf32, #tpu.memory_space<vmem>>, vector<1x1x32x1xf32>
    %138 = vector.shape_cast %137 : vector<1x1x32x1xf32> to vector<32x1xf32>
    %139 = vector.broadcast %138 : vector<32x1xf32> to vector<32x128xf32>
    %140 = arith.mulf %139, %126 : vector<32x128xf32>
    %141 = arith.addf %136, %140 : vector<32x128xf32>
    %c2_99 = arith.constant 2 : index
    %c2_100 = arith.constant 2 : index
    %c0_101 = arith.constant 0 : index
    %c0_102 = arith.constant 0 : index
    %142 = vector.load %arg4[%c2_99, %c2_100, %c0_101, %c0_102] : memref<4x5x32x1xf32, #tpu.memory_space<vmem>>, vector<1x1x32x1xf32>
    %143 = vector.shape_cast %142 : vector<1x1x32x1xf32> to vector<32x1xf32>
    %144 = vector.broadcast %143 : vector<32x1xf32> to vector<32x128xf32>
    %145 = arith.mulf %144, %123 : vector<32x128xf32>
    %146 = arith.addf %141, %145 : vector<32x128xf32>
    %c2_103 = arith.constant 2 : index
    %c3_104 = arith.constant 3 : index
    %c0_105 = arith.constant 0 : index
    %c0_106 = arith.constant 0 : index
    %147 = vector.load %arg4[%c2_103, %c3_104, %c0_105, %c0_106] : memref<4x5x32x1xf32, #tpu.memory_space<vmem>>, vector<1x1x32x1xf32>
    %148 = vector.shape_cast %147 : vector<1x1x32x1xf32> to vector<32x1xf32>
    %149 = vector.broadcast %148 : vector<32x1xf32> to vector<32x128xf32>
    %150 = arith.mulf %149, %127 : vector<32x128xf32>
    %151 = arith.addf %146, %150 : vector<32x128xf32>
    %c2_107 = arith.constant 2 : index
    %c4_108 = arith.constant 4 : index
    %c0_109 = arith.constant 0 : index
    %c0_110 = arith.constant 0 : index
    %152 = vector.load %arg4[%c2_107, %c4_108, %c0_109, %c0_110] : memref<4x5x32x1xf32, #tpu.memory_space<vmem>>, vector<1x1x32x1xf32>
    %153 = vector.shape_cast %152 : vector<1x1x32x1xf32> to vector<32x1xf32>
    %154 = vector.broadcast %153 : vector<32x1xf32> to vector<32x128xf32>
    %155 = arith.mulf %154, %128 : vector<32x128xf32>
    %156 = arith.addf %151, %155 : vector<32x128xf32>
    %c1_111 = arith.constant 1 : index
    %c0_112 = arith.constant 0 : index
    %c0_113 = arith.constant 0 : index
    %157 = vector.load %arg7[%c1_111, %c0_112, %c0_113] : memref<3x32x1xf32, #tpu.memory_space<vmem>>, vector<1x32x1xf32>
    %158 = vector.shape_cast %157 : vector<1x32x1xf32> to vector<32x1xf32>
    %c1_114 = arith.constant 1 : index
    %c0_115 = arith.constant 0 : index
    %c0_116 = arith.constant 0 : index
    %c0_117 = arith.constant 0 : index
    %159 = vector.load %arg6[%c1_114, %c0_115, %c0_116, %c0_117] : memref<3x5x32x1xf32, #tpu.memory_space<vmem>>, vector<1x1x32x1xf32>
    %160 = vector.shape_cast %159 : vector<1x1x32x1xf32> to vector<32x1xf32>
    %161 = vector.broadcast %160 : vector<32x1xf32> to vector<32x128xf32>
    %162 = arith.mulf %161, %125 : vector<32x128xf32>
    %163 = vector.broadcast %158 : vector<32x1xf32> to vector<32x128xf32>
    %164 = arith.addf %163, %162 : vector<32x128xf32>
    %c1_118 = arith.constant 1 : index
    %c1_119 = arith.constant 1 : index
    %c0_120 = arith.constant 0 : index
    %c0_121 = arith.constant 0 : index
    %165 = vector.load %arg6[%c1_118, %c1_119, %c0_120, %c0_121] : memref<3x5x32x1xf32, #tpu.memory_space<vmem>>, vector<1x1x32x1xf32>
    %166 = vector.shape_cast %165 : vector<1x1x32x1xf32> to vector<32x1xf32>
    %167 = vector.broadcast %166 : vector<32x1xf32> to vector<32x128xf32>
    %168 = arith.mulf %167, %126 : vector<32x128xf32>
    %169 = arith.addf %164, %168 : vector<32x128xf32>
    %c1_122 = arith.constant 1 : index
    %c2_123 = arith.constant 2 : index
    %c0_124 = arith.constant 0 : index
    %c0_125 = arith.constant 0 : index
    %170 = vector.load %arg6[%c1_122, %c2_123, %c0_124, %c0_125] : memref<3x5x32x1xf32, #tpu.memory_space<vmem>>, vector<1x1x32x1xf32>
    %171 = vector.shape_cast %170 : vector<1x1x32x1xf32> to vector<32x1xf32>
    %172 = vector.broadcast %171 : vector<32x1xf32> to vector<32x128xf32>
    %173 = arith.mulf %172, %123 : vector<32x128xf32>
    %174 = arith.addf %169, %173 : vector<32x128xf32>
    %c1_126 = arith.constant 1 : index
    %c3_127 = arith.constant 3 : index
    %c0_128 = arith.constant 0 : index
    %c0_129 = arith.constant 0 : index
    %175 = vector.load %arg6[%c1_126, %c3_127, %c0_128, %c0_129] : memref<3x5x32x1xf32, #tpu.memory_space<vmem>>, vector<1x1x32x1xf32>
    %176 = vector.shape_cast %175 : vector<1x1x32x1xf32> to vector<32x1xf32>
    %177 = vector.broadcast %176 : vector<32x1xf32> to vector<32x128xf32>
    %178 = arith.mulf %177, %127 : vector<32x128xf32>
    %179 = arith.addf %174, %178 : vector<32x128xf32>
    %c1_130 = arith.constant 1 : index
    %c4_131 = arith.constant 4 : index
    %c0_132 = arith.constant 0 : index
    %c0_133 = arith.constant 0 : index
    %180 = vector.load %arg6[%c1_130, %c4_131, %c0_132, %c0_133] : memref<3x5x32x1xf32, #tpu.memory_space<vmem>>, vector<1x1x32x1xf32>
    %181 = vector.shape_cast %180 : vector<1x1x32x1xf32> to vector<32x1xf32>
    %182 = vector.broadcast %181 : vector<32x1xf32> to vector<32x128xf32>
    %183 = arith.mulf %182, %128 : vector<32x128xf32>
    %184 = arith.addf %179, %183 : vector<32x128xf32>
    %185 = tpu.concatenate %156, %184 in 0 : vector<32x128xf32>, vector<32x128xf32> -> vector<64x128xf32>
    %c1_134 = arith.constant 1 : index
    %c0_135 = arith.constant 0 : index
    %c0_136 = arith.constant 0 : index
    %186 = vector.load %arg17[%c1_134, %c0_135, %c0_136] : memref<3x128x128xbf16, #tpu.memory_space<vmem>>, vector<1x128x128xbf16>
    %187 = vector.shape_cast %186 : vector<1x128x128xbf16> to vector<128x128xbf16>
    %188 = arith.truncf %185 : vector<64x128xf32> to vector<64x128xbf16>
    %cst_137 = arith.constant dense<0.000000e+00> : vector<64x128xf32>
    %189 = tpu.matmul %188, %187, %cst_137 {dimension_numbers = #tpu.dot_dimension_numbers<[1], [0], [0], [1], [0, 0, 1, 1], [], []>} : vector<64x128xbf16>, vector<128x128xbf16>, vector<64x128xf32> -> vector<64x128xf32>
    %190 = vector.extract_strided_slice %189 {offsets = [0, 0], sizes = [32, 128], strides = [1, 1]} : vector<64x128xf32> to vector<32x128xf32>
    %191 = vector.extract_strided_slice %189 {offsets = [32, 0], sizes = [32, 128], strides = [1, 1]} : vector<64x128xf32> to vector<32x128xf32>
    %c2_i32_138 = arith.constant 2 : i32
    %192 = tpu.dynamic_rotate %190 by %c2_i32_138 dim 1 : vector<32x128xf32>, i32 -> vector<32x128xf32>
    %c1_i32_139 = arith.constant 1 : i32
    %193 = tpu.dynamic_rotate %190 by %c1_i32_139 dim 1 : vector<32x128xf32>, i32 -> vector<32x128xf32>
    %c127_i32_140 = arith.constant 127 : i32
    %194 = tpu.dynamic_rotate %190 by %c127_i32_140 dim 1 : vector<32x128xf32>, i32 -> vector<32x128xf32>
    %c126_i32_141 = arith.constant 126 : i32
    %195 = tpu.dynamic_rotate %190 by %c126_i32_141 dim 1 : vector<32x128xf32>, i32 -> vector<32x128xf32>
    %c3_142 = arith.constant 3 : index
    %c0_143 = arith.constant 0 : index
    %c0_144 = arith.constant 0 : index
    %196 = vector.load %arg5[%c3_142, %c0_143, %c0_144] : memref<4x32x1xf32, #tpu.memory_space<vmem>>, vector<1x32x1xf32>
    %197 = vector.shape_cast %196 : vector<1x32x1xf32> to vector<32x1xf32>
    %c3_145 = arith.constant 3 : index
    %c0_146 = arith.constant 0 : index
    %c0_147 = arith.constant 0 : index
    %c0_148 = arith.constant 0 : index
    %198 = vector.load %arg4[%c3_145, %c0_146, %c0_147, %c0_148] : memref<4x5x32x1xf32, #tpu.memory_space<vmem>>, vector<1x1x32x1xf32>
    %199 = vector.shape_cast %198 : vector<1x1x32x1xf32> to vector<32x1xf32>
    %200 = vector.broadcast %199 : vector<32x1xf32> to vector<32x128xf32>
    %201 = arith.mulf %200, %192 : vector<32x128xf32>
    %202 = vector.broadcast %197 : vector<32x1xf32> to vector<32x128xf32>
    %203 = arith.addf %202, %201 : vector<32x128xf32>
    %c3_149 = arith.constant 3 : index
    %c1_150 = arith.constant 1 : index
    %c0_151 = arith.constant 0 : index
    %c0_152 = arith.constant 0 : index
    %204 = vector.load %arg4[%c3_149, %c1_150, %c0_151, %c0_152] : memref<4x5x32x1xf32, #tpu.memory_space<vmem>>, vector<1x1x32x1xf32>
    %205 = vector.shape_cast %204 : vector<1x1x32x1xf32> to vector<32x1xf32>
    %206 = vector.broadcast %205 : vector<32x1xf32> to vector<32x128xf32>
    %207 = arith.mulf %206, %193 : vector<32x128xf32>
    %208 = arith.addf %203, %207 : vector<32x128xf32>
    %c3_153 = arith.constant 3 : index
    %c2_154 = arith.constant 2 : index
    %c0_155 = arith.constant 0 : index
    %c0_156 = arith.constant 0 : index
    %209 = vector.load %arg4[%c3_153, %c2_154, %c0_155, %c0_156] : memref<4x5x32x1xf32, #tpu.memory_space<vmem>>, vector<1x1x32x1xf32>
    %210 = vector.shape_cast %209 : vector<1x1x32x1xf32> to vector<32x1xf32>
    %211 = vector.broadcast %210 : vector<32x1xf32> to vector<32x128xf32>
    %212 = arith.mulf %211, %190 : vector<32x128xf32>
    %213 = arith.addf %208, %212 : vector<32x128xf32>
    %c3_157 = arith.constant 3 : index
    %c3_158 = arith.constant 3 : index
    %c0_159 = arith.constant 0 : index
    %c0_160 = arith.constant 0 : index
    %214 = vector.load %arg4[%c3_157, %c3_158, %c0_159, %c0_160] : memref<4x5x32x1xf32, #tpu.memory_space<vmem>>, vector<1x1x32x1xf32>
    %215 = vector.shape_cast %214 : vector<1x1x32x1xf32> to vector<32x1xf32>
    %216 = vector.broadcast %215 : vector<32x1xf32> to vector<32x128xf32>
    %217 = arith.mulf %216, %194 : vector<32x128xf32>
    %218 = arith.addf %213, %217 : vector<32x128xf32>
    %c3_161 = arith.constant 3 : index
    %c4_162 = arith.constant 4 : index
    %c0_163 = arith.constant 0 : index
    %c0_164 = arith.constant 0 : index
    %219 = vector.load %arg4[%c3_161, %c4_162, %c0_163, %c0_164] : memref<4x5x32x1xf32, #tpu.memory_space<vmem>>, vector<1x1x32x1xf32>
    %220 = vector.shape_cast %219 : vector<1x1x32x1xf32> to vector<32x1xf32>
    %221 = vector.broadcast %220 : vector<32x1xf32> to vector<32x128xf32>
    %222 = arith.mulf %221, %195 : vector<32x128xf32>
    %223 = arith.addf %218, %222 : vector<32x128xf32>
    %c2_165 = arith.constant 2 : index
    %c0_166 = arith.constant 0 : index
    %c0_167 = arith.constant 0 : index
    %224 = vector.load %arg7[%c2_165, %c0_166, %c0_167] : memref<3x32x1xf32, #tpu.memory_space<vmem>>, vector<1x32x1xf32>
    %225 = vector.shape_cast %224 : vector<1x32x1xf32> to vector<32x1xf32>
    %c2_168 = arith.constant 2 : index
    %c0_169 = arith.constant 0 : index
    %c0_170 = arith.constant 0 : index
    %c0_171 = arith.constant 0 : index
    %226 = vector.load %arg6[%c2_168, %c0_169, %c0_170, %c0_171] : memref<3x5x32x1xf32, #tpu.memory_space<vmem>>, vector<1x1x32x1xf32>
    %227 = vector.shape_cast %226 : vector<1x1x32x1xf32> to vector<32x1xf32>
    %228 = vector.broadcast %227 : vector<32x1xf32> to vector<32x128xf32>
    %229 = arith.mulf %228, %192 : vector<32x128xf32>
    %230 = vector.broadcast %225 : vector<32x1xf32> to vector<32x128xf32>
    %231 = arith.addf %230, %229 : vector<32x128xf32>
    %c2_172 = arith.constant 2 : index
    %c1_173 = arith.constant 1 : index
    %c0_174 = arith.constant 0 : index
    %c0_175 = arith.constant 0 : index
    %232 = vector.load %arg6[%c2_172, %c1_173, %c0_174, %c0_175] : memref<3x5x32x1xf32, #tpu.memory_space<vmem>>, vector<1x1x32x1xf32>
    %233 = vector.shape_cast %232 : vector<1x1x32x1xf32> to vector<32x1xf32>
    %234 = vector.broadcast %233 : vector<32x1xf32> to vector<32x128xf32>
    %235 = arith.mulf %234, %193 : vector<32x128xf32>
    %236 = arith.addf %231, %235 : vector<32x128xf32>
    %c2_176 = arith.constant 2 : index
    %c2_177 = arith.constant 2 : index
    %c0_178 = arith.constant 0 : index
    %c0_179 = arith.constant 0 : index
    %237 = vector.load %arg6[%c2_176, %c2_177, %c0_178, %c0_179] : memref<3x5x32x1xf32, #tpu.memory_space<vmem>>, vector<1x1x32x1xf32>
    %238 = vector.shape_cast %237 : vector<1x1x32x1xf32> to vector<32x1xf32>
    %239 = vector.broadcast %238 : vector<32x1xf32> to vector<32x128xf32>
    %240 = arith.mulf %239, %190 : vector<32x128xf32>
    %241 = arith.addf %236, %240 : vector<32x128xf32>
    %c2_180 = arith.constant 2 : index
    %c3_181 = arith.constant 3 : index
    %c0_182 = arith.constant 0 : index
    %c0_183 = arith.constant 0 : index
    %242 = vector.load %arg6[%c2_180, %c3_181, %c0_182, %c0_183] : memref<3x5x32x1xf32, #tpu.memory_space<vmem>>, vector<1x1x32x1xf32>
    %243 = vector.shape_cast %242 : vector<1x1x32x1xf32> to vector<32x1xf32>
    %244 = vector.broadcast %243 : vector<32x1xf32> to vector<32x128xf32>
    %245 = arith.mulf %244, %194 : vector<32x128xf32>
    %246 = arith.addf %241, %245 : vector<32x128xf32>
    %c2_184 = arith.constant 2 : index
    %c4_185 = arith.constant 4 : index
    %c0_186 = arith.constant 0 : index
    %c0_187 = arith.constant 0 : index
    %247 = vector.load %arg6[%c2_184, %c4_185, %c0_186, %c0_187] : memref<3x5x32x1xf32, #tpu.memory_space<vmem>>, vector<1x1x32x1xf32>
    %248 = vector.shape_cast %247 : vector<1x1x32x1xf32> to vector<32x1xf32>
    %249 = vector.broadcast %248 : vector<32x1xf32> to vector<32x128xf32>
    %250 = arith.mulf %249, %195 : vector<32x128xf32>
    %251 = arith.addf %246, %250 : vector<32x128xf32>
    %252 = tpu.concatenate %223, %251 in 0 : vector<32x128xf32>, vector<32x128xf32> -> vector<64x128xf32>
    %c2_188 = arith.constant 2 : index
    %c0_189 = arith.constant 0 : index
    %c0_190 = arith.constant 0 : index
    %253 = vector.load %arg17[%c2_188, %c0_189, %c0_190] : memref<3x128x128xbf16, #tpu.memory_space<vmem>>, vector<1x128x128xbf16>
    %254 = vector.shape_cast %253 : vector<1x128x128xbf16> to vector<128x128xbf16>
    %255 = arith.truncf %252 : vector<64x128xf32> to vector<64x128xbf16>
    %cst_191 = arith.constant dense<0.000000e+00> : vector<64x128xf32>
    %256 = tpu.matmul %255, %254, %cst_191 {dimension_numbers = #tpu.dot_dimension_numbers<[1], [0], [0], [1], [0, 0, 1, 1], [], []>} : vector<64x128xbf16>, vector<128x128xbf16>, vector<64x128xf32> -> vector<64x128xf32>
    %257 = vector.extract_strided_slice %256 {offsets = [0, 0], sizes = [32, 128], strides = [1, 1]} : vector<64x128xf32> to vector<32x128xf32>
    %258 = vector.extract_strided_slice %256 {offsets = [32, 0], sizes = [32, 128], strides = [1, 1]} : vector<64x128xf32> to vector<32x128xf32>
    %c0_192 = arith.constant 0 : index
    %c0_193 = arith.constant 0 : index
    %c0_194 = arith.constant 0 : index
    %259 = vector.load %arg18[%c0_192, %c0_193, %c0_194] : memref<3x128x128xbf16, #tpu.memory_space<vmem>>, vector<1x128x128xbf16>
    %260 = vector.shape_cast %259 : vector<1x128x128xbf16> to vector<128x128xbf16>
    %261 = arith.truncf %123 : vector<32x128xf32> to vector<32x128xbf16>
    %cst_195 = arith.constant dense<0.000000e+00> : vector<32x128xf32>
    %262 = tpu.matmul %261, %260, %cst_195 {dimension_numbers = #tpu.dot_dimension_numbers<[1], [0], [0], [1], [0, 0, 1, 1], [], []>} : vector<32x128xbf16>, vector<128x128xbf16>, vector<32x128xf32> -> vector<32x128xf32>
    %263 = tpu.concatenate %57, %262 in 0 : vector<32x128xf32>, vector<32x128xf32> -> vector<64x128xf32>
    %c0_196 = arith.constant 0 : index
    %c0_197 = arith.constant 0 : index
    %264 = vector.load %arg8[%c0_196, %c0_197] : memref<32x64xbf16, #tpu.memory_space<vmem>>, vector<32x64xbf16>
    %265 = arith.truncf %263 : vector<64x128xf32> to vector<64x128xbf16>
    %cst_198 = arith.constant dense<0.000000e+00> : vector<32x128xf32>
    %266 = tpu.matmul %264, %265, %cst_198 {dimension_numbers = #tpu.dot_dimension_numbers<[1], [0], [0], [1], [0, 0, 1, 1], [], []>} : vector<32x64xbf16>, vector<64x128xbf16>, vector<32x128xf32> -> vector<32x128xf32>
    %c0_199 = arith.constant 0 : index
    %c0_200 = arith.constant 0 : index
    %c0_201 = arith.constant 0 : index
    %267 = vector.load %arg12[%c0_199, %c0_200, %c0_201] : memref<4x32x1xf32, #tpu.memory_space<vmem>>, vector<1x32x1xf32>
    %268 = vector.shape_cast %267 : vector<1x32x1xf32> to vector<32x1xf32>
    %269 = vector.broadcast %268 : vector<32x1xf32> to vector<32x128xf32>
    %270 = arith.addf %266, %269 : vector<32x128xf32>
    %cst_202 = arith.constant 0.000000e+00 : f32
    %271 = vector.broadcast %cst_202 : f32 to vector<32x128xf32>
    %272 = arith.cmpf ogt, %270, %271 : vector<32x128xf32>
    %cst_203 = arith.constant 2.500000e-01 : f32
    %273 = vector.broadcast %cst_203 : f32 to vector<32x128xf32>
    %274 = arith.mulf %273, %270 : vector<32x128xf32>
    %275 = arith.select %272, %270, %274 : vector<32x128xi1>, vector<32x128xf32>
    %c1_204 = arith.constant 1 : index
    %c0_205 = arith.constant 0 : index
    %c0_206 = arith.constant 0 : index
    %276 = vector.load %arg18[%c1_204, %c0_205, %c0_206] : memref<3x128x128xbf16, #tpu.memory_space<vmem>>, vector<1x128x128xbf16>
    %277 = vector.shape_cast %276 : vector<1x128x128xbf16> to vector<128x128xbf16>
    %278 = arith.truncf %190 : vector<32x128xf32> to vector<32x128xbf16>
    %cst_207 = arith.constant dense<0.000000e+00> : vector<32x128xf32>
    %279 = tpu.matmul %278, %277, %cst_207 {dimension_numbers = #tpu.dot_dimension_numbers<[1], [0], [0], [1], [0, 0, 1, 1], [], []>} : vector<32x128xbf16>, vector<128x128xbf16>, vector<32x128xf32> -> vector<32x128xf32>
    %280 = tpu.concatenate %124, %123, %279 in 0 : vector<32x128xf32>, vector<32x128xf32>, vector<32x128xf32> -> vector<96x128xf32>
    %c0_208 = arith.constant 0 : index
    %c0_209 = arith.constant 0 : index
    %281 = vector.load %arg9[%c0_208, %c0_209] : memref<32x96xbf16, #tpu.memory_space<vmem>>, vector<32x96xbf16>
    %282 = arith.truncf %280 : vector<96x128xf32> to vector<96x128xbf16>
    %cst_210 = arith.constant dense<0.000000e+00> : vector<32x128xf32>
    %283 = tpu.matmul %281, %282, %cst_210 {dimension_numbers = #tpu.dot_dimension_numbers<[1], [0], [0], [1], [0, 0, 1, 1], [], []>} : vector<32x96xbf16>, vector<96x128xbf16>, vector<32x128xf32> -> vector<32x128xf32>
    %c1_211 = arith.constant 1 : index
    %c0_212 = arith.constant 0 : index
    %c0_213 = arith.constant 0 : index
    %284 = vector.load %arg12[%c1_211, %c0_212, %c0_213] : memref<4x32x1xf32, #tpu.memory_space<vmem>>, vector<1x32x1xf32>
    %285 = vector.shape_cast %284 : vector<1x32x1xf32> to vector<32x1xf32>
    %286 = vector.broadcast %285 : vector<32x1xf32> to vector<32x128xf32>
    %287 = arith.addf %283, %286 : vector<32x128xf32>
    %cst_214 = arith.constant 0.000000e+00 : f32
    %288 = vector.broadcast %cst_214 : f32 to vector<32x128xf32>
    %289 = arith.cmpf ogt, %287, %288 : vector<32x128xf32>
    %cst_215 = arith.constant 2.500000e-01 : f32
    %290 = vector.broadcast %cst_215 : f32 to vector<32x128xf32>
    %291 = arith.mulf %290, %287 : vector<32x128xf32>
    %292 = arith.select %289, %287, %291 : vector<32x128xi1>, vector<32x128xf32>
    %c2_216 = arith.constant 2 : index
    %c0_217 = arith.constant 0 : index
    %c0_218 = arith.constant 0 : index
    %293 = vector.load %arg18[%c2_216, %c0_217, %c0_218] : memref<3x128x128xbf16, #tpu.memory_space<vmem>>, vector<1x128x128xbf16>
    %294 = vector.shape_cast %293 : vector<1x128x128xbf16> to vector<128x128xbf16>
    %295 = arith.truncf %257 : vector<32x128xf32> to vector<32x128xbf16>
    %cst_219 = arith.constant dense<0.000000e+00> : vector<32x128xf32>
    %296 = tpu.matmul %295, %294, %cst_219 {dimension_numbers = #tpu.dot_dimension_numbers<[1], [0], [0], [1], [0, 0, 1, 1], [], []>} : vector<32x128xbf16>, vector<128x128xbf16>, vector<32x128xf32> -> vector<32x128xf32>
    %297 = tpu.concatenate %191, %190, %296 in 0 : vector<32x128xf32>, vector<32x128xf32>, vector<32x128xf32> -> vector<96x128xf32>
    %c0_220 = arith.constant 0 : index
    %c0_221 = arith.constant 0 : index
    %298 = vector.load %arg10[%c0_220, %c0_221] : memref<32x96xbf16, #tpu.memory_space<vmem>>, vector<32x96xbf16>
    %299 = arith.truncf %297 : vector<96x128xf32> to vector<96x128xbf16>
    %cst_222 = arith.constant dense<0.000000e+00> : vector<32x128xf32>
    %300 = tpu.matmul %298, %299, %cst_222 {dimension_numbers = #tpu.dot_dimension_numbers<[1], [0], [0], [1], [0, 0, 1, 1], [], []>} : vector<32x96xbf16>, vector<96x128xbf16>, vector<32x128xf32> -> vector<32x128xf32>
    %c2_223 = arith.constant 2 : index
    %c0_224 = arith.constant 0 : index
    %c0_225 = arith.constant 0 : index
    %301 = vector.load %arg12[%c2_223, %c0_224, %c0_225] : memref<4x32x1xf32, #tpu.memory_space<vmem>>, vector<1x32x1xf32>
    %302 = vector.shape_cast %301 : vector<1x32x1xf32> to vector<32x1xf32>
    %303 = vector.broadcast %302 : vector<32x1xf32> to vector<32x128xf32>
    %304 = arith.addf %300, %303 : vector<32x128xf32>
    %cst_226 = arith.constant 0.000000e+00 : f32
    %305 = vector.broadcast %cst_226 : f32 to vector<32x128xf32>
    %306 = arith.cmpf ogt, %304, %305 : vector<32x128xf32>
    %cst_227 = arith.constant 2.500000e-01 : f32
    %307 = vector.broadcast %cst_227 : f32 to vector<32x128xf32>
    %308 = arith.mulf %307, %304 : vector<32x128xf32>
    %309 = arith.select %306, %304, %308 : vector<32x128xi1>, vector<32x128xf32>
    %310 = tpu.concatenate %258, %257 in 0 : vector<32x128xf32>, vector<32x128xf32> -> vector<64x128xf32>
    %c0_228 = arith.constant 0 : index
    %c0_229 = arith.constant 0 : index
    %311 = vector.load %arg11[%c0_228, %c0_229] : memref<32x64xbf16, #tpu.memory_space<vmem>>, vector<32x64xbf16>
    %312 = arith.truncf %310 : vector<64x128xf32> to vector<64x128xbf16>
    %cst_230 = arith.constant dense<0.000000e+00> : vector<32x128xf32>
    %313 = tpu.matmul %311, %312, %cst_230 {dimension_numbers = #tpu.dot_dimension_numbers<[1], [0], [0], [1], [0, 0, 1, 1], [], []>} : vector<32x64xbf16>, vector<64x128xbf16>, vector<32x128xf32> -> vector<32x128xf32>
    %c3_231 = arith.constant 3 : index
    %c0_232 = arith.constant 0 : index
    %c0_233 = arith.constant 0 : index
    %314 = vector.load %arg12[%c3_231, %c0_232, %c0_233] : memref<4x32x1xf32, #tpu.memory_space<vmem>>, vector<1x32x1xf32>
    %315 = vector.shape_cast %314 : vector<1x32x1xf32> to vector<32x1xf32>
    %316 = vector.broadcast %315 : vector<32x1xf32> to vector<32x128xf32>
    %317 = arith.addf %313, %316 : vector<32x128xf32>
    %cst_234 = arith.constant 0.000000e+00 : f32
    %318 = vector.broadcast %cst_234 : f32 to vector<32x128xf32>
    %319 = arith.cmpf ogt, %317, %318 : vector<32x128xf32>
    %cst_235 = arith.constant 2.500000e-01 : f32
    %320 = vector.broadcast %cst_235 : f32 to vector<32x128xf32>
    %321 = arith.mulf %320, %317 : vector<32x128xf32>
    %322 = arith.select %319, %317, %321 : vector<32x128xi1>, vector<32x128xf32>
    %c0_236 = arith.constant 0 : index
    %c0_237 = arith.constant 0 : index
    %c0_238 = arith.constant 0 : index
    %323 = vector.load %arg19[%c0_236, %c0_237, %c0_238] : memref<3x128x128xbf16, #tpu.memory_space<vmem>>, vector<1x128x128xbf16>
    %324 = vector.shape_cast %323 : vector<1x128x128xbf16> to vector<128x128xbf16>
    %325 = arith.truncf %292 : vector<32x128xf32> to vector<32x128xbf16>
    %cst_239 = arith.constant dense<0.000000e+00> : vector<32x128xf32>
    %326 = tpu.matmul %325, %324, %cst_239 {dimension_numbers = #tpu.dot_dimension_numbers<[1], [0], [0], [1], [0, 0, 1, 1], [], []>} : vector<32x128xbf16>, vector<128x128xbf16>, vector<32x128xf32> -> vector<32x128xf32>
    %c1_240 = arith.constant 1 : index
    %c0_241 = arith.constant 0 : index
    %c0_242 = arith.constant 0 : index
    %327 = vector.load %arg19[%c1_240, %c0_241, %c0_242] : memref<3x128x128xbf16, #tpu.memory_space<vmem>>, vector<1x128x128xbf16>
    %328 = vector.shape_cast %327 : vector<1x128x128xbf16> to vector<128x128xbf16>
    %329 = arith.truncf %309 : vector<32x128xf32> to vector<32x128xbf16>
    %cst_243 = arith.constant dense<0.000000e+00> : vector<32x128xf32>
    %330 = tpu.matmul %329, %328, %cst_243 {dimension_numbers = #tpu.dot_dimension_numbers<[1], [0], [0], [1], [0, 0, 1, 1], [], []>} : vector<32x128xbf16>, vector<128x128xbf16>, vector<32x128xf32> -> vector<32x128xf32>
    %c2_244 = arith.constant 2 : index
    %c0_245 = arith.constant 0 : index
    %c0_246 = arith.constant 0 : index
    %331 = vector.load %arg19[%c2_244, %c0_245, %c0_246] : memref<3x128x128xbf16, #tpu.memory_space<vmem>>, vector<1x128x128xbf16>
    %332 = vector.shape_cast %331 : vector<1x128x128xbf16> to vector<128x128xbf16>
    %333 = arith.truncf %322 : vector<32x128xf32> to vector<32x128xbf16>
    %cst_247 = arith.constant dense<0.000000e+00> : vector<32x128xf32>
    %334 = tpu.matmul %333, %332, %cst_247 {dimension_numbers = #tpu.dot_dimension_numbers<[1], [0], [0], [1], [0, 0, 1, 1], [], []>} : vector<32x128xbf16>, vector<128x128xbf16>, vector<32x128xf32> -> vector<32x128xf32>
    %335 = tpu.concatenate %275, %326, %330, %334 in 0 : vector<32x128xf32>, vector<32x128xf32>, vector<32x128xf32>, vector<32x128xf32> -> vector<128x128xf32>
    %c0_248 = arith.constant 0 : index
    %c0_249 = arith.constant 0 : index
    %336 = vector.load %arg13[%c0_248, %c0_249] : memref<32x128xbf16, #tpu.memory_space<vmem>>, vector<32x128xbf16>
    %337 = arith.truncf %335 : vector<128x128xf32> to vector<128x128xbf16>
    %cst_250 = arith.constant dense<0.000000e+00> : vector<32x128xf32>
    %338 = tpu.matmul %336, %337, %cst_250 {dimension_numbers = #tpu.dot_dimension_numbers<[1], [0], [0], [1], [0, 0, 1, 1], [], []>} : vector<32x128xbf16>, vector<128x128xbf16>, vector<32x128xf32> -> vector<32x128xf32>
    %c0_251 = arith.constant 0 : index
    %c0_252 = arith.constant 0 : index
    %339 = vector.load %arg14[%c0_251, %c0_252] : memref<32x1xf32, #tpu.memory_space<vmem>>, vector<32x1xf32>
    %340 = vector.broadcast %339 : vector<32x1xf32> to vector<32x128xf32>
    %341 = arith.addf %338, %340 : vector<32x128xf32>
    %cst_253 = arith.constant 0.000000e+00 : f32
    %342 = vector.broadcast %cst_253 : f32 to vector<32x128xf32>
    %343 = arith.cmpf ogt, %341, %342 : vector<32x128xf32>
    %cst_254 = arith.constant 2.500000e-01 : f32
    %344 = vector.broadcast %cst_254 : f32 to vector<32x128xf32>
    %345 = arith.mulf %344, %341 : vector<32x128xf32>
    %346 = arith.select %343, %341, %345 : vector<32x128xi1>, vector<32x128xf32>
    %c0_255 = arith.constant 0 : index
    %c0_256 = arith.constant 0 : index
    %347 = vector.load %arg15[%c0_255, %c0_256] : memref<16x32xbf16, #tpu.memory_space<vmem>>, vector<16x32xbf16>
    %348 = arith.truncf %346 : vector<32x128xf32> to vector<32x128xbf16>
    %cst_257 = arith.constant dense<0.000000e+00> : vector<16x128xf32>
    %349 = tpu.matmul %347, %348, %cst_257 {dimension_numbers = #tpu.dot_dimension_numbers<[1], [0], [0], [1], [0, 0, 1, 1], [], []>} : vector<16x32xbf16>, vector<32x128xbf16>, vector<16x128xf32> -> vector<16x128xf32>
    %c0_258 = arith.constant 0 : index
    %c0_259 = arith.constant 0 : index
    %350 = vector.load %arg16[%c0_258, %c0_259] : memref<16x1xf32, #tpu.memory_space<vmem>>, vector<16x1xf32>
    %351 = vector.broadcast %350 : vector<16x1xf32> to vector<16x128xf32>
    %352 = arith.addf %349, %351 : vector<16x128xf32>
    %353 = arith.addf %2, %352 : vector<16x128xf32>
    %c0_260 = arith.constant 0 : index
    %c0_261 = arith.constant 0 : index
    %c0_262 = arith.constant 0 : index
    %354 = vector.load %arg20[%c0_260, %c0_261, %c0_262] : memref<1x16x128xf32, #tpu.memory_space<vmem>>, vector<1x16x128xf32>
    %355 = vector.shape_cast %354 : vector<1x16x128xf32> to vector<16x128xf32>
    %356 = vector.shape_cast %353 : vector<16x128xf32> to vector<1x16x128xf32>
    tpu.vector_store %arg20[%c0_260, %c0_261, %c0_262], %356 {strides = array<i32>} : memref<1x16x128xf32, #tpu.memory_space<vmem>>, vector<1x16x128xf32>,
    return
  }
  func.func @transform_0(%arg0: i32) -> (i32, i32, i32) {
    %c0_i32 = arith.constant 0 : i32
    %c0_i32_0 = arith.constant 0 : i32
    %c0_i32_1 = arith.constant 0 : i32
    return %arg0, %c0_i32, %c0_i32_0 : i32, i32, i32
  }
  func.func @transform_1(%arg0: i32) -> (i32, i32) {
    %c0_i32 = arith.constant 0 : i32
    %c0_i32_0 = arith.constant 0 : i32
    %c0_i32_1 = arith.constant 0 : i32
    return %c0_i32, %c0_i32_0 : i32, i32
  }
  func.func @transform_2(%arg0: i32) -> (i32, i32) {
    %c0_i32 = arith.constant 0 : i32
    %c0_i32_0 = arith.constant 0 : i32
    %c0_i32_1 = arith.constant 0 : i32
    return %c0_i32, %c0_i32_0 : i32, i32
  }
  func.func @transform_3(%arg0: i32) -> (i32, i32, i32, i32) {
    %c0_i32 = arith.constant 0 : i32
    %c0_i32_0 = arith.constant 0 : i32
    %c0_i32_1 = arith.constant 0 : i32
    %c0_i32_2 = arith.constant 0 : i32
    %c0_i32_3 = arith.constant 0 : i32
    return %c0_i32, %c0_i32_0, %c0_i32_1, %c0_i32_2 : i32, i32, i32, i32
  }
  func.func @transform_4(%arg0: i32) -> (i32, i32, i32) {
    %c0_i32 = arith.constant 0 : i32
    %c0_i32_0 = arith.constant 0 : i32
    %c0_i32_1 = arith.constant 0 : i32
    %c0_i32_2 = arith.constant 0 : i32
    return %c0_i32, %c0_i32_0, %c0_i32_1 : i32, i32, i32
  }
  func.func @transform_5(%arg0: i32) -> (i32, i32, i32, i32) {
    %c0_i32 = arith.constant 0 : i32
    %c0_i32_0 = arith.constant 0 : i32
    %c0_i32_1 = arith.constant 0 : i32
    %c0_i32_2 = arith.constant 0 : i32
    %c0_i32_3 = arith.constant 0 : i32
    return %c0_i32, %c0_i32_0, %c0_i32_1, %c0_i32_2 : i32, i32, i32, i32
  }
  func.func @transform_6(%arg0: i32) -> (i32, i32, i32) {
    %c0_i32 = arith.constant 0 : i32
    %c0_i32_0 = arith.constant 0 : i32
    %c0_i32_1 = arith.constant 0 : i32
    %c0_i32_2 = arith.constant 0 : i32
    return %c0_i32, %c0_i32_0, %c0_i32_1 : i32, i32, i32
  }
  func.func @transform_7(%arg0: i32) -> (i32, i32) {
    %c0_i32 = arith.constant 0 : i32
    %c0_i32_0 = arith.constant 0 : i32
    %c0_i32_1 = arith.constant 0 : i32
    return %c0_i32, %c0_i32_0 : i32, i32
  }
  func.func @transform_8(%arg0: i32) -> (i32, i32) {
    %c0_i32 = arith.constant 0 : i32
    %c0_i32_0 = arith.constant 0 : i32
    %c0_i32_1 = arith.constant 0 : i32
    return %c0_i32, %c0_i32_0 : i32, i32
  }
  func.func @transform_9(%arg0: i32) -> (i32, i32) {
    %c0_i32 = arith.constant 0 : i32
    %c0_i32_0 = arith.constant 0 : i32
    %c0_i32_1 = arith.constant 0 : i32
    return %c0_i32, %c0_i32_0 : i32, i32
  }
  func.func @transform_10(%arg0: i32) -> (i32, i32) {
    %c0_i32 = arith.constant 0 : i32
    %c0_i32_0 = arith.constant 0 : i32
    %c0_i32_1 = arith.constant 0 : i32
    return %c0_i32, %c0_i32_0 : i32, i32
  }
  func.func @transform_11(%arg0: i32) -> (i32, i32, i32) {
    %c0_i32 = arith.constant 0 : i32
    %c0_i32_0 = arith.constant 0 : i32
    %c0_i32_1 = arith.constant 0 : i32
    %c0_i32_2 = arith.constant 0 : i32
    return %c0_i32, %c0_i32_0, %c0_i32_1 : i32, i32, i32
  }
  func.func @transform_12(%arg0: i32) -> (i32, i32) {
    %c0_i32 = arith.constant 0 : i32
    %c0_i32_0 = arith.constant 0 : i32
    %c0_i32_1 = arith.constant 0 : i32
    return %c0_i32, %c0_i32_0 : i32, i32
  }
  func.func @transform_13(%arg0: i32) -> (i32, i32) {
    %c0_i32 = arith.constant 0 : i32
    %c0_i32_0 = arith.constant 0 : i32
    %c0_i32_1 = arith.constant 0 : i32
    return %c0_i32, %c0_i32_0 : i32, i32
  }
  func.func @transform_14(%arg0: i32) -> (i32, i32) {
    %c0_i32 = arith.constant 0 : i32
    %c0_i32_0 = arith.constant 0 : i32
    %c0_i32_1 = arith.constant 0 : i32
    return %c0_i32, %c0_i32_0 : i32, i32
  }
  func.func @transform_15(%arg0: i32) -> (i32, i32) {
    %c0_i32 = arith.constant 0 : i32
    %c0_i32_0 = arith.constant 0 : i32
    %c0_i32_1 = arith.constant 0 : i32
    return %c0_i32, %c0_i32_0 : i32, i32
  }
  func.func @transform_16(%arg0: i32) -> (i32, i32, i32) {
    %c0_i32 = arith.constant 0 : i32
    %c0_i32_0 = arith.constant 0 : i32
    %c0_i32_1 = arith.constant 0 : i32
    %c0_i32_2 = arith.constant 0 : i32
    return %c0_i32, %c0_i32_0, %c0_i32_1 : i32, i32, i32
  }
  func.func @transform_17(%arg0: i32) -> (i32, i32, i32) {
    %c0_i32 = arith.constant 0 : i32
    %c0_i32_0 = arith.constant 0 : i32
    %c0_i32_1 = arith.constant 0 : i32
    %c0_i32_2 = arith.constant 0 : i32
    return %c0_i32, %c0_i32_0, %c0_i32_1 : i32, i32, i32
  }
  func.func @transform_18(%arg0: i32) -> (i32, i32, i32) {
    %c0_i32 = arith.constant 0 : i32
    %c0_i32_0 = arith.constant 0 : i32
    %c0_i32_1 = arith.constant 0 : i32
    %c0_i32_2 = arith.constant 0 : i32
    return %c0_i32, %c0_i32_0, %c0_i32_1 : i32, i32, i32
  }
  func.func @transform_19(%arg0: i32) -> (i32, i32, i32) {
    %c0_i32 = arith.constant 0 : i32
    %c0_i32_0 = arith.constant 0 : i32
    %c0_i32_1 = arith.constant 0 : i32
    return %arg0, %c0_i32, %c0_i32_0 : i32, i32, i32
  }
}

</mosaic_0001>

<llo_original>
// kernel: visual_subnetwork_forward.1
$region0: #{visual_subnetwork_forward.1}
  #allocation0 [shape = 'u32[]', space=smem, size = 0x4, offset = 0x4, fixed_abs, tag = 'smem constant byte address 0x4 - core index']
  #allocation1 [shape = 'u32[144,128]{1,0:T(1,128)}', space=vmem, size = 0x12000, scoped, tag = 'internal scratch']
  %s0 = inlined_call_operand.vmem [shape: f32[2,16,128], index: 0, kind: input, shape index: {}]
  %s1 = inlined_call_operand.vmem [shape: bf16[32,16], index: 1, kind: input, shape index: {}]
  %s2 = inlined_call_operand.vmem [shape: f32[32,1], index: 2, kind: input, shape index: {}]
  %s3 = inlined_call_operand.vmem [shape: f32[4,5,32,1], index: 3, kind: input, shape index: {}]
  %s4 = inlined_call_operand.vmem [shape: f32[4,32,1], index: 4, kind: input, shape index: {}]
  %s5 = inlined_call_operand.vmem [shape: f32[3,5,32,1], index: 5, kind: input, shape index: {}]
  %s6 = inlined_call_operand.vmem [shape: f32[3,32,1], index: 6, kind: input, shape index: {}]
  %s7 = inlined_call_operand.vmem [shape: bf16[32,64], index: 7, kind: input, shape index: {}]
  %s8 = inlined_call_operand.vmem [shape: bf16[32,96], index: 8, kind: input, shape index: {}]
  %s9 = inlined_call_operand.vmem [shape: bf16[32,96], index: 9, kind: input, shape index: {}]
  %s10 = inlined_call_operand.vmem [shape: bf16[32,64], index: 10, kind: input, shape index: {}]
  %s11 = inlined_call_operand.vmem [shape: f32[4,32,1], index: 11, kind: input, shape index: {}]
  %s12 = inlined_call_operand.vmem [shape: bf16[32,128], index: 12, kind: input, shape index: {}]
  %s13 = inlined_call_operand.vmem [shape: f32[32,1], index: 13, kind: input, shape index: {}]
  %s14 = inlined_call_operand.vmem [shape: bf16[16,32], index: 14, kind: input, shape index: {}]
  %s15 = inlined_call_operand.vmem [shape: f32[16,1], index: 15, kind: input, shape index: {}]
  %s16 = inlined_call_operand.vmem [shape: bf16[3,128,128], index: 16, kind: input, shape index: {}]
  %s17 = inlined_call_operand.vmem [shape: bf16[3,128,128], index: 17, kind: input, shape index: {}]
  %s18 = inlined_call_operand.vmem [shape: bf16[3,128,128], index: 18, kind: input, shape index: {}]
  %s19 = inlined_call_operand.hbm [shape: f32[2,16,128], index: 19, kind: output, shape index: {}]
  %s20 = sld [smem:[#allocation0]]
  $region109: #{visual_subnetwork_forward.1} parent=0
    _
  %s22 = ssub.s32 1, %s20
  %s23 = scalar_select 0, %s22, %s20
  $region1: #{visual_subnetwork_forward.1} parent=0
    #allocation2 [shape = 'u8[16384]{0}', space=vmem, size = 0x4000, scoped, tag = 'output window, operand 0']
    #allocation3 [shape = 's32[2]{0}', space=sflag, size = 0x8, scoped, tag = 'scoped memory for visual_subnetwork_forward.1']
    %24 = vsyncpa [#allocation3], 0
    %s25 = scalar_lea.sflag [#allocation3], 1
    %26 = vsyncpa %s25, 0
    loop: start=0, step=1, limit=4
    $region2: #{visual_subnetwork_forward.1} parent=1 // loop_pre_header
      _
    $region3: #{visual_subnetwork_forward.1} parent=1 // loop_header
      %s28 = sphi 0, %s32
      %p29 = scmp.ge.s32.totalorder %s28, 4
      %s38 = sphi 0, %s40
      %s41 = sphi 0, %s38
      %s42 = sphi 0, %s41
      %s58 = sphi 0, %s42
      %s62 = sphi 0, %s62
      %s64 = sphi 0, %s62
      %s65 = sphi 0, %s64
      %s79 = sphi 0, %s65
      %s83 = sphi 0, %s83
      %s85 = sphi 0, %s83
      %s86 = sphi 0, %s85
      %s100 = sphi 0, %s86
      %s104 = sphi 0, %s104
      %s106 = sphi 0, %s104
      %s107 = sphi 0, %s106
      %s121 = sphi 0, %s107
      %s125 = sphi 0, %s125
      %s127 = sphi 0, %s125
      %s128 = sphi 0, %s127
      %s142 = sphi 0, %s128
      %s146 = sphi 0, %s146
      %s148 = sphi 0, %s146
      %s149 = sphi 0, %s148
      %s163 = sphi 0, %s149
      %s167 = sphi 0, %s167
      %s169 = sphi 0, %s167
      %s170 = sphi 0, %s169
      %s184 = sphi 0, %s170
      %s188 = sphi 0, %s188
      %s190 = sphi 0, %s188
      %s191 = sphi 0, %s190
      %s205 = sphi 0, %s191
      %s209 = sphi 0, %s209
      %s211 = sphi 0, %s209
      %s212 = sphi 0, %s211
      %s226 = sphi 0, %s212
      %s230 = sphi 0, %s230
      %s232 = sphi 0, %s230
      %s233 = sphi 0, %s232
      %s247 = sphi 0, %s233
      %s251 = sphi 0, %s251
      %s253 = sphi 0, %s251
      %s254 = sphi 0, %s253
      %s268 = sphi 0, %s254
      %s272 = sphi 0, %s272
      %s274 = sphi 0, %s272
      %s275 = sphi 0, %s274
      %s289 = sphi 0, %s275
      %s293 = sphi 0, %s293
      %s295 = sphi 0, %s293
      %s296 = sphi 0, %s295
      %s310 = sphi 0, %s296
      %s314 = sphi 0, %s314
      %s316 = sphi 0, %s314
      %s317 = sphi 0, %s316
      %s331 = sphi 0, %s317
      %s335 = sphi 0, %s335
      %s337 = sphi 0, %s335
      %s338 = sphi 0, %s337
      %s352 = sphi 0, %s338
      %s356 = sphi 0, %s356
      %s358 = sphi 0, %s356
      %s359 = sphi 0, %s358
      %s373 = sphi 0, %s359
      %s377 = sphi 0, %s377
      %s379 = sphi 0, %s377
      %s380 = sphi 0, %s379
      %s394 = sphi 0, %s380
      %s398 = sphi 0, %s398
      %s400 = sphi 0, %s398
      %s401 = sphi 0, %s400
      %s415 = sphi 0, %s401
      %s419 = sphi 0, %s419
      %s421 = sphi 0, %s419
      %s422 = sphi 0, %s421
      %s436 = sphi 0, %s422
      %s442 = sphi 0, %s444
      %s445 = sphi 0, %s442
      %s446 = sphi 0, %s445
      %s462 = sphi 0, %s446
    $region4: #{visual_subnetwork_forward.1} parent=1 // loop_header_branch
      %31 = sbr.rel (%p29) target = $region8
    $region5: #{visual_subnetwork_forward.1} parent=1 // loop_body
      %s33 = ssub.s32 %s28, 1
      %s34 = ssub.s32 %s28, 2
      %s35 = sadd.s32 %s28, 1
      %s36 = ssub.s32 %s28, %s35
      %p37 = scmp.eq.s32.totalorder %s36, 0
      %s39 = sadd.s32 %s38, 1
      %s40 = scalar_select %p37, %s38, %s39
      %p43 = pneg %p37
      %p44 = scmp.eq.s32.totalorder %s28, 1
      %p45 = por %p43, %p44
      %p46 = scmp.ne.s32.totalorder %s38, %s41
      %p47 = scmp.eq.s32.totalorder %s28, 0
      %p48 = por %p46, %p47
      %p49 = scmp.ne.s32.totalorder %s38, %s41
      %p50 = scmp.eq.s32.totalorder %s33, 1
      %p51 = por %p49, %p50
      %p52 = scmp.ne.s32.totalorder %s41, %s42
      %p53 = scmp.eq.s32.totalorder %s33, 0
      %p54 = por %p52, %p53
      %p55 = scmp.ne.s32.totalorder %s41, %s42
      %p56 = scmp.eq.s32.totalorder %s34, 1
      %p57 = por %p55, %p56
      %p59 = scmp.ne.s32.totalorder %s42, %s58
      %p60 = scmp.eq.s32.totalorder %s34, 0
      %p61 = por %p59, %p60
      %s63 = sadd.s32 %s62, 1
      %p66 = scmp.eq.s32.totalorder %s28, 1
      %p67 = scmp.ne.s32.totalorder %s62, %s64
      %p68 = scmp.eq.s32.totalorder %s28, 0
      %p69 = por %p67, %p68
      %p70 = scmp.ne.s32.totalorder %s62, %s64
      %p71 = scmp.eq.s32.totalorder %s33, 1
      %p72 = por %p70, %p71
      %p73 = scmp.ne.s32.totalorder %s64, %s65
      %p74 = scmp.eq.s32.totalorder %s33, 0
      %p75 = por %p73, %p74
      %p76 = scmp.ne.s32.totalorder %s64, %s65
      %p77 = scmp.eq.s32.totalorder %s34, 1
      %p78 = por %p76, %p77
      %p80 = scmp.ne.s32.totalorder %s65, %s79
      %p81 = scmp.eq.s32.totalorder %s34, 0
      %p82 = por %p80, %p81
      %s84 = sadd.s32 %s83, 1
      %p87 = scmp.eq.s32.totalorder %s28, 1
      %p88 = scmp.ne.s32.totalorder %s83, %s85
      %p89 = scmp.eq.s32.totalorder %s28, 0
      %p90 = por %p88, %p89
      %p91 = scmp.ne.s32.totalorder %s83, %s85
      %p92 = scmp.eq.s32.totalorder %s33, 1
      %p93 = por %p91, %p92
      %p94 = scmp.ne.s32.totalorder %s85, %s86
      %p95 = scmp.eq.s32.totalorder %s33, 0
      %p96 = por %p94, %p95
      %p97 = scmp.ne.s32.totalorder %s85, %s86
      %p98 = scmp.eq.s32.totalorder %s34, 1
      %p99 = por %p97, %p98
      %p101 = scmp.ne.s32.totalorder %s86, %s100
      %p102 = scmp.eq.s32.totalorder %s34, 0
      %p103 = por %p101, %p102
      %s105 = sadd.s32 %s104, 1
      %p108 = scmp.eq.s32.totalorder %s28, 1
      %p109 = scmp.ne.s32.totalorder %s104, %s106
      %p110 = scmp.eq.s32.totalorder %s28, 0
      %p111 = por %p109, %p110
      %p112 = scmp.ne.s32.totalorder %s104, %s106
      %p113 = scmp.eq.s32.totalorder %s33, 1
      %p114 = por %p112, %p113
      %p115 = scmp.ne.s32.totalorder %s106, %s107
      %p116 = scmp.eq.s32.totalorder %s33, 0
      %p117 = por %p115, %p116
      %p118 = scmp.ne.s32.totalorder %s106, %s107
      %p119 = scmp.eq.s32.totalorder %s34, 1
      %p120 = por %p118, %p119
      %p122 = scmp.ne.s32.totalorder %s107, %s121
      %p123 = scmp.eq.s32.totalorder %s34, 0
      %p124 = por %p122, %p123
      %s126 = sadd.s32 %s125, 1
      %p129 = scmp.eq.s32.totalorder %s28, 1
      %p130 = scmp.ne.s32.totalorder %s125, %s127
      %p131 = scmp.eq.s32.totalorder %s28, 0
      %p132 = por %p130, %p131
      %p133 = scmp.ne.s32.totalorder %s125, %s127
      %p134 = scmp.eq.s32.totalorder %s33, 1
      %p135 = por %p133, %p134
      %p136 = scmp.ne.s32.totalorder %s127, %s128
      %p137 = scmp.eq.s32.totalorder %s33, 0
      %p138 = por %p136, %p137
      %p139 = scmp.ne.s32.totalorder %s127, %s128
      %p140 = scmp.eq.s32.totalorder %s34, 1
      %p141 = por %p139, %p140
      %p143 = scmp.ne.s32.totalorder %s128, %s142
      %p144 = scmp.eq.s32.totalorder %s34, 0
      %p145 = por %p143, %p144
      %s147 = sadd.s32 %s146, 1
      %p150 = scmp.eq.s32.totalorder %s28, 1
      %p151 = scmp.ne.s32.totalorder %s146, %s148
      %p152 = scmp.eq.s32.totalorder %s28, 0
      %p153 = por %p151, %p152
      %p154 = scmp.ne.s32.totalorder %s146, %s148
      %p155 = scmp.eq.s32.totalorder %s33, 1
      %p156 = por %p154, %p155
      %p157 = scmp.ne.s32.totalorder %s148, %s149
      %p158 = scmp.eq.s32.totalorder %s33, 0
      %p159 = por %p157, %p158
      %p160 = scmp.ne.s32.totalorder %s148, %s149
      %p161 = scmp.eq.s32.totalorder %s34, 1
      %p162 = por %p160, %p161
      %p164 = scmp.ne.s32.totalorder %s149, %s163
      %p165 = scmp.eq.s32.totalorder %s34, 0
      %p166 = por %p164, %p165
      %s168 = sadd.s32 %s167, 1
      %p171 = scmp.eq.s32.totalorder %s28, 1
      %p172 = scmp.ne.s32.totalorder %s167, %s169
      %p173 = scmp.eq.s32.totalorder %s28, 0
      %p174 = por %p172, %p173
      %p175 = scmp.ne.s32.totalorder %s167, %s169
      %p176 = scmp.eq.s32.totalorder %s33, 1
      %p177 = por %p175, %p176
      %p178 = scmp.ne.s32.totalorder %s169, %s170
      %p179 = scmp.eq.s32.totalorder %s33, 0
      %p180 = por %p178, %p179
      %p181 = scmp.ne.s32.totalorder %s169, %s170
      %p182 = scmp.eq.s32.totalorder %s34, 1
      %p183 = por %p181, %p182
      %p185 = scmp.ne.s32.totalorder %s170, %s184
      %p186 = scmp.eq.s32.totalorder %s34, 0
      %p187 = por %p185, %p186
      %s189 = sadd.s32 %s188, 1
      %p192 = scmp.eq.s32.totalorder %s28, 1
      %p193 = scmp.ne.s32.totalorder %s188, %s190
      %p194 = scmp.eq.s32.totalorder %s28, 0
      %p195 = por %p193, %p194
      %p196 = scmp.ne.s32.totalorder %s188, %s190
      %p197 = scmp.eq.s32.totalorder %s33, 1
      %p198 = por %p196, %p197
      %p199 = scmp.ne.s32.totalorder %s190, %s191
      %p200 = scmp.eq.s32.totalorder %s33, 0
      %p201 = por %p199, %p200
      %p202 = scmp.ne.s32.totalorder %s190, %s191
      %p203 = scmp.eq.s32.totalorder %s34, 1
      %p204 = por %p202, %p203
      %p206 = scmp.ne.s32.totalorder %s191, %s205
      %p207 = scmp.eq.s32.totalorder %s34, 0
      %p208 = por %p206, %p207
      %s210 = sadd.s32 %s209, 1
      %p213 = scmp.eq.s32.totalorder %s28, 1
      %p214 = scmp.ne.s32.totalorder %s209, %s211
      %p215 = scmp.eq.s32.totalorder %s28, 0
      %p216 = por %p214, %p215
      %p217 = scmp.ne.s32.totalorder %s209, %s211
      %p218 = scmp.eq.s32.totalorder %s33, 1
      %p219 = por %p217, %p218
      %p220 = scmp.ne.s32.totalorder %s211, %s212
      %p221 = scmp.eq.s32.totalorder %s33, 0
      %p222 = por %p220, %p221
      %p223 = scmp.ne.s32.totalorder %s211, %s212
      %p224 = scmp.eq.s32.totalorder %s34, 1
      %p225 = por %p223, %p224
      %p227 = scmp.ne.s32.totalorder %s212, %s226
      %p228 = scmp.eq.s32.totalorder %s34, 0
      %p229 = por %p227, %p228
      %s231 = sadd.s32 %s230, 1
      %p234 = scmp.eq.s32.totalorder %s28, 1
      %p235 = scmp.ne.s32.totalorder %s230, %s232
      %p236 = scmp.eq.s32.totalorder %s28, 0
      %p237 = por %p235, %p236
      %p238 = scmp.ne.s32.totalorder %s230, %s232
      %p239 = scmp.eq.s32.totalorder %s33, 1
      %p240 = por %p238, %p239
      %p241 = scmp.ne.s32.totalorder %s232, %s233
      %p242 = scmp.eq.s32.totalorder %s33, 0
      %p243 = por %p241, %p242
      %p244 = scmp.ne.s32.totalorder %s232, %s233
      %p245 = scmp.eq.s32.totalorder %s34, 1
      %p246 = por %p244, %p245
      %p248 = scmp.ne.s32.totalorder %s233, %s247
      %p249 = scmp.eq.s32.totalorder %s34, 0
      %p250 = por %p248, %p249
      %s252 = sadd.s32 %s251, 1
      %p255 = scmp.eq.s32.totalorder %s28, 1
      %p256 = scmp.ne.s32.totalorder %s251, %s253
      %p257 = scmp.eq.s32.totalorder %s28, 0
      %p258 = por %p256, %p257
      %p259 = scmp.ne.s32.totalorder %s251, %s253
      %p260 = scmp.eq.s32.totalorder %s33, 1
      %p261 = por %p259, %p260
      %p262 = scmp.ne.s32.totalorder %s253, %s254
      %p263 = scmp.eq.s32.totalorder %s33, 0
      %p264 = por %p262, %p263
      %p265 = scmp.ne.s32.totalorder %s253, %s254
      %p266 = scmp.eq.s32.totalorder %s34, 1
      %p267 = por %p265, %p266
      %p269 = scmp.ne.s32.totalorder %s254, %s268
      %p270 = scmp.eq.s32.totalorder %s34, 0
      %p271 = por %p269, %p270
      %s273 = sadd.s32 %s272, 1
      %p276 = scmp.eq.s32.totalorder %s28, 1
      %p277 = scmp.ne.s32.totalorder %s272, %s274
      %p278 = scmp.eq.s32.totalorder %s28, 0
      %p279 = por %p277, %p278
      %p280 = scmp.ne.s32.totalorder %s272, %s274
      %p281 = scmp.eq.s32.totalorder %s33, 1
      %p282 = por %p280, %p281
      %p283 = scmp.ne.s32.totalorder %s274, %s275
      %p284 = scmp.eq.s32.totalorder %s33, 0
      %p285 = por %p283, %p284
      %p286 = scmp.ne.s32.totalorder %s274, %s275
      %p287 = scmp.eq.s32.totalorder %s34, 1
      %p288 = por %p286, %p287
      %p290 = scmp.ne.s32.totalorder %s275, %s289
      %p291 = scmp.eq.s32.totalorder %s34, 0
      %p292 = por %p290, %p291
      %s294 = sadd.s32 %s293, 1
      %p297 = scmp.eq.s32.totalorder %s28, 1
      %p298 = scmp.ne.s32.totalorder %s293, %s295
      %p299 = scmp.eq.s32.totalorder %s28, 0
      %p300 = por %p298, %p299
      %p301 = scmp.ne.s32.totalorder %s293, %s295
      %p302 = scmp.eq.s32.totalorder %s33, 1
      %p303 = por %p301, %p302
      %p304 = scmp.ne.s32.totalorder %s295, %s296
      %p305 = scmp.eq.s32.totalorder %s33, 0
      %p306 = por %p304, %p305
      %p307 = scmp.ne.s32.totalorder %s295, %s296
      %p308 = scmp.eq.s32.totalorder %s34, 1
      %p309 = por %p307, %p308
      %p311 = scmp.ne.s32.totalorder %s296, %s310
      %p312 = scmp.eq.s32.totalorder %s34, 0
      %p313 = por %p311, %p312
      %s315 = sadd.s32 %s314, 1
      %p318 = scmp.eq.s32.totalorder %s28, 1
      %p319 = scmp.ne.s32.totalorder %s314, %s316
      %p320 = scmp.eq.s32.totalorder %s28, 0
      %p321 = por %p319, %p320
      %p322 = scmp.ne.s32.totalorder %s314, %s316
      %p323 = scmp.eq.s32.totalorder %s33, 1
      %p324 = por %p322, %p323
      %p325 = scmp.ne.s32.totalorder %s316, %s317
      %p326 = scmp.eq.s32.totalorder %s33, 0
      %p327 = por %p325, %p326
      %p328 = scmp.ne.s32.totalorder %s316, %s317
      %p329 = scmp.eq.s32.totalorder %s34, 1
      %p330 = por %p328, %p329
      %p332 = scmp.ne.s32.totalorder %s317, %s331
      %p333 = scmp.eq.s32.totalorder %s34, 0
      %p334 = por %p332, %p333
      %s336 = sadd.s32 %s335, 1
      %p339 = scmp.eq.s32.totalorder %s28, 1
      %p340 = scmp.ne.s32.totalorder %s335, %s337
      %p341 = scmp.eq.s32.totalorder %s28, 0
      %p342 = por %p340, %p341
      %p343 = scmp.ne.s32.totalorder %s335, %s337
      %p344 = scmp.eq.s32.totalorder %s33, 1
      %p345 = por %p343, %p344
      %p346 = scmp.ne.s32.totalorder %s337, %s338
      %p347 = scmp.eq.s32.totalorder %s33, 0
      %p348 = por %p346, %p347
      %p349 = scmp.ne.s32.totalorder %s337, %s338
      %p350 = scmp.eq.s32.totalorder %s34, 1
      %p351 = por %p349, %p350
      %p353 = scmp.ne.s32.totalorder %s338, %s352
      %p354 = scmp.eq.s32.totalorder %s34, 0
      %p355 = por %p353, %p354
      %s357 = sadd.s32 %s356, 1
      %p360 = scmp.eq.s32.totalorder %s28, 1
      %p361 = scmp.ne.s32.totalorder %s356, %s358
      %p362 = scmp.eq.s32.totalorder %s28, 0
      %p363 = por %p361, %p362
      %p364 = scmp.ne.s32.totalorder %s356, %s358
      %p365 = scmp.eq.s32.totalorder %s33, 1
      %p366 = por %p364, %p365
      %p367 = scmp.ne.s32.totalorder %s358, %s359
      %p368 = scmp.eq.s32.totalorder %s33, 0
      %p369 = por %p367, %p368
      %p370 = scmp.ne.s32.totalorder %s358, %s359
      %p371 = scmp.eq.s32.totalorder %s34, 1
      %p372 = por %p370, %p371
      %p374 = scmp.ne.s32.totalorder %s359, %s373
      %p375 = scmp.eq.s32.totalorder %s34, 0
      %p376 = por %p374, %p375
      %s378 = sadd.s32 %s377, 1
      %p381 = scmp.eq.s32.totalorder %s28, 1
      %p382 = scmp.ne.s32.totalorder %s377, %s379
      %p383 = scmp.eq.s32.totalorder %s28, 0
      %p384 = por %p382, %p383
      %p385 = scmp.ne.s32.totalorder %s377, %s379
      %p386 = scmp.eq.s32.totalorder %s33, 1
      %p387 = por %p385, %p386
      %p388 = scmp.ne.s32.totalorder %s379, %s380
      %p389 = scmp.eq.s32.totalorder %s33, 0
      %p390 = por %p388, %p389
      %p391 = scmp.ne.s32.totalorder %s379, %s380
      %p392 = scmp.eq.s32.totalorder %s34, 1
      %p393 = por %p391, %p392
      %p395 = scmp.ne.s32.totalorder %s380, %s394
      %p396 = scmp.eq.s32.totalorder %s34, 0
      %p397 = por %p395, %p396
      %s399 = sadd.s32 %s398, 1
      %p402 = scmp.eq.s32.totalorder %s28, 1
      %p403 = scmp.ne.s32.totalorder %s398, %s400
      %p404 = scmp.eq.s32.totalorder %s28, 0
      %p405 = por %p403, %p404
      %p406 = scmp.ne.s32.totalorder %s398, %s400
      %p407 = scmp.eq.s32.totalorder %s33, 1
      %p408 = por %p406, %p407
      %p409 = scmp.ne.s32.totalorder %s400, %s401
      %p410 = scmp.eq.s32.totalorder %s33, 0
      %p411 = por %p409, %p410
      %p412 = scmp.ne.s32.totalorder %s400, %s401
      %p413 = scmp.eq.s32.totalorder %s34, 1
      %p414 = por %p412, %p413
      %p416 = scmp.ne.s32.totalorder %s401, %s415
      %p417 = scmp.eq.s32.totalorder %s34, 0
      %p418 = por %p416, %p417
      %s420 = sadd.s32 %s419, 1
      %p423 = scmp.eq.s32.totalorder %s28, 1
      %p424 = scmp.ne.s32.totalorder %s419, %s421
      %p425 = scmp.eq.s32.totalorder %s28, 0
      %p426 = por %p424, %p425
      %p427 = scmp.ne.s32.totalorder %s419, %s421
      %p428 = scmp.eq.s32.totalorder %s33, 1
      %p429 = por %p427, %p428
      %p430 = scmp.ne.s32.totalorder %s421, %s422
      %p431 = scmp.eq.s32.totalorder %s33, 0
      %p432 = por %p430, %p431
      %p433 = scmp.ne.s32.totalorder %s421, %s422
      %p434 = scmp.eq.s32.totalorder %s34, 1
      %p435 = por %p433, %p434
      %p437 = scmp.ne.s32.totalorder %s422, %s436
      %p438 = scmp.eq.s32.totalorder %s34, 0
      %p439 = por %p437, %p438
      %s440 = ssub.s32 %s28, %s35
      %p441 = scmp.eq.s32.totalorder %s440, 0
      %s443 = sadd.s32 %s442, 1
      %s444 = scalar_select %p441, %s442, %s443
      %p447 = pneg %p441
      %p448 = scmp.eq.s32.totalorder %s28, 1
      %p449 = por %p447, %p448
      %p450 = scmp.ne.s32.totalorder %s442, %s445
      %p451 = scmp.eq.s32.totalorder %s28, 0
      %p452 = por %p450, %p451
      %p453 = scmp.ne.s32.totalorder %s442, %s445
      %p454 = scmp.eq.s32.totalorder %s33, 1
      %p455 = por %p453, %p454
      %p456 = scmp.ne.s32.totalorder %s445, %s446
      %p457 = scmp.eq.s32.totalorder %s33, 0
      %p458 = por %p456, %p457
      %p459 = scmp.ne.s32.totalorder %s445, %s446
      %p460 = scmp.eq.s32.totalorder %s34, 1
      %p461 = por %p459, %p460
      %p463 = scmp.ne.s32.totalorder %s446, %s462
      %p464 = scmp.eq.s32.totalorder %s34, 0
      %p465 = por %p463, %p464
      %p466 = scmp.le.s32.totalorder 1, %s28
      %p467 = scmp.lt.s32.totalorder %s28, 3
      %p468 = pnand %p466, %p467
      %p469 = pneg %p468
      // Predicated region
      $region9: #{visual_subnetwork_forward.1} parent=5 // pred_check
        _
      $region10: #{visual_subnetwork_forward.1} parent=5 // pred_check_branch
        %471 = sbr.rel (%p468) target = $region12
      $region11: #{visual_subnetwork_forward.1} parent=5 // pred_region
        %s472 = ssub.s32 %s28, 1
        // Predicated region
        $region13: #{visual_subnetwork_forward.1} parent=11 // pred_check
          %p473 = pneg %p75
        $region14: #{visual_subnetwork_forward.1} parent=11 // pred_check_branch
          %475 = sbr.rel (%p473) target = $region16
        $region15: #{visual_subnetwork_forward.1} parent=11 // pred_region
          _
        $region16: #{visual_subnetwork_forward.1} parent=11 // pred_fallthru
          _
        // Predicated region
        $region17: #{visual_subnetwork_forward.1} parent=11 // pred_check
          %p476 = pneg %p96
        $region18: #{visual_subnetwork_forward.1} parent=11 // pred_check_branch
          %478 = sbr.rel (%p476) target = $region20
        $region19: #{visual_subnetwork_forward.1} parent=11 // pred_region
          _
        $region20: #{visual_subnetwork_forward.1} parent=11 // pred_fallthru
          _
        // Predicated region
        $region21: #{visual_subnetwork_forward.1} parent=11 // pred_check
          %p479 = pneg %p117
        $region22: #{visual_subnetwork_forward.1} parent=11 // pred_check_branch
          %481 = sbr.rel (%p479) target = $region24
        $region23: #{visual_subnetwork_forward.1} parent=11 // pred_region
          _
        $region24: #{visual_subnetwork_forward.1} parent=11 // pred_fallthru
          _
        // Predicated region
        $region25: #{visual_subnetwork_forward.1} parent=11 // pred_check
          %p482 = pneg %p138
        $region26: #{visual_subnetwork_forward.1} parent=11 // pred_check_branch
          %484 = sbr.rel (%p482) target = $region28
        $region27: #{visual_subnetwork_forward.1} parent=11 // pred_region
          _
        $region28: #{visual_subnetwork_forward.1} parent=11 // pred_fallthru
          _
        // Predicated region
        $region29: #{visual_subnetwork_forward.1} parent=11 // pred_check
          %p485 = pneg %p159
        $region30: #{visual_subnetwork_forward.1} parent=11 // pred_check_branch
          %487 = sbr.rel (%p485) target = $region32
        $region31: #{visual_subnetwork_forward.1} parent=11 // pred_region
          _
        $region32: #{visual_subnetwork_forward.1} parent=11 // pred_fallthru
          _
        // Predicated region
        $region33: #{visual_subnetwork_forward.1} parent=11 // pred_check
          %p488 = pneg %p180
        $region34: #{visual_subnetwork_forward.1} parent=11 // pred_check_branch
          %490 = sbr.rel (%p488) target = $region36
        $region35: #{visual_subnetwork_forward.1} parent=11 // pred_region
          _
        $region36: #{visual_subnetwork_forward.1} parent=11 // pred_fallthru
          _
        // Predicated region
        $region37: #{visual_subnetwork_forward.1} parent=11 // pred_check
          %p491 = pneg %p201
        $region38: #{visual_subnetwork_forward.1} parent=11 // pred_check_branch
          %493 = sbr.rel (%p491) target = $region40
        $region39: #{visual_subnetwork_forward.1} parent=11 // pred_region
          _
        $region40: #{visual_subnetwork_forward.1} parent=11 // pred_fallthru
          _
        // Predicated region
        $region41: #{visual_subnetwork_forward.1} parent=11 // pred_check
          %p494 = pneg %p222
        $region42: #{visual_subnetwork_forward.1} parent=11 // pred_check_branch
          %496 = sbr.rel (%p494) target = $region44
        $region43: #{visual_subnetwork_forward.1} parent=11 // pred_region
          _
        $region44: #{visual_subnetwork_forward.1} parent=11 // pred_fallthru
          _
        // Predicated region
        $region45: #{visual_subnetwork_forward.1} parent=11 // pred_check
          %p497 = pneg %p243
        $region46: #{visual_subnetwork_forward.1} parent=11 // pred_check_branch
          %499 = sbr.rel (%p497) target = $region48
        $region47: #{visual_subnetwork_forward.1} parent=11 // pred_region
          _
        $region48: #{visual_subnetwork_forward.1} parent=11 // pred_fallthru
          _
        // Predicated region
        $region49: #{visual_subnetwork_forward.1} parent=11 // pred_check
          %p500 = pneg %p264
        $region50: #{visual_subnetwork_forward.1} parent=11 // pred_check_branch
          %502 = sbr.rel (%p500) target = $region52
        $region51: #{visual_subnetwork_forward.1} parent=11 // pred_region
          _
        $region52: #{visual_subnetwork_forward.1} parent=11 // pred_fallthru
          _
        // Predicated region
        $region53: #{visual_subnetwork_forward.1} parent=11 // pred_check
          %p503 = pneg %p285
        $region54: #{visual_subnetwork_forward.1} parent=11 // pred_check_branch
          %505 = sbr.rel (%p503) target = $region56
        $region55: #{visual_subnetwork_forward.1} parent=11 // pred_region
          _
        $region56: #{visual_subnetwork_forward.1} parent=11 // pred_fallthru
          _
        // Predicated region
        $region57: #{visual_subnetwork_forward.1} parent=11 // pred_check
          %p506 = pneg %p306
        $region58: #{visual_subnetwork_forward.1} parent=11 // pred_check_branch
          %508 = sbr.rel (%p506) target = $region60
        $region59: #{visual_subnetwork_forward.1} parent=11 // pred_region
          _
        $region60: #{visual_subnetwork_forward.1} parent=11 // pred_fallthru
          _
        // Predicated region
        $region61: #{visual_subnetwork_forward.1} parent=11 // pred_check
          %p509 = pneg %p327
        $region62: #{visual_subnetwork_forward.1} parent=11 // pred_check_branch
          %511 = sbr.rel (%p509) target = $region64
        $region63: #{visual_subnetwork_forward.1} parent=11 // pred_region
          _
        $region64: #{visual_subnetwork_forward.1} parent=11 // pred_fallthru
          _
        // Predicated region
        $region65: #{visual_subnetwork_forward.1} parent=11 // pred_check
          %p512 = pneg %p348
        $region66: #{visual_subnetwork_forward.1} parent=11 // pred_check_branch
          %514 = sbr.rel (%p512) target = $region68
        $region67: #{visual_subnetwork_forward.1} parent=11 // pred_region
          _
        $region68: #{visual_subnetwork_forward.1} parent=11 // pred_fallthru
          _
        // Predicated region
        $region69: #{visual_subnetwork_forward.1} parent=11 // pred_check
          %p515 = pneg %p369
        $region70: #{visual_subnetwork_forward.1} parent=11 // pred_check_branch
          %517 = sbr.rel (%p515) target = $region72
        $region71: #{visual_subnetwork_forward.1} parent=11 // pred_region
          _
        $region72: #{visual_subnetwork_forward.1} parent=11 // pred_fallthru
          _
        // Predicated region
        $region73: #{visual_subnetwork_forward.1} parent=11 // pred_check
          %p518 = pneg %p390
        $region74: #{visual_subnetwork_forward.1} parent=11 // pred_check_branch
          %520 = sbr.rel (%p518) target = $region76
        $region75: #{visual_subnetwork_forward.1} parent=11 // pred_region
          _
        $region76: #{visual_subnetwork_forward.1} parent=11 // pred_fallthru
          _
        // Predicated region
        $region77: #{visual_subnetwork_forward.1} parent=11 // pred_check
          %p521 = pneg %p411
        $region78: #{visual_subnetwork_forward.1} parent=11 // pred_check_branch
          %523 = sbr.rel (%p521) target = $region80
        $region79: #{visual_subnetwork_forward.1} parent=11 // pred_region
          _
        $region80: #{visual_subnetwork_forward.1} parent=11 // pred_fallthru
          _
        // Predicated region
        $region81: #{visual_subnetwork_forward.1} parent=11 // pred_check
          %p524 = pneg %p432
        $region82: #{visual_subnetwork_forward.1} parent=11 // pred_check_branch
          %526 = sbr.rel (%p524) target = $region84
        $region83: #{visual_subnetwork_forward.1} parent=11 // pred_region
          _
        $region84: #{visual_subnetwork_forward.1} parent=11 // pred_fallthru
          _
      $region12: #{visual_subnetwork_forward.1} parent=5 // pred_fallthru
        _
      %p527 = scmp.lt.s32.totalorder %s28, 2
      // Predicated region
      $region85: #{visual_subnetwork_forward.1} parent=5 // pred_check
        %p528 = pneg %p527
      $region86: #{visual_subnetwork_forward.1} parent=5 // pred_check_branch
        %530 = sbr.rel (%p528) target = $region88
      $region87: #{visual_subnetwork_forward.1} parent=5 // pred_region
        // Predicated region
        $region89: #{visual_subnetwork_forward.1} parent=87 // pred_check
          %p531 = pneg %p48
        $region90: #{visual_subnetwork_forward.1} parent=87 // pred_check_branch
          %533 = sbr.rel (%p531) target = $region92
        $region91: #{visual_subnetwork_forward.1} parent=87 // pred_region
          %p534 = scmp.lt.s32.totalorder %s28, 1
          %s535 = scalar_select %p534, %s28, 1
          %s536 = smul.addr %s535, 2
          %s537 = smul.addr %s536, 8
          %s538 = scalar_lea.vmem %s0, %s537
        $region92: #{visual_subnetwork_forward.1} parent=87 // pred_fallthru
          _
      $region88: #{visual_subnetwork_forward.1} parent=5 // pred_fallthru
        _
      %p539 = scmp.le.s32.totalorder 1, %s28
      %p540 = scmp.lt.s32.totalorder %s28, 3
      %p541 = pnand %p539, %p540
      %p542 = pneg %p541
      // Predicated region
      $region93: #{visual_subnetwork_forward.1} parent=5 // pred_check
        _
      $region94: #{visual_subnetwork_forward.1} parent=5 // pred_check_branch
        %544 = sbr.rel (%p541) target = $region96
      $region95: #{visual_subnetwork_forward.1} parent=5 // pred_region
        %s545 = ssub.s32 %s28, 1
        %p546 = scmp.lt.s32.totalorder %s33, 1
        %s547 = scalar_select %p546, %s33, 1
        %s548 = smul.addr %s547, 2
        %s549 = smul.addr %s548, 8
        %s550 = scalar_lea.vmem %s0, %s549
        %p551 = pneg %p54
        %p552 = pneg %p51
        %p553 = pneg %p75
        %p554 = pneg %p72
        %p555 = pneg %p96
        %p556 = pneg %p93
        %p557 = pneg %p117
        %p558 = pneg %p114
        %p559 = pneg %p138
        %p560 = pneg %p135
        %p561 = pneg %p159
        %p562 = pneg %p156
        %p563 = pneg %p180
        %p564 = pneg %p177
        %p565 = pneg %p201
        %p566 = pneg %p198
        %p567 = pneg %p222
        %p568 = pneg %p219
        %p569 = pneg %p243
        %p570 = pneg %p240
        %p571 = pneg %p264
        %p572 = pneg %p261
        %p573 = pneg %p285
        %p574 = pneg %p282
        %p575 = pneg %p306
        %p576 = pneg %p303
        %p577 = pneg %p327
        %p578 = pneg %p324
        %p579 = pneg %p348
        %p580 = pneg %p345
        %p581 = pneg %p369
        %p582 = pneg %p366
        %p583 = pneg %p390
        %p584 = pneg %p387
        %p585 = pneg %p411
        %p586 = pneg %p408
        %p587 = pneg %p432
        %p588 = pneg %p429
        %p589 = pneg %p458
        %p590 = pneg %p455
        %s591 = sand.u32 %s445, 1
        %s592 = scalar_lea.sflag [#allocation3], %s591
        %s593 = sand.u32 %s445, 1
        %s594 = smul.addr %s593, 16
        %s595 = scalar_lea.vmem [#allocation2], %s594
        %p596 = scmp.lt.s32.totalorder %s33, 1
        %s597 = scalar_select %p596, %s33, 1
        %s598 = smul.addr %s597, 2
        %s599 = smul.addr %s598, 8
        %s600 = scalar_lea.vmem %s0, %s599
        %v602 = vlaneseq
        %v603 = vand.u32 %v602, 127
        %v604 = vld [vmem:[%s600] sm:$0xff]
        %v605 = vld [vmem:[%s600 + $0x8] sm:$0xff]
        %v606 = vld [vmem:[%s1] sm:$0xf]
        %v607 = vld [vmem:[%s1 + $0x4] sm:$0xf]
        %v608 = vld [vmem:[%s1 + $0x8] sm:$0xf]
        %v609 = vld [vmem:[%s1 + $0xc] sm:$0xf]
        %v610 = vpack.c.bf16 %v605, %v604
        %v611 = vld [vmem:[%s2] sm:$0xff]
        %v612 = vld [vmem:[%s2 + $0x8] sm:$0xff]
        %v613 = vld [vmem:[%s2 + $0x10] sm:$0xff]
        %v614 = vld [vmem:[%s2 + $0x18] sm:$0xff]
        %616 = vset.pattern.permute.xlu0 0
        %617 = vperm.xlu0 %616, %v611
        %v618 = vpop.permute.xlu0 %617
        %621 = vset.pattern.permute.xlu0 0
        %622 = vperm.xlu0 %621, %v612
        %v623 = vpop.permute.xlu0 %622
        %626 = vset.pattern.permute.xlu0 0
        %627 = vperm.xlu0 %626, %v613
        %v628 = vpop.permute.xlu0 %627
        %631 = vset.pattern.permute.xlu0 0
        %632 = vperm.xlu0 %631, %v614
        %v633 = vpop.permute.xlu0 %632
        %v639 = vunpack.c.l.b16 %v606
        %v640 = vunpack.c.l.b16 %v607
        %v641 = vunpack.c.l.b16 %v608
        %v642 = vunpack.c.l.b16 %v609
        %v643 = vpack.c.b16 %v640, %v639
        %v644 = vpack.c.b16 %v642, %v641
        %vm645 = vcmask 130048
        %v647 = vsel %vm645, %v643, 0
        %v650 = vsel %vm645, %v644, 0
        %652 = vmatprep.subr.bf16.mxu0 0
        %653 = vmatpush1.bf16.msra.mxu0 0
        %654 = vmatprep.subr.bf16.mxu0 0
        %655 = vmatpush1.bf16.msra.mxu0 0
        %656 = vmatprep.subr.bf16.mxu0 0
        %657 = vmatpush1.bf16.msra.mxu0 0
        %658 = vmatprep.subr.bf16.mxu0 0
        %659 = vmatpush1.bf16.msra.mxu0 0
        %660 = vmatprep.subr.bf16.mxu0 0
        %661 = vmatpush1.bf16.msra.mxu0 0
        %662 = vmatprep.subr.bf16.mxu0 0
        %663 = vmatpush1.bf16.msra.mxu0 0
        %664 = vmatprep.subr.bf16.mxu0 0
        %665 = vmatpush1.bf16.msra.mxu0 0
        %666 = vmatprep.subr.bf16.mxu0 0
        %667 = vmatpush1.bf16.msra.mxu0 %v610
        %668 = vmatprep.subr.bf16.mxu0 0
        %669 = vmatpush2.bf16.msra.mxu0 0
        %670 = vmatprep.subr.bf16.mxu0 0
        %671 = vmatpush2.bf16.msra.mxu0 0
        %672 = vmatprep.subr.bf16.mxu0 0
        %673 = vmatpush2.bf16.msra.mxu0 0
        %674 = vmatprep.subr.bf16.mxu0 0
        %675 = vmatpush2.bf16.msra.mxu0 0
        %676 = vmatprep.subr.bf16.mxu0 0
        %677 = vmatpush2.bf16.msra.mxu0 0
        %678 = vmatprep.subr.bf16.mxu0 0
        %679 = vmatpush2.bf16.msra.mxu0 0
        %680 = vmatprep.subr.bf16.mxu0 0
        %681 = vmatpush2.bf16.msra.mxu0 0
        %682 = vmatprep.subr.bf16.mxu0 0
        %683 = vmatpush2.bf16.msra.mxu0 0
        %684 = vmatprep.mubr.bf16.mxu0 0
        %685 = vmatmul.mubr.bf16.gmra.mxu0 %v647
        %v686 = vpop.f32.mrf.mxu0
        %v687 = vadd.f32 %v618, %v686
        %v688 = vpop.f32.mrf.mxu0
        %v689 = vpop.f32.mrf.mxu0
        %v690 = vadd.f32 %v623, %v689
        %v691 = vpop.f32.mrf.mxu0
        %692 = vmatprep.mubr.bf16.mxu0 0
        %693 = vmatmul.mubr.bf16.gmra.mxu0 %v650
        %v694 = vpop.f32.mrf.mxu0
        %v695 = vadd.f32 %v628, %v694
        %v696 = vpop.f32.mrf.mxu0
        %v697 = vpop.f32.mrf.mxu0
        %v698 = vadd.f32 %v633, %v697
        %v699 = vpop.f32.mrf.mxu0
        %700 = vdwg.mxu0
        %vm701 = vcmp.gt.f32.partialorder %v687, 0.0
        %vm702 = vcmp.gt.f32.partialorder %v690, 0.0
        %vm703 = vcmp.gt.f32.partialorder %v695, 0.0
        %vm704 = vcmp.gt.f32.partialorder %v698, 0.0
        %v705 = vmul.f32 %v687, 0.25
        %v706 = vmul.f32 %v690, 0.25
        %v707 = vmul.f32 %v695, 0.25
        %v708 = vmul.f32 %v698, 0.25
        %v709 = vsel %vm701, %v687, %v705
        %v710 = vsel %vm702, %v690, %v706
        %v711 = vsel %vm703, %v695, %v707
        %v712 = vsel %vm704, %v698, %v708
        %vm713 = vcmp.lt.s32.totalorder %v603, 16
        %v714 = vsel %vm713, 1, 0
        %vm715 = vcmp.eq.s32.totalorder %v714, 1
        %v716 = vsel %vm715, %v709, 0.0
        %v717 = vsel %vm715, %v710, 0.0
        %v718 = vsel %vm715, %v711, 0.0
        %v719 = vsel %vm715, %v712, 0.0
        %720 = vrot.lane.b32.xlu0 %v716, 2
        %v721 = vpop.permute.xlu0 %720
        %722 = vrot.lane.b32.xlu0 %v717, 2
        %v723 = vpop.permute.xlu0 %722
        %724 = vrot.lane.b32.xlu0 %v718, 2
        %v725 = vpop.permute.xlu0 %724
        %726 = vrot.lane.b32.xlu0 %v719, 2
        %v727 = vpop.permute.xlu0 %726
        %728 = vrot.lane.b32.xlu0 %v716, 1
        %v729 = vpop.permute.xlu0 %728
        %730 = vrot.lane.b32.xlu0 %v717, 1
        %v731 = vpop.permute.xlu0 %730
        %732 = vrot.lane.b32.xlu0 %v718, 1
        %v733 = vpop.permute.xlu0 %732
        %734 = vrot.lane.b32.xlu0 %v719, 1
        %v735 = vpop.permute.xlu0 %734
        %736 = vrot.lane.b32.xlu0 %v716, 127
        %v737 = vpop.permute.xlu0 %736
        %738 = vrot.lane.b32.xlu0 %v717, 127
        %v739 = vpop.permute.xlu0 %738
        %740 = vrot.lane.b32.xlu0 %v718, 127
        %v741 = vpop.permute.xlu0 %740
        %742 = vrot.lane.b32.xlu0 %v719, 127
        %v743 = vpop.permute.xlu0 %742
        %744 = vrot.lane.b32.xlu0 %v716, 126
        %v745 = vpop.permute.xlu0 %744
        %746 = vrot.lane.b32.xlu0 %v717, 126
        %v747 = vpop.permute.xlu0 %746
        %748 = vrot.lane.b32.xlu0 %v718, 126
        %v749 = vpop.permute.xlu0 %748
        %750 = vrot.lane.b32.xlu0 %v719, 126
        %v751 = vpop.permute.xlu0 %750
        %v752 = vld [vmem:[%s4] sm:$0xff]
        %v753 = vld [vmem:[%s4 + $0x8] sm:$0xff]
        %v754 = vld [vmem:[%s4 + $0x10] sm:$0xff]
        %v755 = vld [vmem:[%s4 + $0x18] sm:$0xff]
        %v756 = vld [vmem:[%s3] sm:$0xff]
        %v757 = vld [vmem:[%s3 + $0x8] sm:$0xff]
        %v758 = vld [vmem:[%s3 + $0x10] sm:$0xff]
        %v759 = vld [vmem:[%s3 + $0x18] sm:$0xff]
        %761 = vset.pattern.permute.xlu0 0
        %762 = vperm.xlu0 %761, %v756
        %v763 = vpop.permute.xlu0 %762
        %766 = vset.pattern.permute.xlu0 0
        %767 = vperm.xlu0 %766, %v757
        %v768 = vpop.permute.xlu0 %767
        %771 = vset.pattern.permute.xlu0 0
        %772 = vperm.xlu0 %771, %v758
        %v773 = vpop.permute.xlu0 %772
        %776 = vset.pattern.permute.xlu0 0
        %777 = vperm.xlu0 %776, %v759
        %v778 = vpop.permute.xlu0 %777
        %v780 = vmul.f32 %v763, %v721
        %v781 = vmul.f32 %v768, %v723
        %v782 = vmul.f32 %v773, %v725
        %v783 = vmul.f32 %v778, %v727
        %785 = vset.pattern.permute.xlu0 0
        %786 = vperm.xlu0 %785, %v752
        %v787 = vpop.permute.xlu0 %786
        %790 = vset.pattern.permute.xlu0 0
        %791 = vperm.xlu0 %790, %v753
        %v792 = vpop.permute.xlu0 %791
        %795 = vset.pattern.permute.xlu0 0
        %796 = vperm.xlu0 %795, %v754
        %v797 = vpop.permute.xlu0 %796
        %800 = vset.pattern.permute.xlu0 0
        %801 = vperm.xlu0 %800, %v755
        %v802 = vpop.permute.xlu0 %801
        %v804 = vadd.f32 %v787, %v780
        %v805 = vadd.f32 %v792, %v781
        %v806 = vadd.f32 %v797, %v782
        %v807 = vadd.f32 %v802, %v783
        %s808 = scalar_lea.vmem %s3, 32
        %v809 = vld [vmem:[%s808] sm:$0xff]
        %v810 = vld [vmem:[%s808 + $0x8] sm:$0xff]
        %v811 = vld [vmem:[%s808 + $0x10] sm:$0xff]
        %v812 = vld [vmem:[%s808 + $0x18] sm:$0xff]
        %814 = vset.pattern.permute.xlu0 0
        %815 = vperm.xlu0 %814, %v809
        %v816 = vpop.permute.xlu0 %815
        %819 = vset.pattern.permute.xlu0 0
        %820 = vperm.xlu0 %819, %v810
        %v821 = vpop.permute.xlu0 %820
        %824 = vset.pattern.permute.xlu0 0
        %825 = vperm.xlu0 %824, %v811
        %v826 = vpop.permute.xlu0 %825
        %829 = vset.pattern.permute.xlu0 0
        %830 = vperm.xlu0 %829, %v812
        %v831 = vpop.permute.xlu0 %830
        %v833 = vmul.f32 %v816, %v729
        %v834 = vmul.f32 %v821, %v731
        %v835 = vmul.f32 %v826, %v733
        %v836 = vmul.f32 %v831, %v735
        %v837 = vadd.f32 %v804, %v833
        %v838 = vadd.f32 %v805, %v834
        %v839 = vadd.f32 %v806, %v835
        %v840 = vadd.f32 %v807, %v836
        %s841 = scalar_lea.vmem %s3, 64
        %v842 = vld [vmem:[%s841] sm:$0xff]
        %v843 = vld [vmem:[%s841 + $0x8] sm:$0xff]
        %v844 = vld [vmem:[%s841 + $0x10] sm:$0xff]
        %v845 = vld [vmem:[%s841 + $0x18] sm:$0xff]
        %847 = vset.pattern.permute.xlu0 0
        %848 = vperm.xlu0 %847, %v842
        %v849 = vpop.permute.xlu0 %848
        %852 = vset.pattern.permute.xlu0 0
        %853 = vperm.xlu0 %852, %v843
        %v854 = vpop.permute.xlu0 %853
        %857 = vset.pattern.permute.xlu0 0
        %858 = vperm.xlu0 %857, %v844
        %v859 = vpop.permute.xlu0 %858
        %862 = vset.pattern.permute.xlu0 0
        %863 = vperm.xlu0 %862, %v845
        %v864 = vpop.permute.xlu0 %863
        %v866 = vmul.f32 %v849, %v716
        %v867 = vmul.f32 %v854, %v717
        %v868 = vmul.f32 %v859, %v718
        %v869 = vmul.f32 %v864, %v719
        %v870 = vadd.f32 %v837, %v866
        %v871 = vadd.f32 %v838, %v867
        %v872 = vadd.f32 %v839, %v868
        %v873 = vadd.f32 %v840, %v869
        %s874 = scalar_lea.vmem %s3, 96
        %v875 = vld [vmem:[%s874] sm:$0xff]
        %v876 = vld [vmem:[%s874 + $0x8] sm:$0xff]
        %v877 = vld [vmem:[%s874 + $0x10] sm:$0xff]
        %v878 = vld [vmem:[%s874 + $0x18] sm:$0xff]
        %880 = vset.pattern.permute.xlu0 0
        %881 = vperm.xlu0 %880, %v875
        %v882 = vpop.permute.xlu0 %881
        %885 = vset.pattern.permute.xlu0 0
        %886 = vperm.xlu0 %885, %v876
        %v887 = vpop.permute.xlu0 %886
        %890 = vset.pattern.permute.xlu0 0
        %891 = vperm.xlu0 %890, %v877
        %v892 = vpop.permute.xlu0 %891
        %895 = vset.pattern.permute.xlu0 0
        %896 = vperm.xlu0 %895, %v878
        %v897 = vpop.permute.xlu0 %896
        %v899 = vmul.f32 %v882, %v737
        %v900 = vmul.f32 %v887, %v739
        %v901 = vmul.f32 %v892, %v741
        %v902 = vmul.f32 %v897, %v743
        %v903 = vadd.f32 %v870, %v899
        %v904 = vadd.f32 %v871, %v900
        %v905 = vadd.f32 %v872, %v901
        %v906 = vadd.f32 %v873, %v902
        %s907 = scalar_lea.vmem %s3, 128
        %v908 = vld [vmem:[%s907] sm:$0xff]
        %v909 = vld [vmem:[%s907 + $0x8] sm:$0xff]
        %v910 = vld [vmem:[%s907 + $0x10] sm:$0xff]
        %v911 = vld [vmem:[%s907 + $0x18] sm:$0xff]
        %913 = vset.pattern.permute.xlu0 0
        %914 = vperm.xlu0 %913, %v908
        %v915 = vpop.permute.xlu0 %914
        %918 = vset.pattern.permute.xlu0 0
        %919 = vperm.xlu0 %918, %v909
        %v920 = vpop.permute.xlu0 %919
        %923 = vset.pattern.permute.xlu0 0
        %924 = vperm.xlu0 %923, %v910
        %v925 = vpop.permute.xlu0 %924
        %928 = vset.pattern.permute.xlu0 0
        %929 = vperm.xlu0 %928, %v911
        %v930 = vpop.permute.xlu0 %929
        %v932 = vmul.f32 %v915, %v745
        %v933 = vmul.f32 %v920, %v747
        %v934 = vmul.f32 %v925, %v749
        %v935 = vmul.f32 %v930, %v751
        %v936 = vadd.f32 %v903, %v932
        %v937 = vadd.f32 %v904, %v933
        %v938 = vadd.f32 %v905, %v934
        %v939 = vadd.f32 %v906, %v935
        %v940 = vsel %vm715, %v936, 0.0
        %v941 = vsel %vm715, %v937, 0.0
        %v942 = vsel %vm715, %v938, 0.0
        %v943 = vsel %vm715, %v939, 0.0
        %944 = vrot.lane.b32.xlu0 %v940, 2
        %v945 = vpop.permute.xlu0 %944
        %946 = vrot.lane.b32.xlu0 %v941, 2
        %v947 = vpop.permute.xlu0 %946
        %948 = vrot.lane.b32.xlu0 %v942, 2
        %v949 = vpop.permute.xlu0 %948
        %950 = vrot.lane.b32.xlu0 %v943, 2
        %v951 = vpop.permute.xlu0 %950
        %952 = vrot.lane.b32.xlu0 %v940, 1
        %v953 = vpop.permute.xlu0 %952
        %954 = vrot.lane.b32.xlu0 %v941, 1
        %v955 = vpop.permute.xlu0 %954
        %956 = vrot.lane.b32.xlu0 %v942, 1
        %v957 = vpop.permute.xlu0 %956
        %958 = vrot.lane.b32.xlu0 %v943, 1
        %v959 = vpop.permute.xlu0 %958
        %960 = vrot.lane.b32.xlu0 %v940, 127
        %v961 = vpop.permute.xlu0 %960
        %962 = vrot.lane.b32.xlu0 %v941, 127
        %v963 = vpop.permute.xlu0 %962
        %964 = vrot.lane.b32.xlu0 %v942, 127
        %v965 = vpop.permute.xlu0 %964
        %966 = vrot.lane.b32.xlu0 %v943, 127
        %v967 = vpop.permute.xlu0 %966
        %968 = vrot.lane.b32.xlu0 %v940, 126
        %v969 = vpop.permute.xlu0 %968
        %970 = vrot.lane.b32.xlu0 %v941, 126
        %v971 = vpop.permute.xlu0 %970
        %972 = vrot.lane.b32.xlu0 %v942, 126
        %v973 = vpop.permute.xlu0 %972
        %974 = vrot.lane.b32.xlu0 %v943, 126
        %v975 = vpop.permute.xlu0 %974
        %s976 = scalar_lea.vmem %s4, 32
        %v977 = vld [vmem:[%s976] sm:$0xff]
        %v978 = vld [vmem:[%s976 + $0x8] sm:$0xff]
        %v979 = vld [vmem:[%s976 + $0x10] sm:$0xff]
        %v980 = vld [vmem:[%s976 + $0x18] sm:$0xff]
        %s981 = scalar_lea.vmem %s3, 160
        %v982 = vld [vmem:[%s981] sm:$0xff]
        %v983 = vld [vmem:[%s981 + $0x8] sm:$0xff]
        %v984 = vld [vmem:[%s981 + $0x10] sm:$0xff]
        %v985 = vld [vmem:[%s981 + $0x18] sm:$0xff]
        %987 = vset.pattern.permute.xlu0 0
        %988 = vperm.xlu0 %987, %v982
        %v989 = vpop.permute.xlu0 %988
        %992 = vset.pattern.permute.xlu0 0
        %993 = vperm.xlu0 %992, %v983
        %v994 = vpop.permute.xlu0 %993
        %997 = vset.pattern.permute.xlu0 0
        %998 = vperm.xlu0 %997, %v984
        %v999 = vpop.permute.xlu0 %998
        %1002 = vset.pattern.permute.xlu0 0
        %1003 = vperm.xlu0 %1002, %v985
        %v1004 = vpop.permute.xlu0 %1003
        %v1006 = vmul.f32 %v989, %v945
        %v1007 = vmul.f32 %v994, %v947
        %v1008 = vmul.f32 %v999, %v949
        %v1009 = vmul.f32 %v1004, %v951
        %1011 = vset.pattern.permute.xlu0 0
        %1012 = vperm.xlu0 %1011, %v977
        %v1013 = vpop.permute.xlu0 %1012
        %1016 = vset.pattern.permute.xlu0 0
        %1017 = vperm.xlu0 %1016, %v978
        %v1018 = vpop.permute.xlu0 %1017
        %1021 = vset.pattern.permute.xlu0 0
        %1022 = vperm.xlu0 %1021, %v979
        %v1023 = vpop.permute.xlu0 %1022
        %1026 = vset.pattern.permute.xlu0 0
        %1027 = vperm.xlu0 %1026, %v980
        %v1028 = vpop.permute.xlu0 %1027
        %v1030 = vadd.f32 %v1013, %v1006
        %v1031 = vadd.f32 %v1018, %v1007
        %v1032 = vadd.f32 %v1023, %v1008
        %v1033 = vadd.f32 %v1028, %v1009
        %s1034 = scalar_lea.vmem %s3, 192
        %v1035 = vld [vmem:[%s1034] sm:$0xff]
        %v1036 = vld [vmem:[%s1034 + $0x8] sm:$0xff]
        %v1037 = vld [vmem:[%s1034 + $0x10] sm:$0xff]
        %v1038 = vld [vmem:[%s1034 + $0x18] sm:$0xff]
        %1040 = vset.pattern.permute.xlu0 0
        %1041 = vperm.xlu0 %1040, %v1035
        %v1042 = vpop.permute.xlu0 %1041
        %1045 = vset.pattern.permute.xlu0 0
        %1046 = vperm.xlu0 %1045, %v1036
        %v1047 = vpop.permute.xlu0 %1046
        %1050 = vset.pattern.permute.xlu0 0
        %1051 = vperm.xlu0 %1050, %v1037
        %v1052 = vpop.permute.xlu0 %1051
        %1055 = vset.pattern.permute.xlu0 0
        %1056 = vperm.xlu0 %1055, %v1038
        %v1057 = vpop.permute.xlu0 %1056
        %v1059 = vmul.f32 %v1042, %v953
        %v1060 = vmul.f32 %v1047, %v955
        %v1061 = vmul.f32 %v1052, %v957
        %v1062 = vmul.f32 %v1057, %v959
        %v1063 = vadd.f32 %v1030, %v1059
        %v1064 = vadd.f32 %v1031, %v1060
        %v1065 = vadd.f32 %v1032, %v1061
        %v1066 = vadd.f32 %v1033, %v1062
        %s1067 = scalar_lea.vmem %s3, 224
        %v1068 = vld [vmem:[%s1067] sm:$0xff]
        %v1069 = vld [vmem:[%s1067 + $0x8] sm:$0xff]
        %v1070 = vld [vmem:[%s1067 + $0x10] sm:$0xff]
        %v1071 = vld [vmem:[%s1067 + $0x18] sm:$0xff]
        %1073 = vset.pattern.permute.xlu0 0
        %1074 = vperm.xlu0 %1073, %v1068
        %v1075 = vpop.permute.xlu0 %1074
        %1078 = vset.pattern.permute.xlu0 0
        %1079 = vperm.xlu0 %1078, %v1069
        %v1080 = vpop.permute.xlu0 %1079
        %1083 = vset.pattern.permute.xlu0 0
        %1084 = vperm.xlu0 %1083, %v1070
        %v1085 = vpop.permute.xlu0 %1084
        %1088 = vset.pattern.permute.xlu0 0
        %1089 = vperm.xlu0 %1088, %v1071
        %v1090 = vpop.permute.xlu0 %1089
        %v1092 = vmul.f32 %v1075, %v940
        %v1093 = vmul.f32 %v1080, %v941
        %v1094 = vmul.f32 %v1085, %v942
        %v1095 = vmul.f32 %v1090, %v943
        %v1096 = vadd.f32 %v1063, %v1092
        %v1097 = vadd.f32 %v1064, %v1093
        %v1098 = vadd.f32 %v1065, %v1094
        %v1099 = vadd.f32 %v1066, %v1095
        %s1100 = scalar_lea.vmem %s3, 256
        %v1101 = vld [vmem:[%s1100] sm:$0xff]
        %v1102 = vld [vmem:[%s1100 + $0x8] sm:$0xff]
        %v1103 = vld [vmem:[%s1100 + $0x10] sm:$0xff]
        %v1104 = vld [vmem:[%s1100 + $0x18] sm:$0xff]
        %1106 = vset.pattern.permute.xlu0 0
        %1107 = vperm.xlu0 %1106, %v1101
        %v1108 = vpop.permute.xlu0 %1107
        %1111 = vset.pattern.permute.xlu0 0
        %1112 = vperm.xlu0 %1111, %v1102
        %v1113 = vpop.permute.xlu0 %1112
        %1116 = vset.pattern.permute.xlu0 0
        %1117 = vperm.xlu0 %1116, %v1103
        %v1118 = vpop.permute.xlu0 %1117
        %1121 = vset.pattern.permute.xlu0 0
        %1122 = vperm.xlu0 %1121, %v1104
        %v1123 = vpop.permute.xlu0 %1122
        %v1125 = vmul.f32 %v1108, %v961
        %v1126 = vmul.f32 %v1113, %v963
        %v1127 = vmul.f32 %v1118, %v965
        %v1128 = vmul.f32 %v1123, %v967
        %v1129 = vadd.f32 %v1096, %v1125
        %v1130 = vadd.f32 %v1097, %v1126
        %v1131 = vadd.f32 %v1098, %v1127
        %v1132 = vadd.f32 %v1099, %v1128
        %s1133 = scalar_lea.vmem %s3, 288
        %v1134 = vld [vmem:[%s1133] sm:$0xff]
        %v1135 = vld [vmem:[%s1133 + $0x8] sm:$0xff]
        %v1136 = vld [vmem:[%s1133 + $0x10] sm:$0xff]
        %v1137 = vld [vmem:[%s1133 + $0x18] sm:$0xff]
        %1139 = vset.pattern.permute.xlu0 0
        %1140 = vperm.xlu0 %1139, %v1134
        %v1141 = vpop.permute.xlu0 %1140
        %1144 = vset.pattern.permute.xlu0 0
        %1145 = vperm.xlu0 %1144, %v1135
        %v1146 = vpop.permute.xlu0 %1145
        %1149 = vset.pattern.permute.xlu0 0
        %1150 = vperm.xlu0 %1149, %v1136
        %v1151 = vpop.permute.xlu0 %1150
        %1154 = vset.pattern.permute.xlu0 0
        %1155 = vperm.xlu0 %1154, %v1137
        %v1156 = vpop.permute.xlu0 %1155
        %v1158 = vmul.f32 %v1141, %v969
        %v1159 = vmul.f32 %v1146, %v971
        %v1160 = vmul.f32 %v1151, %v973
        %v1161 = vmul.f32 %v1156, %v975
        %v1162 = vadd.f32 %v1129, %v1158
        %v1163 = vadd.f32 %v1130, %v1159
        %v1164 = vadd.f32 %v1131, %v1160
        %v1165 = vadd.f32 %v1132, %v1161
        %v1166 = vld [vmem:[%s6] sm:$0xff]
        %v1167 = vld [vmem:[%s6 + $0x8] sm:$0xff]
        %v1168 = vld [vmem:[%s6 + $0x10] sm:$0xff]
        %v1169 = vld [vmem:[%s6 + $0x18] sm:$0xff]
        %v1170 = vld [vmem:[%s5] sm:$0xff]
        %v1171 = vld [vmem:[%s5 + $0x8] sm:$0xff]
        %v1172 = vld [vmem:[%s5 + $0x10] sm:$0xff]
        %v1173 = vld [vmem:[%s5 + $0x18] sm:$0xff]
        %1175 = vset.pattern.permute.xlu0 0
        %1176 = vperm.xlu0 %1175, %v1170
        %v1177 = vpop.permute.xlu0 %1176
        %1180 = vset.pattern.permute.xlu0 0
        %1181 = vperm.xlu0 %1180, %v1171
        %v1182 = vpop.permute.xlu0 %1181
        %1185 = vset.pattern.permute.xlu0 0
        %1186 = vperm.xlu0 %1185, %v1172
        %v1187 = vpop.permute.xlu0 %1186
        %1190 = vset.pattern.permute.xlu0 0
        %1191 = vperm.xlu0 %1190, %v1173
        %v1192 = vpop.permute.xlu0 %1191
        %v1194 = vmul.f32 %v1177, %v945
        %v1195 = vmul.f32 %v1182, %v947
        %v1196 = vmul.f32 %v1187, %v949
        %v1197 = vmul.f32 %v1192, %v951
        %1199 = vset.pattern.permute.xlu0 0
        %1200 = vperm.xlu0 %1199, %v1166
        %v1201 = vpop.permute.xlu0 %1200
        %1204 = vset.pattern.permute.xlu0 0
        %1205 = vperm.xlu0 %1204, %v1167
        %v1206 = vpop.permute.xlu0 %1205
        %1209 = vset.pattern.permute.xlu0 0
        %1210 = vperm.xlu0 %1209, %v1168
        %v1211 = vpop.permute.xlu0 %1210
        %1214 = vset.pattern.permute.xlu0 0
        %1215 = vperm.xlu0 %1214, %v1169
        %v1216 = vpop.permute.xlu0 %1215
        %v1218 = vadd.f32 %v1201, %v1194
        %v1219 = vadd.f32 %v1206, %v1195
        %v1220 = vadd.f32 %v1211, %v1196
        %v1221 = vadd.f32 %v1216, %v1197
        %s1222 = scalar_lea.vmem %s5, 32
        %v1223 = vld [vmem:[%s1222] sm:$0xff]
        %v1224 = vld [vmem:[%s1222 + $0x8] sm:$0xff]
        %v1225 = vld [vmem:[%s1222 + $0x10] sm:$0xff]
        %v1226 = vld [vmem:[%s1222 + $0x18] sm:$0xff]
        %1228 = vset.pattern.permute.xlu0 0
        %1229 = vperm.xlu0 %1228, %v1223
        %v1230 = vpop.permute.xlu0 %1229
        %1233 = vset.pattern.permute.xlu0 0
        %1234 = vperm.xlu0 %1233, %v1224
        %v1235 = vpop.permute.xlu0 %1234
        %1238 = vset.pattern.permute.xlu0 0
        %1239 = vperm.xlu0 %1238, %v1225
        %v1240 = vpop.permute.xlu0 %1239
        %1243 = vset.pattern.permute.xlu0 0
        %1244 = vperm.xlu0 %1243, %v1226
        %v1245 = vpop.permute.xlu0 %1244
        %v1247 = vmul.f32 %v1230, %v953
        %v1248 = vmul.f32 %v1235, %v955
        %v1249 = vmul.f32 %v1240, %v957
        %v1250 = vmul.f32 %v1245, %v959
        %v1251 = vadd.f32 %v1218, %v1247
        %v1252 = vadd.f32 %v1219, %v1248
        %v1253 = vadd.f32 %v1220, %v1249
        %v1254 = vadd.f32 %v1221, %v1250
        %s1255 = scalar_lea.vmem %s5, 64
        %v1256 = vld [vmem:[%s1255] sm:$0xff]
        %v1257 = vld [vmem:[%s1255 + $0x8] sm:$0xff]
        %v1258 = vld [vmem:[%s1255 + $0x10] sm:$0xff]
        %v1259 = vld [vmem:[%s1255 + $0x18] sm:$0xff]
        %1261 = vset.pattern.permute.xlu0 0
        %1262 = vperm.xlu0 %1261, %v1256
        %v1263 = vpop.permute.xlu0 %1262
        %1266 = vset.pattern.permute.xlu0 0
        %1267 = vperm.xlu0 %1266, %v1257
        %v1268 = vpop.permute.xlu0 %1267
        %1271 = vset.pattern.permute.xlu0 0
        %1272 = vperm.xlu0 %1271, %v1258
        %v1273 = vpop.permute.xlu0 %1272
        %1276 = vset.pattern.permute.xlu0 0
        %1277 = vperm.xlu0 %1276, %v1259
        %v1278 = vpop.permute.xlu0 %1277
        %v1280 = vmul.f32 %v1263, %v940
        %v1281 = vmul.f32 %v1268, %v941
        %v1282 = vmul.f32 %v1273, %v942
        %v1283 = vmul.f32 %v1278, %v943
        %v1284 = vadd.f32 %v1251, %v1280
        %v1285 = vadd.f32 %v1252, %v1281
        %v1286 = vadd.f32 %v1253, %v1282
        %v1287 = vadd.f32 %v1254, %v1283
        %s1288 = scalar_lea.vmem %s5, 96
        %v1289 = vld [vmem:[%s1288] sm:$0xff]
        %v1290 = vld [vmem:[%s1288 + $0x8] sm:$0xff]
        %v1291 = vld [vmem:[%s1288 + $0x10] sm:$0xff]
        %v1292 = vld [vmem:[%s1288 + $0x18] sm:$0xff]
        %1294 = vset.pattern.permute.xlu0 0
        %1295 = vperm.xlu0 %1294, %v1289
        %v1296 = vpop.permute.xlu0 %1295
        %1299 = vset.pattern.permute.xlu0 0
        %1300 = vperm.xlu0 %1299, %v1290
        %v1301 = vpop.permute.xlu0 %1300
        %1304 = vset.pattern.permute.xlu0 0
        %1305 = vperm.xlu0 %1304, %v1291
        %v1306 = vpop.permute.xlu0 %1305
        %1309 = vset.pattern.permute.xlu0 0
        %1310 = vperm.xlu0 %1309, %v1292
        %v1311 = vpop.permute.xlu0 %1310
        %v1313 = vmul.f32 %v1296, %v961
        %v1314 = vmul.f32 %v1301, %v963
        %v1315 = vmul.f32 %v1306, %v965
        %v1316 = vmul.f32 %v1311, %v967
        %v1317 = vadd.f32 %v1284, %v1313
        %v1318 = vadd.f32 %v1285, %v1314
        %v1319 = vadd.f32 %v1286, %v1315
        %v1320 = vadd.f32 %v1287, %v1316
        %s1321 = scalar_lea.vmem %s5, 128
        %v1322 = vld [vmem:[%s1321] sm:$0xff]
        %v1323 = vld [vmem:[%s1321 + $0x8] sm:$0xff]
        %v1324 = vld [vmem:[%s1321 + $0x10] sm:$0xff]
        %v1325 = vld [vmem:[%s1321 + $0x18] sm:$0xff]
        %1327 = vset.pattern.permute.xlu0 0
        %1328 = vperm.xlu0 %1327, %v1322
        %v1329 = vpop.permute.xlu0 %1328
        %1332 = vset.pattern.permute.xlu0 0
        %1333 = vperm.xlu0 %1332, %v1323
        %v1334 = vpop.permute.xlu0 %1333
        %1337 = vset.pattern.permute.xlu0 0
        %1338 = vperm.xlu0 %1337, %v1324
        %v1339 = vpop.permute.xlu0 %1338
        %1342 = vset.pattern.permute.xlu0 0
        %1343 = vperm.xlu0 %1342, %v1325
        %v1344 = vpop.permute.xlu0 %1343
        %v1346 = vmul.f32 %v1329, %v969
        %v1347 = vmul.f32 %v1334, %v971
        %v1348 = vmul.f32 %v1339, %v973
        %v1349 = vmul.f32 %v1344, %v975
        %v1350 = vadd.f32 %v1317, %v1346
        %v1351 = vadd.f32 %v1318, %v1347
        %v1352 = vadd.f32 %v1319, %v1348
        %v1353 = vadd.f32 %v1320, %v1349
        %v1354 = vld [vmem:[%s16] sm:$0xf]
        %v1355 = vld [vmem:[%s16 + $0x4] sm:$0xf]
        %v1356 = vld [vmem:[%s16 + $0x8] sm:$0xf]
        %v1357 = vld [vmem:[%s16 + $0xc] sm:$0xf]
        %v1358 = vld [vmem:[%s16 + $0x10] sm:$0xf]
        %v1359 = vld [vmem:[%s16 + $0x14] sm:$0xf]
        %v1360 = vld [vmem:[%s16 + $0x18] sm:$0xf]
        %v1361 = vld [vmem:[%s16 + $0x1c] sm:$0xf]
        %v1362 = vld [vmem:[%s16 + $0x20] sm:$0xf]
        %v1363 = vld [vmem:[%s16 + $0x24] sm:$0xf]
        %v1364 = vld [vmem:[%s16 + $0x28] sm:$0xf]
        %v1365 = vld [vmem:[%s16 + $0x2c] sm:$0xf]
        %v1366 = vld [vmem:[%s16 + $0x30] sm:$0xf]
        %v1367 = vld [vmem:[%s16 + $0x34] sm:$0xf]
        %v1368 = vld [vmem:[%s16 + $0x38] sm:$0xf]
        %v1369 = vld [vmem:[%s16 + $0x3c] sm:$0xf]
        %v1370 = vpack.c.bf16 %v1163, %v1162
        %v1371 = vpack.c.bf16 %v1165, %v1164
        %v1372 = vpack.c.bf16 %v1351, %v1350
        %v1373 = vpack.c.bf16 %v1353, %v1352
        %v1390 = vunpack.c.l.b16 %v1354
        %v1391 = vunpack.c.l.b16 %v1355
        %v1392 = vunpack.c.l.b16 %v1356
        %v1393 = vunpack.c.l.b16 %v1357
        %v1394 = vunpack.c.l.b16 %v1358
        %v1395 = vunpack.c.l.b16 %v1359
        %v1396 = vunpack.c.l.b16 %v1360
        %v1397 = vunpack.c.l.b16 %v1361
        %v1398 = vunpack.c.l.b16 %v1362
        %v1399 = vunpack.c.l.b16 %v1363
        %v1400 = vunpack.c.l.b16 %v1364
        %v1401 = vunpack.c.l.b16 %v1365
        %v1402 = vunpack.c.l.b16 %v1366
        %v1403 = vunpack.c.l.b16 %v1367
        %v1404 = vunpack.c.l.b16 %v1368
        %v1405 = vunpack.c.l.b16 %v1369
        %v1406 = vpack.c.b16 %v1391, %v1390
        %v1407 = vpack.c.b16 %v1393, %v1392
        %v1408 = vpack.c.b16 %v1395, %v1394
        %v1409 = vpack.c.b16 %v1397, %v1396
        %v1410 = vpack.c.b16 %v1399, %v1398
        %v1411 = vpack.c.b16 %v1401, %v1400
        %v1412 = vpack.c.b16 %v1403, %v1402
        %v1413 = vpack.c.b16 %v1405, %v1404
        %1422 = vmatprep.subr.bf16.mxu0 0
        %1423 = vmatpush1.bf16.msra.mxu0 %v1413
        %1424 = vmatprep.subr.bf16.mxu0 0
        %1425 = vmatpush1.bf16.msra.mxu0 %v1412
        %1426 = vmatprep.subr.bf16.mxu0 0
        %1427 = vmatpush1.bf16.msra.mxu0 %v1411
        %1428 = vmatprep.subr.bf16.mxu0 0
        %1429 = vmatpush1.bf16.msra.mxu0 %v1410
        %1430 = vmatprep.subr.bf16.mxu0 0
        %1431 = vmatpush1.bf16.msra.mxu0 %v1409
        %1432 = vmatprep.subr.bf16.mxu0 0
        %1433 = vmatpush1.bf16.msra.mxu0 %v1408
        %1434 = vmatprep.subr.bf16.mxu0 0
        %1435 = vmatpush1.bf16.msra.mxu0 %v1407
        %1436 = vmatprep.subr.bf16.mxu0 0
        %1437 = vmatpush1.bf16.msra.mxu0 %v1406
        %1438 = vmatprep.subr.bf16.mxu0 0
        %1439 = vmatpush2.bf16.msra.mxu0 0
        %1440 = vmatprep.subr.bf16.mxu0 0
        %1441 = vmatpush2.bf16.msra.mxu0 0
        %1442 = vmatprep.subr.bf16.mxu0 0
        %1443 = vmatpush2.bf16.msra.mxu0 0
        %1444 = vmatprep.subr.bf16.mxu0 0
        %1445 = vmatpush2.bf16.msra.mxu0 0
        %1446 = vmatprep.subr.bf16.mxu0 0
        %1447 = vmatpush2.bf16.msra.mxu0 0
        %1448 = vmatprep.subr.bf16.mxu0 0
        %1449 = vmatpush2.bf16.msra.mxu0 0
        %1450 = vmatprep.subr.bf16.mxu0 0
        %1451 = vmatpush2.bf16.msra.mxu0 0
        %1452 = vmatprep.subr.bf16.mxu0 0
        %1453 = vmatpush2.bf16.msra.mxu0 0
        %1454 = vmatprep.mubr.bf16.mxu0 0
        %1455 = vmatmul.mubr.bf16.gmra.mxu0 %v1370
        %v1456 = vpop.f32.mrf.mxu0
        %v1457 = vadd.f32 0.0, %v1456
        %v1458 = vpop.f32.mrf.mxu0
        %v1459 = vpop.f32.mrf.mxu0
        %v1460 = vadd.f32 0.0, %v1459
        %v1461 = vpop.f32.mrf.mxu0
        %1462 = vmatprep.mubr.bf16.mxu0 0
        %1463 = vmatmul.mubr.bf16.gmra.mxu0 %v1371
        %v1464 = vpop.f32.mrf.mxu0
        %v1465 = vadd.f32 0.0, %v1464
        %v1466 = vpop.f32.mrf.mxu0
        %v1467 = vpop.f32.mrf.mxu0
        %v1468 = vadd.f32 0.0, %v1467
        %v1469 = vpop.f32.mrf.mxu0
        %1470 = vmatprep.mubr.bf16.mxu0 0
        %1471 = vmatmul.mubr.bf16.gmra.mxu0 %v1372
        %v1472 = vpop.f32.mrf.mxu0
        %v1473 = vadd.f32 0.0, %v1472
        %v1474 = vpop.f32.mrf.mxu0
        %v1475 = vpop.f32.mrf.mxu0
        %v1476 = vadd.f32 0.0, %v1475
        %v1477 = vpop.f32.mrf.mxu0
        %1478 = vmatprep.mubr.bf16.mxu0 0
        %1479 = vmatmul.mubr.bf16.gmra.mxu0 %v1373
        %v1480 = vpop.f32.mrf.mxu0
        %v1481 = vadd.f32 0.0, %v1480
        %v1482 = vpop.f32.mrf.mxu0
        %v1483 = vpop.f32.mrf.mxu0
        %v1484 = vadd.f32 0.0, %v1483
        %v1485 = vpop.f32.mrf.mxu0
        %1486 = vdwg.mxu0
        %1487 = vrot.lane.b32.xlu0 %v1457, 2
        %v1488 = vpop.permute.xlu0 %1487
        %1489 = vrot.lane.b32.xlu0 %v1460, 2
        %v1490 = vpop.permute.xlu0 %1489
        %1491 = vrot.lane.b32.xlu0 %v1465, 2
        %v1492 = vpop.permute.xlu0 %1491
        %1493 = vrot.lane.b32.xlu0 %v1468, 2
        %v1494 = vpop.permute.xlu0 %1493
        %1495 = vrot.lane.b32.xlu0 %v1457, 1
        %v1496 = vpop.permute.xlu0 %1495
        %1497 = vrot.lane.b32.xlu0 %v1460, 1
        %v1498 = vpop.permute.xlu0 %1497
        %1499 = vrot.lane.b32.xlu0 %v1465, 1
        %v1500 = vpop.permute.xlu0 %1499
        %1501 = vrot.lane.b32.xlu0 %v1468, 1
        %v1502 = vpop.permute.xlu0 %1501
        %1503 = vrot.lane.b32.xlu0 %v1457, 127
        %v1504 = vpop.permute.xlu0 %1503
        %1505 = vrot.lane.b32.xlu0 %v1460, 127
        %v1506 = vpop.permute.xlu0 %1505
        %1507 = vrot.lane.b32.xlu0 %v1465, 127
        %v1508 = vpop.permute.xlu0 %1507
        %1509 = vrot.lane.b32.xlu0 %v1468, 127
        %v1510 = vpop.permute.xlu0 %1509
        %1511 = vrot.lane.b32.xlu0 %v1457, 126
        %v1512 = vpop.permute.xlu0 %1511
        %1513 = vrot.lane.b32.xlu0 %v1460, 126
        %v1514 = vpop.permute.xlu0 %1513
        %1515 = vrot.lane.b32.xlu0 %v1465, 126
        %v1516 = vpop.permute.xlu0 %1515
        %1517 = vrot.lane.b32.xlu0 %v1468, 126
        %v1518 = vpop.permute.xlu0 %1517
        %s1519 = scalar_lea.vmem %s4, 64
        %v1520 = vld [vmem:[%s1519] sm:$0xff]
        %v1521 = vld [vmem:[%s1519 + $0x8] sm:$0xff]
        %v1522 = vld [vmem:[%s1519 + $0x10] sm:$0xff]
        %v1523 = vld [vmem:[%s1519 + $0x18] sm:$0xff]
        %s1524 = scalar_lea.vmem %s3, 320
        %v1525 = vld [vmem:[%s1524] sm:$0xff]
        %v1526 = vld [vmem:[%s1524 + $0x8] sm:$0xff]
        %v1527 = vld [vmem:[%s1524 + $0x10] sm:$0xff]
        %v1528 = vld [vmem:[%s1524 + $0x18] sm:$0xff]
        %1530 = vset.pattern.permute.xlu0 0
        %1531 = vperm.xlu0 %1530, %v1525
        %v1532 = vpop.permute.xlu0 %1531
        %1535 = vset.pattern.permute.xlu0 0
        %1536 = vperm.xlu0 %1535, %v1526
        %v1537 = vpop.permute.xlu0 %1536
        %1540 = vset.pattern.permute.xlu0 0
        %1541 = vperm.xlu0 %1540, %v1527
        %v1542 = vpop.permute.xlu0 %1541
        %1545 = vset.pattern.permute.xlu0 0
        %1546 = vperm.xlu0 %1545, %v1528
        %v1547 = vpop.permute.xlu0 %1546
        %v1549 = vmul.f32 %v1532, %v1488
        %v1550 = vmul.f32 %v1537, %v1490
        %v1551 = vmul.f32 %v1542, %v1492
        %v1552 = vmul.f32 %v1547, %v1494
        %1554 = vset.pattern.permute.xlu0 0
        %1555 = vperm.xlu0 %1554, %v1520
        %v1556 = vpop.permute.xlu0 %1555
        %1559 = vset.pattern.permute.xlu0 0
        %1560 = vperm.xlu0 %1559, %v1521
        %v1561 = vpop.permute.xlu0 %1560
        %1564 = vset.pattern.permute.xlu0 0
        %1565 = vperm.xlu0 %1564, %v1522
        %v1566 = vpop.permute.xlu0 %1565
        %1569 = vset.pattern.permute.xlu0 0
        %1570 = vperm.xlu0 %1569, %v1523
        %v1571 = vpop.permute.xlu0 %1570
        %v1573 = vadd.f32 %v1556, %v1549
        %v1574 = vadd.f32 %v1561, %v1550
        %v1575 = vadd.f32 %v1566, %v1551
        %v1576 = vadd.f32 %v1571, %v1552
        %s1577 = scalar_lea.vmem %s3, 352
        %v1578 = vld [vmem:[%s1577] sm:$0xff]
        %v1579 = vld [vmem:[%s1577 + $0x8] sm:$0xff]
        %v1580 = vld [vmem:[%s1577 + $0x10] sm:$0xff]
        %v1581 = vld [vmem:[%s1577 + $0x18] sm:$0xff]
        %1583 = vset.pattern.permute.xlu0 0
        %1584 = vperm.xlu0 %1583, %v1578
        %v1585 = vpop.permute.xlu0 %1584
        %1588 = vset.pattern.permute.xlu0 0
        %1589 = vperm.xlu0 %1588, %v1579
        %v1590 = vpop.permute.xlu0 %1589
        %1593 = vset.pattern.permute.xlu0 0
        %1594 = vperm.xlu0 %1593, %v1580
        %v1595 = vpop.permute.xlu0 %1594
        %1598 = vset.pattern.permute.xlu0 0
        %1599 = vperm.xlu0 %1598, %v1581
        %v1600 = vpop.permute.xlu0 %1599
        %v1602 = vmul.f32 %v1585, %v1496
        %v1603 = vmul.f32 %v1590, %v1498
        %v1604 = vmul.f32 %v1595, %v1500
        %v1605 = vmul.f32 %v1600, %v1502
        %v1606 = vadd.f32 %v1573, %v1602
        %v1607 = vadd.f32 %v1574, %v1603
        %v1608 = vadd.f32 %v1575, %v1604
        %v1609 = vadd.f32 %v1576, %v1605
        %s1610 = scalar_lea.vmem %s3, 384
        %v1611 = vld [vmem:[%s1610] sm:$0xff]
        %v1612 = vld [vmem:[%s1610 + $0x8] sm:$0xff]
        %v1613 = vld [vmem:[%s1610 + $0x10] sm:$0xff]
        %v1614 = vld [vmem:[%s1610 + $0x18] sm:$0xff]
        %1616 = vset.pattern.permute.xlu0 0
        %1617 = vperm.xlu0 %1616, %v1611
        %v1618 = vpop.permute.xlu0 %1617
        %1621 = vset.pattern.permute.xlu0 0
        %1622 = vperm.xlu0 %1621, %v1612
        %v1623 = vpop.permute.xlu0 %1622
        %1626 = vset.pattern.permute.xlu0 0
        %1627 = vperm.xlu0 %1626, %v1613
        %v1628 = vpop.permute.xlu0 %1627
        %1631 = vset.pattern.permute.xlu0 0
        %1632 = vperm.xlu0 %1631, %v1614
        %v1633 = vpop.permute.xlu0 %1632
        %v1635 = vmul.f32 %v1618, %v1457
        %v1636 = vmul.f32 %v1623, %v1460
        %v1637 = vmul.f32 %v1628, %v1465
        %v1638 = vmul.f32 %v1633, %v1468
        %v1639 = vadd.f32 %v1606, %v1635
        %v1640 = vadd.f32 %v1607, %v1636
        %v1641 = vadd.f32 %v1608, %v1637
        %v1642 = vadd.f32 %v1609, %v1638
        %s1643 = scalar_lea.vmem %s3, 416
        %v1644 = vld [vmem:[%s1643] sm:$0xff]
        %v1645 = vld [vmem:[%s1643 + $0x8] sm:$0xff]
        %v1646 = vld [vmem:[%s1643 + $0x10] sm:$0xff]
        %v1647 = vld [vmem:[%s1643 + $0x18] sm:$0xff]
        %1649 = vset.pattern.permute.xlu0 0
        %1650 = vperm.xlu0 %1649, %v1644
        %v1651 = vpop.permute.xlu0 %1650
        %1654 = vset.pattern.permute.xlu0 0
        %1655 = vperm.xlu0 %1654, %v1645
        %v1656 = vpop.permute.xlu0 %1655
        %1659 = vset.pattern.permute.xlu0 0
        %1660 = vperm.xlu0 %1659, %v1646
        %v1661 = vpop.permute.xlu0 %1660
        %1664 = vset.pattern.permute.xlu0 0
        %1665 = vperm.xlu0 %1664, %v1647
        %v1666 = vpop.permute.xlu0 %1665
        %v1668 = vmul.f32 %v1651, %v1504
        %v1669 = vmul.f32 %v1656, %v1506
        %v1670 = vmul.f32 %v1661, %v1508
        %v1671 = vmul.f32 %v1666, %v1510
        %v1672 = vadd.f32 %v1639, %v1668
        %v1673 = vadd.f32 %v1640, %v1669
        %v1674 = vadd.f32 %v1641, %v1670
        %v1675 = vadd.f32 %v1642, %v1671
        %s1676 = scalar_lea.vmem %s3, 448
        %v1677 = vld [vmem:[%s1676] sm:$0xff]
        %v1678 = vld [vmem:[%s1676 + $0x8] sm:$0xff]
        %v1679 = vld [vmem:[%s1676 + $0x10] sm:$0xff]
        %v1680 = vld [vmem:[%s1676 + $0x18] sm:$0xff]
        %1682 = vset.pattern.permute.xlu0 0
        %1683 = vperm.xlu0 %1682, %v1677
        %v1684 = vpop.permute.xlu0 %1683
        %1687 = vset.pattern.permute.xlu0 0
        %1688 = vperm.xlu0 %1687, %v1678
        %v1689 = vpop.permute.xlu0 %1688
        %1692 = vset.pattern.permute.xlu0 0
        %1693 = vperm.xlu0 %1692, %v1679
        %v1694 = vpop.permute.xlu0 %1693
        %1697 = vset.pattern.permute.xlu0 0
        %1698 = vperm.xlu0 %1697, %v1680
        %v1699 = vpop.permute.xlu0 %1698
        %v1701 = vmul.f32 %v1684, %v1512
        %v1702 = vmul.f32 %v1689, %v1514
        %v1703 = vmul.f32 %v1694, %v1516
        %v1704 = vmul.f32 %v1699, %v1518
        %v1705 = vadd.f32 %v1672, %v1701
        %v1706 = vadd.f32 %v1673, %v1702
        %v1707 = vadd.f32 %v1674, %v1703
        %v1708 = vadd.f32 %v1675, %v1704
        %s1709 = scalar_lea.vmem %s6, 32
        %v1710 = vld [vmem:[%s1709] sm:$0xff]
        %v1711 = vld [vmem:[%s1709 + $0x8] sm:$0xff]
        %v1712 = vld [vmem:[%s1709 + $0x10] sm:$0xff]
        %v1713 = vld [vmem:[%s1709 + $0x18] sm:$0xff]
        %s1714 = scalar_lea.vmem %s5, 160
        %v1715 = vld [vmem:[%s1714] sm:$0xff]
        %v1716 = vld [vmem:[%s1714 + $0x8] sm:$0xff]
        %v1717 = vld [vmem:[%s1714 + $0x10] sm:$0xff]
        %v1718 = vld [vmem:[%s1714 + $0x18] sm:$0xff]
        %1720 = vset.pattern.permute.xlu0 0
        %1721 = vperm.xlu0 %1720, %v1715
        %v1722 = vpop.permute.xlu0 %1721
        %1725 = vset.pattern.permute.xlu0 0
        %1726 = vperm.xlu0 %1725, %v1716
        %v1727 = vpop.permute.xlu0 %1726
        %1730 = vset.pattern.permute.xlu0 0
        %1731 = vperm.xlu0 %1730, %v1717
        %v1732 = vpop.permute.xlu0 %1731
        %1735 = vset.pattern.permute.xlu0 0
        %1736 = vperm.xlu0 %1735, %v1718
        %v1737 = vpop.permute.xlu0 %1736
        %v1739 = vmul.f32 %v1722, %v1488
        %v1740 = vmul.f32 %v1727, %v1490
        %v1741 = vmul.f32 %v1732, %v1492
        %v1742 = vmul.f32 %v1737, %v1494
        %1744 = vset.pattern.permute.xlu0 0
        %1745 = vperm.xlu0 %1744, %v1710
        %v1746 = vpop.permute.xlu0 %1745
        %1749 = vset.pattern.permute.xlu0 0
        %1750 = vperm.xlu0 %1749, %v1711
        %v1751 = vpop.permute.xlu0 %1750
        %1754 = vset.pattern.permute.xlu0 0
        %1755 = vperm.xlu0 %1754, %v1712
        %v1756 = vpop.permute.xlu0 %1755
        %1759 = vset.pattern.permute.xlu0 0
        %1760 = vperm.xlu0 %1759, %v1713
        %v1761 = vpop.permute.xlu0 %1760
        %v1763 = vadd.f32 %v1746, %v1739
        %v1764 = vadd.f32 %v1751, %v1740
        %v1765 = vadd.f32 %v1756, %v1741
        %v1766 = vadd.f32 %v1761, %v1742
        %s1767 = scalar_lea.vmem %s5, 192
        %v1768 = vld [vmem:[%s1767] sm:$0xff]
        %v1769 = vld [vmem:[%s1767 + $0x8] sm:$0xff]
        %v1770 = vld [vmem:[%s1767 + $0x10] sm:$0xff]
        %v1771 = vld [vmem:[%s1767 + $0x18] sm:$0xff]
        %1773 = vset.pattern.permute.xlu0 0
        %1774 = vperm.xlu0 %1773, %v1768
        %v1775 = vpop.permute.xlu0 %1774
        %1778 = vset.pattern.permute.xlu0 0
        %1779 = vperm.xlu0 %1778, %v1769
        %v1780 = vpop.permute.xlu0 %1779
        %1783 = vset.pattern.permute.xlu0 0
        %1784 = vperm.xlu0 %1783, %v1770
        %v1785 = vpop.permute.xlu0 %1784
        %1788 = vset.pattern.permute.xlu0 0
        %1789 = vperm.xlu0 %1788, %v1771
        %v1790 = vpop.permute.xlu0 %1789
        %v1792 = vmul.f32 %v1775, %v1496
        %v1793 = vmul.f32 %v1780, %v1498
        %v1794 = vmul.f32 %v1785, %v1500
        %v1795 = vmul.f32 %v1790, %v1502
        %v1796 = vadd.f32 %v1763, %v1792
        %v1797 = vadd.f32 %v1764, %v1793
        %v1798 = vadd.f32 %v1765, %v1794
        %v1799 = vadd.f32 %v1766, %v1795
        %s1800 = scalar_lea.vmem %s5, 224
        %v1801 = vld [vmem:[%s1800] sm:$0xff]
        %v1802 = vld [vmem:[%s1800 + $0x8] sm:$0xff]
        %v1803 = vld [vmem:[%s1800 + $0x10] sm:$0xff]
        %v1804 = vld [vmem:[%s1800 + $0x18] sm:$0xff]
        %1806 = vset.pattern.permute.xlu0 0
        %1807 = vperm.xlu0 %1806, %v1801
        %v1808 = vpop.permute.xlu0 %1807
        %1811 = vset.pattern.permute.xlu0 0
        %1812 = vperm.xlu0 %1811, %v1802
        %v1813 = vpop.permute.xlu0 %1812
        %1816 = vset.pattern.permute.xlu0 0
        %1817 = vperm.xlu0 %1816, %v1803
        %v1818 = vpop.permute.xlu0 %1817
        %1821 = vset.pattern.permute.xlu0 0
        %1822 = vperm.xlu0 %1821, %v1804
        %v1823 = vpop.permute.xlu0 %1822
        %v1825 = vmul.f32 %v1808, %v1457
        %v1826 = vmul.f32 %v1813, %v1460
        %v1827 = vmul.f32 %v1818, %v1465
        %v1828 = vmul.f32 %v1823, %v1468
        %v1829 = vadd.f32 %v1796, %v1825
        %v1830 = vadd.f32 %v1797, %v1826
        %v1831 = vadd.f32 %v1798, %v1827
        %v1832 = vadd.f32 %v1799, %v1828
        %s1833 = scalar_lea.vmem %s5, 256
        %v1834 = vld [vmem:[%s1833] sm:$0xff]
        %v1835 = vld [vmem:[%s1833 + $0x8] sm:$0xff]
        %v1836 = vld [vmem:[%s1833 + $0x10] sm:$0xff]
        %v1837 = vld [vmem:[%s1833 + $0x18] sm:$0xff]
        %1839 = vset.pattern.permute.xlu0 0
        %1840 = vperm.xlu0 %1839, %v1834
        %v1841 = vpop.permute.xlu0 %1840
        %1844 = vset.pattern.permute.xlu0 0
        %1845 = vperm.xlu0 %1844, %v1835
        %v1846 = vpop.permute.xlu0 %1845
        %1849 = vset.pattern.permute.xlu0 0
        %1850 = vperm.xlu0 %1849, %v1836
        %v1851 = vpop.permute.xlu0 %1850
        %1854 = vset.pattern.permute.xlu0 0
        %1855 = vperm.xlu0 %1854, %v1837
        %v1856 = vpop.permute.xlu0 %1855
        %v1858 = vmul.f32 %v1841, %v1504
        %v1859 = vmul.f32 %v1846, %v1506
        %v1860 = vmul.f32 %v1851, %v1508
        %v1861 = vmul.f32 %v1856, %v1510
        %v1862 = vadd.f32 %v1829, %v1858
        %v1863 = vadd.f32 %v1830, %v1859
        %v1864 = vadd.f32 %v1831, %v1860
        %v1865 = vadd.f32 %v1832, %v1861
        %s1866 = scalar_lea.vmem %s5, 288
        %v1867 = vld [vmem:[%s1866] sm:$0xff]
        %v1868 = vld [vmem:[%s1866 + $0x8] sm:$0xff]
        %v1869 = vld [vmem:[%s1866 + $0x10] sm:$0xff]
        %v1870 = vld [vmem:[%s1866 + $0x18] sm:$0xff]
        %1872 = vset.pattern.permute.xlu0 0
        %1873 = vperm.xlu0 %1872, %v1867
        %v1874 = vpop.permute.xlu0 %1873
        %1877 = vset.pattern.permute.xlu0 0
        %1878 = vperm.xlu0 %1877, %v1868
        %v1879 = vpop.permute.xlu0 %1878
        %1882 = vset.pattern.permute.xlu0 0
        %1883 = vperm.xlu0 %1882, %v1869
        %v1884 = vpop.permute.xlu0 %1883
        %1887 = vset.pattern.permute.xlu0 0
        %1888 = vperm.xlu0 %1887, %v1870
        %v1889 = vpop.permute.xlu0 %1888
        %v1891 = vmul.f32 %v1874, %v1512
        %v1892 = vmul.f32 %v1879, %v1514
        %v1893 = vmul.f32 %v1884, %v1516
        %v1894 = vmul.f32 %v1889, %v1518
        %v1895 = vadd.f32 %v1862, %v1891
        %v1896 = vadd.f32 %v1863, %v1892
        %v1897 = vadd.f32 %v1864, %v1893
        %v1898 = vadd.f32 %v1865, %v1894
        %s1899 = scalar_lea.vmem %s16, 64
        %v1900 = vld [vmem:[%s1899] sm:$0xf]
        %v1901 = vld [vmem:[%s1899 + $0x4] sm:$0xf]
        %v1902 = vld [vmem:[%s1899 + $0x8] sm:$0xf]
        %v1903 = vld [vmem:[%s1899 + $0xc] sm:$0xf]
        %v1904 = vld [vmem:[%s1899 + $0x10] sm:$0xf]
        %v1905 = vld [vmem:[%s1899 + $0x14] sm:$0xf]
        %v1906 = vld [vmem:[%s1899 + $0x18] sm:$0xf]
        %v1907 = vld [vmem:[%s1899 + $0x1c] sm:$0xf]
        %v1908 = vld [vmem:[%s1899 + $0x20] sm:$0xf]
        %v1909 = vld [vmem:[%s1899 + $0x24] sm:$0xf]
        %v1910 = vld [vmem:[%s1899 + $0x28] sm:$0xf]
        %v1911 = vld [vmem:[%s1899 + $0x2c] sm:$0xf]
        %v1912 = vld [vmem:[%s1899 + $0x30] sm:$0xf]
        %v1913 = vld [vmem:[%s1899 + $0x34] sm:$0xf]
        %v1914 = vld [vmem:[%s1899 + $0x38] sm:$0xf]
        %v1915 = vld [vmem:[%s1899 + $0x3c] sm:$0xf]
        %v1916 = vpack.c.bf16 %v1706, %v1705
        %v1917 = vpack.c.bf16 %v1708, %v1707
        %v1918 = vpack.c.bf16 %v1896, %v1895
        %v1919 = vpack.c.bf16 %v1898, %v1897
        %v1936 = vunpack.c.l.b16 %v1900
        %v1937 = vunpack.c.l.b16 %v1901
        %v1938 = vunpack.c.l.b16 %v1902
        %v1939 = vunpack.c.l.b16 %v1903
        %v1940 = vunpack.c.l.b16 %v1904
        %v1941 = vunpack.c.l.b16 %v1905
        %v1942 = vunpack.c.l.b16 %v1906
        %v1943 = vunpack.c.l.b16 %v1907
        %v1944 = vunpack.c.l.b16 %v1908
        %v1945 = vunpack.c.l.b16 %v1909
        %v1946 = vunpack.c.l.b16 %v1910
        %v1947 = vunpack.c.l.b16 %v1911
        %v1948 = vunpack.c.l.b16 %v1912
        %v1949 = vunpack.c.l.b16 %v1913
        %v1950 = vunpack.c.l.b16 %v1914
        %v1951 = vunpack.c.l.b16 %v1915
        %v1952 = vpack.c.b16 %v1937, %v1936
        %v1953 = vpack.c.b16 %v1939, %v1938
        %v1954 = vpack.c.b16 %v1941, %v1940
        %v1955 = vpack.c.b16 %v1943, %v1942
        %v1956 = vpack.c.b16 %v1945, %v1944
        %v1957 = vpack.c.b16 %v1947, %v1946
        %v1958 = vpack.c.b16 %v1949, %v1948
        %v1959 = vpack.c.b16 %v1951, %v1950
        %1968 = vmatprep.subr.bf16.mxu0 0
        %1969 = vmatpush1.bf16.msra.mxu0 %v1959
        %1970 = vmatprep.subr.bf16.mxu0 0
        %1971 = vmatpush1.bf16.msra.mxu0 %v1958
        %1972 = vmatprep.subr.bf16.mxu0 0
        %1973 = vmatpush1.bf16.msra.mxu0 %v1957
        %1974 = vmatprep.subr.bf16.mxu0 0
        %1975 = vmatpush1.bf16.msra.mxu0 %v1956
        %1976 = vmatprep.subr.bf16.mxu0 0
        %1977 = vmatpush1.bf16.msra.mxu0 %v1955
        %1978 = vmatprep.subr.bf16.mxu0 0
        %1979 = vmatpush1.bf16.msra.mxu0 %v1954
        %1980 = vmatprep.subr.bf16.mxu0 0
        %1981 = vmatpush1.bf16.msra.mxu0 %v1953
        %1982 = vmatprep.subr.bf16.mxu0 0
        %1983 = vmatpush1.bf16.msra.mxu0 %v1952
        %1984 = vmatprep.subr.bf16.mxu0 0
        %1985 = vmatpush2.bf16.msra.mxu0 0
        %1986 = vmatprep.subr.bf16.mxu0 0
        %1987 = vmatpush2.bf16.msra.mxu0 0
        %1988 = vmatprep.subr.bf16.mxu0 0
        %1989 = vmatpush2.bf16.msra.mxu0 0
        %1990 = vmatprep.subr.bf16.mxu0 0
        %1991 = vmatpush2.bf16.msra.mxu0 0
        %1992 = vmatprep.subr.bf16.mxu0 0
        %1993 = vmatpush2.bf16.msra.mxu0 0
        %1994 = vmatprep.subr.bf16.mxu0 0
        %1995 = vmatpush2.bf16.msra.mxu0 0
        %1996 = vmatprep.subr.bf16.mxu0 0
        %1997 = vmatpush2.bf16.msra.mxu0 0
        %1998 = vmatprep.subr.bf16.mxu0 0
        %1999 = vmatpush2.bf16.msra.mxu0 0
        %2000 = vmatprep.mubr.bf16.mxu0 0
        %2001 = vmatmul.mubr.bf16.gmra.mxu0 %v1916
        %v2002 = vpop.f32.mrf.mxu0
        %v2003 = vadd.f32 0.0, %v2002
        %v2004 = vpop.f32.mrf.mxu0
        %v2005 = vpop.f32.mrf.mxu0
        %v2006 = vadd.f32 0.0, %v2005
        %v2007 = vpop.f32.mrf.mxu0
        %2008 = vmatprep.mubr.bf16.mxu0 0
        %2009 = vmatmul.mubr.bf16.gmra.mxu0 %v1917
        %v2010 = vpop.f32.mrf.mxu0
        %v2011 = vadd.f32 0.0, %v2010
        %v2012 = vpop.f32.mrf.mxu0
        %v2013 = vpop.f32.mrf.mxu0
        %v2014 = vadd.f32 0.0, %v2013
        %v2015 = vpop.f32.mrf.mxu0
        %2016 = vmatprep.mubr.bf16.mxu0 0
        %2017 = vmatmul.mubr.bf16.gmra.mxu0 %v1918
        %v2018 = vpop.f32.mrf.mxu0
        %v2019 = vadd.f32 0.0, %v2018
        %v2020 = vpop.f32.mrf.mxu0
        %v2021 = vpop.f32.mrf.mxu0
        %v2022 = vadd.f32 0.0, %v2021
        %v2023 = vpop.f32.mrf.mxu0
        %2024 = vmatprep.mubr.bf16.mxu0 0
        %2025 = vmatmul.mubr.bf16.gmra.mxu0 %v1919
        %v2026 = vpop.f32.mrf.mxu0
        %v2027 = vadd.f32 0.0, %v2026
        %v2028 = vpop.f32.mrf.mxu0
        %v2029 = vpop.f32.mrf.mxu0
        %v2030 = vadd.f32 0.0, %v2029
        %v2031 = vpop.f32.mrf.mxu0
        %2032 = vdwg.mxu0
        %2033 = vrot.lane.b32.xlu0 %v2003, 2
        %v2034 = vpop.permute.xlu0 %2033
        %2035 = vrot.lane.b32.xlu0 %v2006, 2
        %v2036 = vpop.permute.xlu0 %2035
        %2037 = vrot.lane.b32.xlu0 %v2011, 2
        %v2038 = vpop.permute.xlu0 %2037
        %2039 = vrot.lane.b32.xlu0 %v2014, 2
        %v2040 = vpop.permute.xlu0 %2039
        %2041 = vrot.lane.b32.xlu0 %v2003, 1
        %v2042 = vpop.permute.xlu0 %2041
        %2043 = vrot.lane.b32.xlu0 %v2006, 1
        %v2044 = vpop.permute.xlu0 %2043
        %2045 = vrot.lane.b32.xlu0 %v2011, 1
        %v2046 = vpop.permute.xlu0 %2045
        %2047 = vrot.lane.b32.xlu0 %v2014, 1
        %v2048 = vpop.permute.xlu0 %2047
        %2049 = vrot.lane.b32.xlu0 %v2003, 127
        %v2050 = vpop.permute.xlu0 %2049
        %2051 = vrot.lane.b32.xlu0 %v2006, 127
        %v2052 = vpop.permute.xlu0 %2051
        %2053 = vrot.lane.b32.xlu0 %v2011, 127
        %v2054 = vpop.permute.xlu0 %2053
        %2055 = vrot.lane.b32.xlu0 %v2014, 127
        %v2056 = vpop.permute.xlu0 %2055
        %2057 = vrot.lane.b32.xlu0 %v2003, 126
        %v2058 = vpop.permute.xlu0 %2057
        %2059 = vrot.lane.b32.xlu0 %v2006, 126
        %v2060 = vpop.permute.xlu0 %2059
        %2061 = vrot.lane.b32.xlu0 %v2011, 126
        %v2062 = vpop.permute.xlu0 %2061
        %2063 = vrot.lane.b32.xlu0 %v2014, 126
        %v2064 = vpop.permute.xlu0 %2063
        %s2065 = scalar_lea.vmem %s4, 96
        %v2066 = vld [vmem:[%s2065] sm:$0xff]
        %v2067 = vld [vmem:[%s2065 + $0x8] sm:$0xff]
        %v2068 = vld [vmem:[%s2065 + $0x10] sm:$0xff]
        %v2069 = vld [vmem:[%s2065 + $0x18] sm:$0xff]
        %s2070 = scalar_lea.vmem %s3, 480
        %v2071 = vld [vmem:[%s2070] sm:$0xff]
        %v2072 = vld [vmem:[%s2070 + $0x8] sm:$0xff]
        %v2073 = vld [vmem:[%s2070 + $0x10] sm:$0xff]
        %v2074 = vld [vmem:[%s2070 + $0x18] sm:$0xff]
        %2076 = vset.pattern.permute.xlu0 0
        %2077 = vperm.xlu0 %2076, %v2071
        %v2078 = vpop.permute.xlu0 %2077
        %2081 = vset.pattern.permute.xlu0 0
        %2082 = vperm.xlu0 %2081, %v2072
        %v2083 = vpop.permute.xlu0 %2082
        %2086 = vset.pattern.permute.xlu0 0
        %2087 = vperm.xlu0 %2086, %v2073
        %v2088 = vpop.permute.xlu0 %2087
        %2091 = vset.pattern.permute.xlu0 0
        %2092 = vperm.xlu0 %2091, %v2074
        %v2093 = vpop.permute.xlu0 %2092
        %v2095 = vmul.f32 %v2078, %v2034
        %v2096 = vmul.f32 %v2083, %v2036
        %v2097 = vmul.f32 %v2088, %v2038
        %v2098 = vmul.f32 %v2093, %v2040
        %2100 = vset.pattern.permute.xlu0 0
        %2101 = vperm.xlu0 %2100, %v2066
        %v2102 = vpop.permute.xlu0 %2101
        %2105 = vset.pattern.permute.xlu0 0
        %2106 = vperm.xlu0 %2105, %v2067
        %v2107 = vpop.permute.xlu0 %2106
        %2110 = vset.pattern.permute.xlu0 0
        %2111 = vperm.xlu0 %2110, %v2068
        %v2112 = vpop.permute.xlu0 %2111
        %2115 = vset.pattern.permute.xlu0 0
        %2116 = vperm.xlu0 %2115, %v2069
        %v2117 = vpop.permute.xlu0 %2116
        %v2119 = vadd.f32 %v2102, %v2095
        %v2120 = vadd.f32 %v2107, %v2096
        %v2121 = vadd.f32 %v2112, %v2097
        %v2122 = vadd.f32 %v2117, %v2098
        %s2123 = scalar_lea.vmem %s3, 512
        %v2124 = vld [vmem:[%s2123] sm:$0xff]
        %v2125 = vld [vmem:[%s2123 + $0x8] sm:$0xff]
        %v2126 = vld [vmem:[%s2123 + $0x10] sm:$0xff]
        %v2127 = vld [vmem:[%s2123 + $0x18] sm:$0xff]
        %2129 = vset.pattern.permute.xlu0 0
        %2130 = vperm.xlu0 %2129, %v2124
        %v2131 = vpop.permute.xlu0 %2130
        %2134 = vset.pattern.permute.xlu0 0
        %2135 = vperm.xlu0 %2134, %v2125
        %v2136 = vpop.permute.xlu0 %2135
        %2139 = vset.pattern.permute.xlu0 0
        %2140 = vperm.xlu0 %2139, %v2126
        %v2141 = vpop.permute.xlu0 %2140
        %2144 = vset.pattern.permute.xlu0 0
        %2145 = vperm.xlu0 %2144, %v2127
        %v2146 = vpop.permute.xlu0 %2145
        %v2148 = vmul.f32 %v2131, %v2042
        %v2149 = vmul.f32 %v2136, %v2044
        %v2150 = vmul.f32 %v2141, %v2046
        %v2151 = vmul.f32 %v2146, %v2048
        %v2152 = vadd.f32 %v2119, %v2148
        %v2153 = vadd.f32 %v2120, %v2149
        %v2154 = vadd.f32 %v2121, %v2150
        %v2155 = vadd.f32 %v2122, %v2151
        %s2156 = scalar_lea.vmem %s3, 544
        %v2157 = vld [vmem:[%s2156] sm:$0xff]
        %v2158 = vld [vmem:[%s2156 + $0x8] sm:$0xff]
        %v2159 = vld [vmem:[%s2156 + $0x10] sm:$0xff]
        %v2160 = vld [vmem:[%s2156 + $0x18] sm:$0xff]
        %2162 = vset.pattern.permute.xlu0 0
        %2163 = vperm.xlu0 %2162, %v2157
        %v2164 = vpop.permute.xlu0 %2163
        %2167 = vset.pattern.permute.xlu0 0
        %2168 = vperm.xlu0 %2167, %v2158
        %v2169 = vpop.permute.xlu0 %2168
        %2172 = vset.pattern.permute.xlu0 0
        %2173 = vperm.xlu0 %2172, %v2159
        %v2174 = vpop.permute.xlu0 %2173
        %2177 = vset.pattern.permute.xlu0 0
        %2178 = vperm.xlu0 %2177, %v2160
        %v2179 = vpop.permute.xlu0 %2178
        %v2181 = vmul.f32 %v2164, %v2003
        %v2182 = vmul.f32 %v2169, %v2006
        %v2183 = vmul.f32 %v2174, %v2011
        %v2184 = vmul.f32 %v2179, %v2014
        %v2185 = vadd.f32 %v2152, %v2181
        %v2186 = vadd.f32 %v2153, %v2182
        %v2187 = vadd.f32 %v2154, %v2183
        %v2188 = vadd.f32 %v2155, %v2184
        %s2189 = scalar_lea.vmem %s3, 576
        %v2190 = vld [vmem:[%s2189] sm:$0xff]
        %v2191 = vld [vmem:[%s2189 + $0x8] sm:$0xff]
        %v2192 = vld [vmem:[%s2189 + $0x10] sm:$0xff]
        %v2193 = vld [vmem:[%s2189 + $0x18] sm:$0xff]
        %2195 = vset.pattern.permute.xlu0 0
        %2196 = vperm.xlu0 %2195, %v2190
        %v2197 = vpop.permute.xlu0 %2196
        %2200 = vset.pattern.permute.xlu0 0
        %2201 = vperm.xlu0 %2200, %v2191
        %v2202 = vpop.permute.xlu0 %2201
        %2205 = vset.pattern.permute.xlu0 0
        %2206 = vperm.xlu0 %2205, %v2192
        %v2207 = vpop.permute.xlu0 %2206
        %2210 = vset.pattern.permute.xlu0 0
        %2211 = vperm.xlu0 %2210, %v2193
        %v2212 = vpop.permute.xlu0 %2211
        %v2214 = vmul.f32 %v2197, %v2050
        %v2215 = vmul.f32 %v2202, %v2052
        %v2216 = vmul.f32 %v2207, %v2054
        %v2217 = vmul.f32 %v2212, %v2056
        %v2218 = vadd.f32 %v2185, %v2214
        %v2219 = vadd.f32 %v2186, %v2215
        %v2220 = vadd.f32 %v2187, %v2216
        %v2221 = vadd.f32 %v2188, %v2217
        %s2222 = scalar_lea.vmem %s3, 608
        %v2223 = vld [vmem:[%s2222] sm:$0xff]
        %v2224 = vld [vmem:[%s2222 + $0x8] sm:$0xff]
        %v2225 = vld [vmem:[%s2222 + $0x10] sm:$0xff]
        %v2226 = vld [vmem:[%s2222 + $0x18] sm:$0xff]
        %2228 = vset.pattern.permute.xlu0 0
        %2229 = vperm.xlu0 %2228, %v2223
        %v2230 = vpop.permute.xlu0 %2229
        %2233 = vset.pattern.permute.xlu0 0
        %2234 = vperm.xlu0 %2233, %v2224
        %v2235 = vpop.permute.xlu0 %2234
        %2238 = vset.pattern.permute.xlu0 0
        %2239 = vperm.xlu0 %2238, %v2225
        %v2240 = vpop.permute.xlu0 %2239
        %2243 = vset.pattern.permute.xlu0 0
        %2244 = vperm.xlu0 %2243, %v2226
        %v2245 = vpop.permute.xlu0 %2244
        %v2247 = vmul.f32 %v2230, %v2058
        %v2248 = vmul.f32 %v2235, %v2060
        %v2249 = vmul.f32 %v2240, %v2062
        %v2250 = vmul.f32 %v2245, %v2064
        %v2251 = vadd.f32 %v2218, %v2247
        %v2252 = vadd.f32 %v2219, %v2248
        %v2253 = vadd.f32 %v2220, %v2249
        %v2254 = vadd.f32 %v2221, %v2250
        %s2255 = scalar_lea.vmem %s6, 64
        %v2256 = vld [vmem:[%s2255] sm:$0xff]
        %v2257 = vld [vmem:[%s2255 + $0x8] sm:$0xff]
        %v2258 = vld [vmem:[%s2255 + $0x10] sm:$0xff]
        %v2259 = vld [vmem:[%s2255 + $0x18] sm:$0xff]
        %s2260 = scalar_lea.vmem %s5, 320
        %v2261 = vld [vmem:[%s2260] sm:$0xff]
        %v2262 = vld [vmem:[%s2260 + $0x8] sm:$0xff]
        %v2263 = vld [vmem:[%s2260 + $0x10] sm:$0xff]
        %v2264 = vld [vmem:[%s2260 + $0x18] sm:$0xff]
        %2266 = vset.pattern.permute.xlu0 0
        %2267 = vperm.xlu0 %2266, %v2261
        %v2268 = vpop.permute.xlu0 %2267
        %2271 = vset.pattern.permute.xlu0 0
        %2272 = vperm.xlu0 %2271, %v2262
        %v2273 = vpop.permute.xlu0 %2272
        %2276 = vset.pattern.permute.xlu0 0
        %2277 = vperm.xlu0 %2276, %v2263
        %v2278 = vpop.permute.xlu0 %2277
        %2281 = vset.pattern.permute.xlu0 0
        %2282 = vperm.xlu0 %2281, %v2264
        %v2283 = vpop.permute.xlu0 %2282
        %v2285 = vmul.f32 %v2268, %v2034
        %v2286 = vmul.f32 %v2273, %v2036
        %v2287 = vmul.f32 %v2278, %v2038
        %v2288 = vmul.f32 %v2283, %v2040
        %2290 = vset.pattern.permute.xlu0 0
        %2291 = vperm.xlu0 %2290, %v2256
        %v2292 = vpop.permute.xlu0 %2291
        %2295 = vset.pattern.permute.xlu0 0
        %2296 = vperm.xlu0 %2295, %v2257
        %v2297 = vpop.permute.xlu0 %2296
        %2300 = vset.pattern.permute.xlu0 0
        %2301 = vperm.xlu0 %2300, %v2258
        %v2302 = vpop.permute.xlu0 %2301
        %2305 = vset.pattern.permute.xlu0 0
        %2306 = vperm.xlu0 %2305, %v2259
        %v2307 = vpop.permute.xlu0 %2306
        %v2309 = vadd.f32 %v2292, %v2285
        %v2310 = vadd.f32 %v2297, %v2286
        %v2311 = vadd.f32 %v2302, %v2287
        %v2312 = vadd.f32 %v2307, %v2288
        %s2313 = scalar_lea.vmem %s5, 352
        %v2314 = vld [vmem:[%s2313] sm:$0xff]
        %v2315 = vld [vmem:[%s2313 + $0x8] sm:$0xff]
        %v2316 = vld [vmem:[%s2313 + $0x10] sm:$0xff]
        %v2317 = vld [vmem:[%s2313 + $0x18] sm:$0xff]
        %2319 = vset.pattern.permute.xlu0 0
        %2320 = vperm.xlu0 %2319, %v2314
        %v2321 = vpop.permute.xlu0 %2320
        %2324 = vset.pattern.permute.xlu0 0
        %2325 = vperm.xlu0 %2324, %v2315
        %v2326 = vpop.permute.xlu0 %2325
        %2329 = vset.pattern.permute.xlu0 0
        %2330 = vperm.xlu0 %2329, %v2316
        %v2331 = vpop.permute.xlu0 %2330
        %2334 = vset.pattern.permute.xlu0 0
        %2335 = vperm.xlu0 %2334, %v2317
        %v2336 = vpop.permute.xlu0 %2335
        %v2338 = vmul.f32 %v2321, %v2042
        %v2339 = vmul.f32 %v2326, %v2044
        %v2340 = vmul.f32 %v2331, %v2046
        %v2341 = vmul.f32 %v2336, %v2048
        %v2342 = vadd.f32 %v2309, %v2338
        %v2343 = vadd.f32 %v2310, %v2339
        %v2344 = vadd.f32 %v2311, %v2340
        %v2345 = vadd.f32 %v2312, %v2341
        %s2346 = scalar_lea.vmem %s5, 384
        %v2347 = vld [vmem:[%s2346] sm:$0xff]
        %v2348 = vld [vmem:[%s2346 + $0x8] sm:$0xff]
        %v2349 = vld [vmem:[%s2346 + $0x10] sm:$0xff]
        %v2350 = vld [vmem:[%s2346 + $0x18] sm:$0xff]
        %2352 = vset.pattern.permute.xlu0 0
        %2353 = vperm.xlu0 %2352, %v2347
        %v2354 = vpop.permute.xlu0 %2353
        %2357 = vset.pattern.permute.xlu0 0
        %2358 = vperm.xlu0 %2357, %v2348
        %v2359 = vpop.permute.xlu0 %2358
        %2362 = vset.pattern.permute.xlu0 0
        %2363 = vperm.xlu0 %2362, %v2349
        %v2364 = vpop.permute.xlu0 %2363
        %2367 = vset.pattern.permute.xlu0 0
        %2368 = vperm.xlu0 %2367, %v2350
        %v2369 = vpop.permute.xlu0 %2368
        %v2371 = vmul.f32 %v2354, %v2003
        %v2372 = vmul.f32 %v2359, %v2006
        %v2373 = vmul.f32 %v2364, %v2011
        %v2374 = vmul.f32 %v2369, %v2014
        %v2375 = vadd.f32 %v2342, %v2371
        %v2376 = vadd.f32 %v2343, %v2372
        %v2377 = vadd.f32 %v2344, %v2373
        %v2378 = vadd.f32 %v2345, %v2374
        %s2379 = scalar_lea.vmem %s5, 416
        %v2380 = vld [vmem:[%s2379] sm:$0xff]
        %v2381 = vld [vmem:[%s2379 + $0x8] sm:$0xff]
        %v2382 = vld [vmem:[%s2379 + $0x10] sm:$0xff]
        %v2383 = vld [vmem:[%s2379 + $0x18] sm:$0xff]
        %2385 = vset.pattern.permute.xlu0 0
        %2386 = vperm.xlu0 %2385, %v2380
        %v2387 = vpop.permute.xlu0 %2386
        %2390 = vset.pattern.permute.xlu0 0
        %2391 = vperm.xlu0 %2390, %v2381
        %v2392 = vpop.permute.xlu0 %2391
        %2395 = vset.pattern.permute.xlu0 0
        %2396 = vperm.xlu0 %2395, %v2382
        %v2397 = vpop.permute.xlu0 %2396
        %2400 = vset.pattern.permute.xlu0 0
        %2401 = vperm.xlu0 %2400, %v2383
        %v2402 = vpop.permute.xlu0 %2401
        %v2404 = vmul.f32 %v2387, %v2050
        %v2405 = vmul.f32 %v2392, %v2052
        %v2406 = vmul.f32 %v2397, %v2054
        %v2407 = vmul.f32 %v2402, %v2056
        %v2408 = vadd.f32 %v2375, %v2404
        %v2409 = vadd.f32 %v2376, %v2405
        %v2410 = vadd.f32 %v2377, %v2406
        %v2411 = vadd.f32 %v2378, %v2407
        %s2412 = scalar_lea.vmem %s5, 448
        %v2413 = vld [vmem:[%s2412] sm:$0xff]
        %v2414 = vld [vmem:[%s2412 + $0x8] sm:$0xff]
        %v2415 = vld [vmem:[%s2412 + $0x10] sm:$0xff]
        %v2416 = vld [vmem:[%s2412 + $0x18] sm:$0xff]
        %2418 = vset.pattern.permute.xlu0 0
        %2419 = vperm.xlu0 %2418, %v2413
        %v2420 = vpop.permute.xlu0 %2419
        %2423 = vset.pattern.permute.xlu0 0
        %2424 = vperm.xlu0 %2423, %v2414
        %v2425 = vpop.permute.xlu0 %2424
        %2428 = vset.pattern.permute.xlu0 0
        %2429 = vperm.xlu0 %2428, %v2415
        %v2430 = vpop.permute.xlu0 %2429
        %2433 = vset.pattern.permute.xlu0 0
        %2434 = vperm.xlu0 %2433, %v2416
        %v2435 = vpop.permute.xlu0 %2434
        %v2437 = vmul.f32 %v2420, %v2058
        %v2438 = vmul.f32 %v2425, %v2060
        %v2439 = vmul.f32 %v2430, %v2062
        %v2440 = vmul.f32 %v2435, %v2064
        %v2441 = vadd.f32 %v2408, %v2437
        %v2442 = vadd.f32 %v2409, %v2438
        %v2443 = vadd.f32 %v2410, %v2439
        %v2444 = vadd.f32 %v2411, %v2440
        %s2445 = scalar_lea.vmem %s16, 128
        %v2446 = vld [vmem:[%s2445] sm:$0xf]
        %v2447 = vld [vmem:[%s2445 + $0x4] sm:$0xf]
        %v2448 = vld [vmem:[%s2445 + $0x8] sm:$0xf]
        %v2449 = vld [vmem:[%s2445 + $0xc] sm:$0xf]
        %v2450 = vld [vmem:[%s2445 + $0x10] sm:$0xf]
        %v2451 = vld [vmem:[%s2445 + $0x14] sm:$0xf]
        %v2452 = vld [vmem:[%s2445 + $0x18] sm:$0xf]
        %v2453 = vld [vmem:[%s2445 + $0x1c] sm:$0xf]
        %v2454 = vld [vmem:[%s2445 + $0x20] sm:$0xf]
        %v2455 = vld [vmem:[%s2445 + $0x24] sm:$0xf]
        %v2456 = vld [vmem:[%s2445 + $0x28] sm:$0xf]
        %v2457 = vld [vmem:[%s2445 + $0x2c] sm:$0xf]
        %v2458 = vld [vmem:[%s2445 + $0x30] sm:$0xf]
        %v2459 = vld [vmem:[%s2445 + $0x34] sm:$0xf]
        %v2460 = vld [vmem:[%s2445 + $0x38] sm:$0xf]
        %v2461 = vld [vmem:[%s2445 + $0x3c] sm:$0xf]
        %v2462 = vpack.c.bf16 %v2252, %v2251
        %v2463 = vpack.c.bf16 %v2254, %v2253
        %v2464 = vpack.c.bf16 %v2442, %v2441
        %v2465 = vpack.c.bf16 %v2444, %v2443
        %v2482 = vunpack.c.l.b16 %v2446
        %v2483 = vunpack.c.l.b16 %v2447
        %v2484 = vunpack.c.l.b16 %v2448
        %v2485 = vunpack.c.l.b16 %v2449
        %v2486 = vunpack.c.l.b16 %v2450
        %v2487 = vunpack.c.l.b16 %v2451
        %v2488 = vunpack.c.l.b16 %v2452
        %v2489 = vunpack.c.l.b16 %v2453
        %v2490 = vunpack.c.l.b16 %v2454
        %v2491 = vunpack.c.l.b16 %v2455
        %v2492 = vunpack.c.l.b16 %v2456
        %v2493 = vunpack.c.l.b16 %v2457
        %v2494 = vunpack.c.l.b16 %v2458
        %v2495 = vunpack.c.l.b16 %v2459
        %v2496 = vunpack.c.l.b16 %v2460
        %v2497 = vunpack.c.l.b16 %v2461
        %v2498 = vpack.c.b16 %v2483, %v2482
        %v2499 = vpack.c.b16 %v2485, %v2484
        %v2500 = vpack.c.b16 %v2487, %v2486
        %v2501 = vpack.c.b16 %v2489, %v2488
        %v2502 = vpack.c.b16 %v2491, %v2490
        %v2503 = vpack.c.b16 %v2493, %v2492
        %v2504 = vpack.c.b16 %v2495, %v2494
        %v2505 = vpack.c.b16 %v2497, %v2496
        %2514 = vmatprep.subr.bf16.mxu0 0
        %2515 = vmatpush1.bf16.msra.mxu0 %v2505
        %2516 = vmatprep.subr.bf16.mxu0 0
        %2517 = vmatpush1.bf16.msra.mxu0 %v2504
        %2518 = vmatprep.subr.bf16.mxu0 0
        %2519 = vmatpush1.bf16.msra.mxu0 %v2503
        %2520 = vmatprep.subr.bf16.mxu0 0
        %2521 = vmatpush1.bf16.msra.mxu0 %v2502
        %2522 = vmatprep.subr.bf16.mxu0 0
        %2523 = vmatpush1.bf16.msra.mxu0 %v2501
        %2524 = vmatprep.subr.bf16.mxu0 0
        %2525 = vmatpush1.bf16.msra.mxu0 %v2500
        %2526 = vmatprep.subr.bf16.mxu0 0
        %2527 = vmatpush1.bf16.msra.mxu0 %v2499
        %2528 = vmatprep.subr.bf16.mxu0 0
        %2529 = vmatpush1.bf16.msra.mxu0 %v2498
        %2530 = vmatprep.subr.bf16.mxu0 0
        %2531 = vmatpush2.bf16.msra.mxu0 0
        %2532 = vmatprep.subr.bf16.mxu0 0
        %2533 = vmatpush2.bf16.msra.mxu0 0
        %2534 = vmatprep.subr.bf16.mxu0 0
        %2535 = vmatpush2.bf16.msra.mxu0 0
        %2536 = vmatprep.subr.bf16.mxu0 0
        %2537 = vmatpush2.bf16.msra.mxu0 0
        %2538 = vmatprep.subr.bf16.mxu0 0
        %2539 = vmatpush2.bf16.msra.mxu0 0
        %2540 = vmatprep.subr.bf16.mxu0 0
        %2541 = vmatpush2.bf16.msra.mxu0 0
        %2542 = vmatprep.subr.bf16.mxu0 0
        %2543 = vmatpush2.bf16.msra.mxu0 0
        %2544 = vmatprep.subr.bf16.mxu0 0
        %2545 = vmatpush2.bf16.msra.mxu0 0
        %2546 = vmatprep.mubr.bf16.mxu0 0
        %2547 = vmatmul.mubr.bf16.gmra.mxu0 %v2462
        %v2548 = vpop.f32.mrf.mxu0
        %v2549 = vadd.f32 0.0, %v2548
        %v2550 = vpop.f32.mrf.mxu0
        %v2551 = vpop.f32.mrf.mxu0
        %v2552 = vadd.f32 0.0, %v2551
        %v2553 = vpop.f32.mrf.mxu0
        %2554 = vmatprep.mubr.bf16.mxu0 0
        %2555 = vmatmul.mubr.bf16.gmra.mxu0 %v2463
        %v2556 = vpop.f32.mrf.mxu0
        %v2557 = vadd.f32 0.0, %v2556
        %v2558 = vpop.f32.mrf.mxu0
        %v2559 = vpop.f32.mrf.mxu0
        %v2560 = vadd.f32 0.0, %v2559
        %v2561 = vpop.f32.mrf.mxu0
        %2562 = vmatprep.mubr.bf16.mxu0 0
        %2563 = vmatmul.mubr.bf16.gmra.mxu0 %v2464
        %v2564 = vpop.f32.mrf.mxu0
        %v2565 = vadd.f32 0.0, %v2564
        %v2566 = vpop.f32.mrf.mxu0
        %v2567 = vpop.f32.mrf.mxu0
        %v2568 = vadd.f32 0.0, %v2567
        %v2569 = vpop.f32.mrf.mxu0
        %2570 = vmatprep.mubr.bf16.mxu0 0
        %2571 = vmatmul.mubr.bf16.gmra.mxu0 %v2465
        %v2572 = vpop.f32.mrf.mxu0
        %v2573 = vadd.f32 0.0, %v2572
        %v2574 = vpop.f32.mrf.mxu0
        %v2575 = vpop.f32.mrf.mxu0
        %v2576 = vadd.f32 0.0, %v2575
        %v2577 = vpop.f32.mrf.mxu0
        %2578 = vdwg.mxu0
        %v2579 = vld [vmem:[%s17] sm:$0xf]
        %v2580 = vld [vmem:[%s17 + $0x4] sm:$0xf]
        %v2581 = vld [vmem:[%s17 + $0x8] sm:$0xf]
        %v2582 = vld [vmem:[%s17 + $0xc] sm:$0xf]
        %v2583 = vld [vmem:[%s17 + $0x10] sm:$0xf]
        %v2584 = vld [vmem:[%s17 + $0x14] sm:$0xf]
        %v2585 = vld [vmem:[%s17 + $0x18] sm:$0xf]
        %v2586 = vld [vmem:[%s17 + $0x1c] sm:$0xf]
        %v2587 = vld [vmem:[%s17 + $0x20] sm:$0xf]
        %v2588 = vld [vmem:[%s17 + $0x24] sm:$0xf]
        %v2589 = vld [vmem:[%s17 + $0x28] sm:$0xf]
        %v2590 = vld [vmem:[%s17 + $0x2c] sm:$0xf]
        %v2591 = vld [vmem:[%s17 + $0x30] sm:$0xf]
        %v2592 = vld [vmem:[%s17 + $0x34] sm:$0xf]
        %v2593 = vld [vmem:[%s17 + $0x38] sm:$0xf]
        %v2594 = vld [vmem:[%s17 + $0x3c] sm:$0xf]
        %v2595 = vpack.c.bf16 %v1460, %v1457
        %v2596 = vpack.c.bf16 %v1468, %v1465
        %v2613 = vunpack.c.l.b16 %v2579
        %v2614 = vunpack.c.l.b16 %v2580
        %v2615 = vunpack.c.l.b16 %v2581
        %v2616 = vunpack.c.l.b16 %v2582
        %v2617 = vunpack.c.l.b16 %v2583
        %v2618 = vunpack.c.l.b16 %v2584
        %v2619 = vunpack.c.l.b16 %v2585
        %v2620 = vunpack.c.l.b16 %v2586
        %v2621 = vunpack.c.l.b16 %v2587
        %v2622 = vunpack.c.l.b16 %v2588
        %v2623 = vunpack.c.l.b16 %v2589
        %v2624 = vunpack.c.l.b16 %v2590
        %v2625 = vunpack.c.l.b16 %v2591
        %v2626 = vunpack.c.l.b16 %v2592
        %v2627 = vunpack.c.l.b16 %v2593
        %v2628 = vunpack.c.l.b16 %v2594
        %v2629 = vpack.c.b16 %v2614, %v2613
        %v2630 = vpack.c.b16 %v2616, %v2615
        %v2631 = vpack.c.b16 %v2618, %v2617
        %v2632 = vpack.c.b16 %v2620, %v2619
        %v2633 = vpack.c.b16 %v2622, %v2621
        %v2634 = vpack.c.b16 %v2624, %v2623
        %v2635 = vpack.c.b16 %v2626, %v2625
        %v2636 = vpack.c.b16 %v2628, %v2627
        %2645 = vmatprep.subr.bf16.mxu0 0
        %2646 = vmatpush1.bf16.msra.mxu0 %v2636
        %2647 = vmatprep.subr.bf16.mxu0 0
        %2648 = vmatpush1.bf16.msra.mxu0 %v2635
        %2649 = vmatprep.subr.bf16.mxu0 0
        %2650 = vmatpush1.bf16.msra.mxu0 %v2634
        %2651 = vmatprep.subr.bf16.mxu0 0
        %2652 = vmatpush1.bf16.msra.mxu0 %v2633
        %2653 = vmatprep.subr.bf16.mxu0 0
        %2654 = vmatpush1.bf16.msra.mxu0 %v2632
        %2655 = vmatprep.subr.bf16.mxu0 0
        %2656 = vmatpush1.bf16.msra.mxu0 %v2631
        %2657 = vmatprep.subr.bf16.mxu0 0
        %2658 = vmatpush1.bf16.msra.mxu0 %v2630
        %2659 = vmatprep.subr.bf16.mxu0 0
        %2660 = vmatpush1.bf16.msra.mxu0 %v2629
        %2661 = vmatprep.subr.bf16.mxu0 0
        %2662 = vmatpush2.bf16.msra.mxu0 0
        %2663 = vmatprep.subr.bf16.mxu0 0
        %2664 = vmatpush2.bf16.msra.mxu0 0
        %2665 = vmatprep.subr.bf16.mxu0 0
        %2666 = vmatpush2.bf16.msra.mxu0 0
        %2667 = vmatprep.subr.bf16.mxu0 0
        %2668 = vmatpush2.bf16.msra.mxu0 0
        %2669 = vmatprep.subr.bf16.mxu0 0
        %2670 = vmatpush2.bf16.msra.mxu0 0
        %2671 = vmatprep.subr.bf16.mxu0 0
        %2672 = vmatpush2.bf16.msra.mxu0 0
        %2673 = vmatprep.subr.bf16.mxu0 0
        %2674 = vmatpush2.bf16.msra.mxu0 0
        %2675 = vmatprep.subr.bf16.mxu0 0
        %2676 = vmatpush2.bf16.msra.mxu0 0
        %2677 = vmatprep.mubr.bf16.mxu0 0
        %2678 = vmatmul.mubr.bf16.gmra.mxu0 %v2595
        %v2679 = vpop.f32.mrf.mxu0
        %v2680 = vadd.f32 0.0, %v2679
        %v2681 = vpop.f32.mrf.mxu0
        %v2682 = vpop.f32.mrf.mxu0
        %v2683 = vadd.f32 0.0, %v2682
        %v2684 = vpop.f32.mrf.mxu0
        %2685 = vmatprep.mubr.bf16.mxu0 0
        %2686 = vmatmul.mubr.bf16.gmra.mxu0 %v2596
        %v2687 = vpop.f32.mrf.mxu0
        %v2688 = vadd.f32 0.0, %v2687
        %v2689 = vpop.f32.mrf.mxu0
        %v2690 = vpop.f32.mrf.mxu0
        %v2691 = vadd.f32 0.0, %v2690
        %v2692 = vpop.f32.mrf.mxu0
        %2693 = vdwg.mxu0
        %v2694 = vld [vmem:[%s7] sm:$0xf]
        %v2695 = vld [vmem:[%s7 + $0x4] sm:$0xf]
        %v2696 = vld [vmem:[%s7 + $0x8] sm:$0xf]
        %v2697 = vld [vmem:[%s7 + $0xc] sm:$0xf]
        %v2698 = vpack.c.bf16 %v941, %v940
        %v2699 = vpack.c.bf16 %v943, %v942
        %v2700 = vpack.c.bf16 %v2683, %v2680
        %v2701 = vpack.c.bf16 %v2691, %v2688
        %v2702 = vld [vmem:[%s11] sm:$0xff]
        %v2703 = vld [vmem:[%s11 + $0x8] sm:$0xff]
        %v2704 = vld [vmem:[%s11 + $0x10] sm:$0xff]
        %v2705 = vld [vmem:[%s11 + $0x18] sm:$0xff]
        %2707 = vset.pattern.permute.xlu0 0
        %2708 = vperm.xlu0 %2707, %v2702
        %v2709 = vpop.permute.xlu0 %2708
        %2712 = vset.pattern.permute.xlu0 0
        %2713 = vperm.xlu0 %2712, %v2703
        %v2714 = vpop.permute.xlu0 %2713
        %2717 = vset.pattern.permute.xlu0 0
        %2718 = vperm.xlu0 %2717, %v2704
        %v2719 = vpop.permute.xlu0 %2718
        %2722 = vset.pattern.permute.xlu0 0
        %2723 = vperm.xlu0 %2722, %v2705
        %v2724 = vpop.permute.xlu0 %2723
        %v2730 = vunpack.c.l.b16 %v2694
        %v2731 = vunpack.c.l.b16 %v2695
        %v2732 = vunpack.c.l.b16 %v2696
        %v2733 = vunpack.c.l.b16 %v2697
        %v2734 = vpack.c.b16 %v2731, %v2730
        %v2735 = vpack.c.b16 %v2733, %v2732
        %vm2736 = vcmask 523264
        %v2738 = vsel %vm2736, %v2734, 0
        %v2741 = vsel %vm2736, %v2735, 0
        %2743 = vmatprep.subr.bf16.mxu0 0
        %2744 = vmatpush1.bf16.msra.mxu0 0
        %2745 = vmatprep.subr.bf16.mxu0 0
        %2746 = vmatpush1.bf16.msra.mxu0 0
        %2747 = vmatprep.subr.bf16.mxu0 0
        %2748 = vmatpush1.bf16.msra.mxu0 0
        %2749 = vmatprep.subr.bf16.mxu0 0
        %2750 = vmatpush1.bf16.msra.mxu0 0
        %2751 = vmatprep.subr.bf16.mxu0 0
        %2752 = vmatpush1.bf16.msra.mxu0 %v2701
        %2753 = vmatprep.subr.bf16.mxu0 0
        %2754 = vmatpush1.bf16.msra.mxu0 %v2700
        %2755 = vmatprep.subr.bf16.mxu0 0
        %2756 = vmatpush1.bf16.msra.mxu0 %v2699
        %2757 = vmatprep.subr.bf16.mxu0 0
        %2758 = vmatpush1.bf16.msra.mxu0 %v2698
        %2759 = vmatprep.subr.bf16.mxu0 0
        %2760 = vmatpush2.bf16.msra.mxu0 0
        %2761 = vmatprep.subr.bf16.mxu0 0
        %2762 = vmatpush2.bf16.msra.mxu0 0
        %2763 = vmatprep.subr.bf16.mxu0 0
        %2764 = vmatpush2.bf16.msra.mxu0 0
        %2765 = vmatprep.subr.bf16.mxu0 0
        %2766 = vmatpush2.bf16.msra.mxu0 0
        %2767 = vmatprep.subr.bf16.mxu0 0
        %2768 = vmatpush2.bf16.msra.mxu0 0
        %2769 = vmatprep.subr.bf16.mxu0 0
        %2770 = vmatpush2.bf16.msra.mxu0 0
        %2771 = vmatprep.subr.bf16.mxu0 0
        %2772 = vmatpush2.bf16.msra.mxu0 0
        %2773 = vmatprep.subr.bf16.mxu0 0
        %2774 = vmatpush2.bf16.msra.mxu0 0
        %2775 = vmatprep.mubr.bf16.mxu0 0
        %2776 = vmatmul.mubr.bf16.gmra.mxu0 %v2738
        %v2777 = vpop.f32.mrf.mxu0
        %v2778 = vadd.f32 %v2709, %v2777
        %v2779 = vpop.f32.mrf.mxu0
        %v2780 = vpop.f32.mrf.mxu0
        %v2781 = vadd.f32 %v2714, %v2780
        %v2782 = vpop.f32.mrf.mxu0
        %2783 = vmatprep.mubr.bf16.mxu0 0
        %2784 = vmatmul.mubr.bf16.gmra.mxu0 %v2741
        %v2785 = vpop.f32.mrf.mxu0
        %v2786 = vadd.f32 %v2719, %v2785
        %v2787 = vpop.f32.mrf.mxu0
        %v2788 = vpop.f32.mrf.mxu0
        %v2789 = vadd.f32 %v2724, %v2788
        %v2790 = vpop.f32.mrf.mxu0
        %2791 = vdwg.mxu0
        %vm2792 = vcmp.gt.f32.partialorder %v2778, 0.0
        %vm2793 = vcmp.gt.f32.partialorder %v2781, 0.0
        %vm2794 = vcmp.gt.f32.partialorder %v2786, 0.0
        %vm2795 = vcmp.gt.f32.partialorder %v2789, 0.0
        %v2796 = vmul.f32 %v2778, 0.25
        %v2797 = vmul.f32 %v2781, 0.25
        %v2798 = vmul.f32 %v2786, 0.25
        %v2799 = vmul.f32 %v2789, 0.25
        %v2800 = vsel %vm2792, %v2778, %v2796
        %v2801 = vsel %vm2793, %v2781, %v2797
        %v2802 = vsel %vm2794, %v2786, %v2798
        %v2803 = vsel %vm2795, %v2789, %v2799
        %s2804 = scalar_lea.vmem %s17, 64
        %v2805 = vld [vmem:[%s2804] sm:$0xf]
        %v2806 = vld [vmem:[%s2804 + $0x4] sm:$0xf]
        %v2807 = vld [vmem:[%s2804 + $0x8] sm:$0xf]
        %v2808 = vld [vmem:[%s2804 + $0xc] sm:$0xf]
        %v2809 = vld [vmem:[%s2804 + $0x10] sm:$0xf]
        %v2810 = vld [vmem:[%s2804 + $0x14] sm:$0xf]
        %v2811 = vld [vmem:[%s2804 + $0x18] sm:$0xf]
        %v2812 = vld [vmem:[%s2804 + $0x1c] sm:$0xf]
        %v2813 = vld [vmem:[%s2804 + $0x20] sm:$0xf]
        %v2814 = vld [vmem:[%s2804 + $0x24] sm:$0xf]
        %v2815 = vld [vmem:[%s2804 + $0x28] sm:$0xf]
        %v2816 = vld [vmem:[%s2804 + $0x2c] sm:$0xf]
        %v2817 = vld [vmem:[%s2804 + $0x30] sm:$0xf]
        %v2818 = vld [vmem:[%s2804 + $0x34] sm:$0xf]
        %v2819 = vld [vmem:[%s2804 + $0x38] sm:$0xf]
        %v2820 = vld [vmem:[%s2804 + $0x3c] sm:$0xf]
        %v2821 = vpack.c.bf16 %v2006, %v2003
        %v2822 = vpack.c.bf16 %v2014, %v2011
        %v2839 = vunpack.c.l.b16 %v2805
        %v2840 = vunpack.c.l.b16 %v2806
        %v2841 = vunpack.c.l.b16 %v2807
        %v2842 = vunpack.c.l.b16 %v2808
        %v2843 = vunpack.c.l.b16 %v2809
        %v2844 = vunpack.c.l.b16 %v2810
        %v2845 = vunpack.c.l.b16 %v2811
        %v2846 = vunpack.c.l.b16 %v2812
        %v2847 = vunpack.c.l.b16 %v2813
        %v2848 = vunpack.c.l.b16 %v2814
        %v2849 = vunpack.c.l.b16 %v2815
        %v2850 = vunpack.c.l.b16 %v2816
        %v2851 = vunpack.c.l.b16 %v2817
        %v2852 = vunpack.c.l.b16 %v2818
        %v2853 = vunpack.c.l.b16 %v2819
        %v2854 = vunpack.c.l.b16 %v2820
        %v2855 = vpack.c.b16 %v2840, %v2839
        %v2856 = vpack.c.b16 %v2842, %v2841
        %v2857 = vpack.c.b16 %v2844, %v2843
        %v2858 = vpack.c.b16 %v2846, %v2845
        %v2859 = vpack.c.b16 %v2848, %v2847
        %v2860 = vpack.c.b16 %v2850, %v2849
        %v2861 = vpack.c.b16 %v2852, %v2851
        %v2862 = vpack.c.b16 %v2854, %v2853
        %2871 = vmatprep.subr.bf16.mxu0 0
        %2872 = vmatpush1.bf16.msra.mxu0 %v2862
        %2873 = vmatprep.subr.bf16.mxu0 0
        %2874 = vmatpush1.bf16.msra.mxu0 %v2861
        %2875 = vmatprep.subr.bf16.mxu0 0
        %2876 = vmatpush1.bf16.msra.mxu0 %v2860
        %2877 = vmatprep.subr.bf16.mxu0 0
        %2878 = vmatpush1.bf16.msra.mxu0 %v2859
        %2879 = vmatprep.subr.bf16.mxu0 0
        %2880 = vmatpush1.bf16.msra.mxu0 %v2858
        %2881 = vmatprep.subr.bf16.mxu0 0
        %2882 = vmatpush1.bf16.msra.mxu0 %v2857
        %2883 = vmatprep.subr.bf16.mxu0 0
        %2884 = vmatpush1.bf16.msra.mxu0 %v2856
        %2885 = vmatprep.subr.bf16.mxu0 0
        %2886 = vmatpush1.bf16.msra.mxu0 %v2855
        %2887 = vmatprep.subr.bf16.mxu0 0
        %2888 = vmatpush2.bf16.msra.mxu0 0
        %2889 = vmatprep.subr.bf16.mxu0 0
        %2890 = vmatpush2.bf16.msra.mxu0 0
        %2891 = vmatprep.subr.bf16.mxu0 0
        %2892 = vmatpush2.bf16.msra.mxu0 0
        %2893 = vmatprep.subr.bf16.mxu0 0
        %2894 = vmatpush2.bf16.msra.mxu0 0
        %2895 = vmatprep.subr.bf16.mxu0 0
        %2896 = vmatpush2.bf16.msra.mxu0 0
        %2897 = vmatprep.subr.bf16.mxu0 0
        %2898 = vmatpush2.bf16.msra.mxu0 0
        %2899 = vmatprep.subr.bf16.mxu0 0
        %2900 = vmatpush2.bf16.msra.mxu0 0
        %2901 = vmatprep.subr.bf16.mxu0 0
        %2902 = vmatpush2.bf16.msra.mxu0 0
        %2903 = vmatprep.mubr.bf16.mxu0 0
        %2904 = vmatmul.mubr.bf16.gmra.mxu0 %v2821
        %v2905 = vpop.f32.mrf.mxu0
        %v2906 = vadd.f32 0.0, %v2905
        %v2907 = vpop.f32.mrf.mxu0
        %v2908 = vpop.f32.mrf.mxu0
        %v2909 = vadd.f32 0.0, %v2908
        %v2910 = vpop.f32.mrf.mxu0
        %2911 = vmatprep.mubr.bf16.mxu0 0
        %2912 = vmatmul.mubr.bf16.gmra.mxu0 %v2822
        %v2913 = vpop.f32.mrf.mxu0
        %v2914 = vadd.f32 0.0, %v2913
        %v2915 = vpop.f32.mrf.mxu0
        %v2916 = vpop.f32.mrf.mxu0
        %v2917 = vadd.f32 0.0, %v2916
        %v2918 = vpop.f32.mrf.mxu0
        %2919 = vdwg.mxu0
        %v2920 = vld [vmem:[%s8] sm:$0xf]
        %v2921 = vld [vmem:[%s8 + $0x4] sm:$0xf]
        %v2922 = vld [vmem:[%s8 + $0x8] sm:$0xf]
        %v2923 = vld [vmem:[%s8 + $0xc] sm:$0xf]
        %v2924 = vpack.c.bf16 %v1476, %v1473
        %v2925 = vpack.c.bf16 %v1484, %v1481
        %v2926 = vpack.c.bf16 %v2909, %v2906
        %v2927 = vpack.c.bf16 %v2917, %v2914
        %s2928 = scalar_lea.vmem %s11, 32
        %v2929 = vld [vmem:[%s2928] sm:$0xff]
        %v2930 = vld [vmem:[%s2928 + $0x8] sm:$0xff]
        %v2931 = vld [vmem:[%s2928 + $0x10] sm:$0xff]
        %v2932 = vld [vmem:[%s2928 + $0x18] sm:$0xff]
        %2934 = vset.pattern.permute.xlu0 0
        %2935 = vperm.xlu0 %2934, %v2929
        %v2936 = vpop.permute.xlu0 %2935
        %2939 = vset.pattern.permute.xlu0 0
        %2940 = vperm.xlu0 %2939, %v2930
        %v2941 = vpop.permute.xlu0 %2940
        %2944 = vset.pattern.permute.xlu0 0
        %2945 = vperm.xlu0 %2944, %v2931
        %v2946 = vpop.permute.xlu0 %2945
        %2949 = vset.pattern.permute.xlu0 0
        %2950 = vperm.xlu0 %2949, %v2932
        %v2951 = vpop.permute.xlu0 %2950
        %v2957 = vunpack.c.l.b16 %v2920
        %v2958 = vunpack.c.l.b16 %v2921
        %v2959 = vunpack.c.l.b16 %v2922
        %v2960 = vunpack.c.l.b16 %v2923
        %v2961 = vpack.c.b16 %v2958, %v2957
        %v2962 = vpack.c.b16 %v2960, %v2959
        %vm2963 = vcmask 785408
        %v2965 = vsel %vm2963, %v2961, 0
        %v2968 = vsel %vm2963, %v2962, 0
        %2970 = vmatprep.subr.bf16.mxu0 0
        %2971 = vmatpush1.bf16.msra.mxu0 0
        %2972 = vmatprep.subr.bf16.mxu0 0
        %2973 = vmatpush1.bf16.msra.mxu0 0
        %2974 = vmatprep.subr.bf16.mxu0 0
        %2975 = vmatpush1.bf16.msra.mxu0 %v2927
        %2976 = vmatprep.subr.bf16.mxu0 0
        %2977 = vmatpush1.bf16.msra.mxu0 %v2926
        %2978 = vmatprep.subr.bf16.mxu0 0
        %2979 = vmatpush1.bf16.msra.mxu0 %v2596
        %2980 = vmatprep.subr.bf16.mxu0 0
        %2981 = vmatpush1.bf16.msra.mxu0 %v2595
        %2982 = vmatprep.subr.bf16.mxu0 0
        %2983 = vmatpush1.bf16.msra.mxu0 %v2925
        %2984 = vmatprep.subr.bf16.mxu0 0
        %2985 = vmatpush1.bf16.msra.mxu0 %v2924
        %2986 = vmatprep.subr.bf16.mxu0 0
        %2987 = vmatpush2.bf16.msra.mxu0 0
        %2988 = vmatprep.subr.bf16.mxu0 0
        %2989 = vmatpush2.bf16.msra.mxu0 0
        %2990 = vmatprep.subr.bf16.mxu0 0
        %2991 = vmatpush2.bf16.msra.mxu0 0
        %2992 = vmatprep.subr.bf16.mxu0 0
        %2993 = vmatpush2.bf16.msra.mxu0 0
        %2994 = vmatprep.subr.bf16.mxu0 0
        %2995 = vmatpush2.bf16.msra.mxu0 0
        %2996 = vmatprep.subr.bf16.mxu0 0
        %2997 = vmatpush2.bf16.msra.mxu0 0
        %2998 = vmatprep.subr.bf16.mxu0 0
        %2999 = vmatpush2.bf16.msra.mxu0 0
        %3000 = vmatprep.subr.bf16.mxu0 0
        %3001 = vmatpush2.bf16.msra.mxu0 0
        %3002 = vmatprep.mubr.bf16.mxu0 0
        %3003 = vmatmul.mubr.bf16.gmra.mxu0 %v2965
        %v3004 = vpop.f32.mrf.mxu0
        %v3005 = vadd.f32 %v2936, %v3004
        %v3006 = vpop.f32.mrf.mxu0
        %v3007 = vpop.f32.mrf.mxu0
        %v3008 = vadd.f32 %v2941, %v3007
        %v3009 = vpop.f32.mrf.mxu0
        %3010 = vmatprep.mubr.bf16.mxu0 0
        %3011 = vmatmul.mubr.bf16.gmra.mxu0 %v2968
        %v3012 = vpop.f32.mrf.mxu0
        %v3013 = vadd.f32 %v2946, %v3012
        %v3014 = vpop.f32.mrf.mxu0
        %v3015 = vpop.f32.mrf.mxu0
        %v3016 = vadd.f32 %v2951, %v3015
        %v3017 = vpop.f32.mrf.mxu0
        %3018 = vdwg.mxu0
        %vm3019 = vcmp.gt.f32.partialorder %v3005, 0.0
        %vm3020 = vcmp.gt.f32.partialorder %v3008, 0.0
        %vm3021 = vcmp.gt.f32.partialorder %v3013, 0.0
        %vm3022 = vcmp.gt.f32.partialorder %v3016, 0.0
        %v3023 = vmul.f32 %v3005, 0.25
        %v3024 = vmul.f32 %v3008, 0.25
        %v3025 = vmul.f32 %v3013, 0.25
        %v3026 = vmul.f32 %v3016, 0.25
        %v3027 = vsel %vm3019, %v3005, %v3023
        %v3028 = vsel %vm3020, %v3008, %v3024
        %v3029 = vsel %vm3021, %v3013, %v3025
        %v3030 = vsel %vm3022, %v3016, %v3026
        %s3031 = scalar_lea.vmem %s17, 128
        %v3032 = vld [vmem:[%s3031] sm:$0xf]
        %v3033 = vld [vmem:[%s3031 + $0x4] sm:$0xf]
        %v3034 = vld [vmem:[%s3031 + $0x8] sm:$0xf]
        %v3035 = vld [vmem:[%s3031 + $0xc] sm:$0xf]
        %v3036 = vld [vmem:[%s3031 + $0x10] sm:$0xf]
        %v3037 = vld [vmem:[%s3031 + $0x14] sm:$0xf]
        %v3038 = vld [vmem:[%s3031 + $0x18] sm:$0xf]
        %v3039 = vld [vmem:[%s3031 + $0x1c] sm:$0xf]
        %v3040 = vld [vmem:[%s3031 + $0x20] sm:$0xf]
        %v3041 = vld [vmem:[%s3031 + $0x24] sm:$0xf]
        %v3042 = vld [vmem:[%s3031 + $0x28] sm:$0xf]
        %v3043 = vld [vmem:[%s3031 + $0x2c] sm:$0xf]
        %v3044 = vld [vmem:[%s3031 + $0x30] sm:$0xf]
        %v3045 = vld [vmem:[%s3031 + $0x34] sm:$0xf]
        %v3046 = vld [vmem:[%s3031 + $0x38] sm:$0xf]
        %v3047 = vld [vmem:[%s3031 + $0x3c] sm:$0xf]
        %v3048 = vpack.c.bf16 %v2552, %v2549
        %v3049 = vpack.c.bf16 %v2560, %v2557
        %v3066 = vunpack.c.l.b16 %v3032
        %v3067 = vunpack.c.l.b16 %v3033
        %v3068 = vunpack.c.l.b16 %v3034
        %v3069 = vunpack.c.l.b16 %v3035
        %v3070 = vunpack.c.l.b16 %v3036
        %v3071 = vunpack.c.l.b16 %v3037
        %v3072 = vunpack.c.l.b16 %v3038
        %v3073 = vunpack.c.l.b16 %v3039
        %v3074 = vunpack.c.l.b16 %v3040
        %v3075 = vunpack.c.l.b16 %v3041
        %v3076 = vunpack.c.l.b16 %v3042
        %v3077 = vunpack.c.l.b16 %v3043
        %v3078 = vunpack.c.l.b16 %v3044
        %v3079 = vunpack.c.l.b16 %v3045
        %v3080 = vunpack.c.l.b16 %v3046
        %v3081 = vunpack.c.l.b16 %v3047
        %v3082 = vpack.c.b16 %v3067, %v3066
        %v3083 = vpack.c.b16 %v3069, %v3068
        %v3084 = vpack.c.b16 %v3071, %v3070
        %v3085 = vpack.c.b16 %v3073, %v3072
        %v3086 = vpack.c.b16 %v3075, %v3074
        %v3087 = vpack.c.b16 %v3077, %v3076
        %v3088 = vpack.c.b16 %v3079, %v3078
        %v3089 = vpack.c.b16 %v3081, %v3080
        %3098 = vmatprep.subr.bf16.mxu0 0
        %3099 = vmatpush1.bf16.msra.mxu0 %v3089
        %3100 = vmatprep.subr.bf16.mxu0 0
        %3101 = vmatpush1.bf16.msra.mxu0 %v3088
        %3102 = vmatprep.subr.bf16.mxu0 0
        %3103 = vmatpush1.bf16.msra.mxu0 %v3087
        %3104 = vmatprep.subr.bf16.mxu0 0
        %3105 = vmatpush1.bf16.msra.mxu0 %v3086
        %3106 = vmatprep.subr.bf16.mxu0 0
        %3107 = vmatpush1.bf16.msra.mxu0 %v3085
        %3108 = vmatprep.subr.bf16.mxu0 0
        %3109 = vmatpush1.bf16.msra.mxu0 %v3084
        %3110 = vmatprep.subr.bf16.mxu0 0
        %3111 = vmatpush1.bf16.msra.mxu0 %v3083
        %3112 = vmatprep.subr.bf16.mxu0 0
        %3113 = vmatpush1.bf16.msra.mxu0 %v3082
        %3114 = vmatprep.subr.bf16.mxu0 0
        %3115 = vmatpush2.bf16.msra.mxu0 0
        %3116 = vmatprep.subr.bf16.mxu0 0
        %3117 = vmatpush2.bf16.msra.mxu0 0
        %3118 = vmatprep.subr.bf16.mxu0 0
        %3119 = vmatpush2.bf16.msra.mxu0 0
        %3120 = vmatprep.subr.bf16.mxu0 0
        %3121 = vmatpush2.bf16.msra.mxu0 0
        %3122 = vmatprep.subr.bf16.mxu0 0
        %3123 = vmatpush2.bf16.msra.mxu0 0
        %3124 = vmatprep.subr.bf16.mxu0 0
        %3125 = vmatpush2.bf16.msra.mxu0 0
        %3126 = vmatprep.subr.bf16.mxu0 0
        %3127 = vmatpush2.bf16.msra.mxu0 0
        %3128 = vmatprep.subr.bf16.mxu0 0
        %3129 = vmatpush2.bf16.msra.mxu0 0
        %3130 = vmatprep.mubr.bf16.mxu0 0
        %3131 = vmatmul.mubr.bf16.gmra.mxu0 %v3048
        %v3132 = vpop.f32.mrf.mxu0
        %v3133 = vadd.f32 0.0, %v3132
        %v3134 = vpop.f32.mrf.mxu0
        %v3135 = vpop.f32.mrf.mxu0
        %v3136 = vadd.f32 0.0, %v3135
        %v3137 = vpop.f32.mrf.mxu0
        %3138 = vmatprep.mubr.bf16.mxu0 0
        %3139 = vmatmul.mubr.bf16.gmra.mxu0 %v3049
        %v3140 = vpop.f32.mrf.mxu0
        %v3141 = vadd.f32 0.0, %v3140
        %v3142 = vpop.f32.mrf.mxu0
        %v3143 = vpop.f32.mrf.mxu0
        %v3144 = vadd.f32 0.0, %v3143
        %v3145 = vpop.f32.mrf.mxu0
        %3146 = vdwg.mxu0
        %v3147 = vld [vmem:[%s9] sm:$0xf]
        %v3148 = vld [vmem:[%s9 + $0x4] sm:$0xf]
        %v3149 = vld [vmem:[%s9 + $0x8] sm:$0xf]
        %v3150 = vld [vmem:[%s9 + $0xc] sm:$0xf]
        %v3151 = vpack.c.bf16 %v2022, %v2019
        %v3152 = vpack.c.bf16 %v2030, %v2027
        %v3153 = vpack.c.bf16 %v3136, %v3133
        %v3154 = vpack.c.bf16 %v3144, %v3141
        %s3155 = scalar_lea.vmem %s11, 64
        %v3156 = vld [vmem:[%s3155] sm:$0xff]
        %v3157 = vld [vmem:[%s3155 + $0x8] sm:$0xff]
        %v3158 = vld [vmem:[%s3155 + $0x10] sm:$0xff]
        %v3159 = vld [vmem:[%s3155 + $0x18] sm:$0xff]
        %3161 = vset.pattern.permute.xlu0 0
        %3162 = vperm.xlu0 %3161, %v3156
        %v3163 = vpop.permute.xlu0 %3162
        %3166 = vset.pattern.permute.xlu0 0
        %3167 = vperm.xlu0 %3166, %v3157
        %v3168 = vpop.permute.xlu0 %3167
        %3171 = vset.pattern.permute.xlu0 0
        %3172 = vperm.xlu0 %3171, %v3158
        %v3173 = vpop.permute.xlu0 %3172
        %3176 = vset.pattern.permute.xlu0 0
        %3177 = vperm.xlu0 %3176, %v3159
        %v3178 = vpop.permute.xlu0 %3177
        %v3184 = vunpack.c.l.b16 %v3147
        %v3185 = vunpack.c.l.b16 %v3148
        %v3186 = vunpack.c.l.b16 %v3149
        %v3187 = vunpack.c.l.b16 %v3150
        %v3188 = vpack.c.b16 %v3185, %v3184
        %v3189 = vpack.c.b16 %v3187, %v3186
        %v3191 = vsel %vm2963, %v3188, 0
        %v3194 = vsel %vm2963, %v3189, 0
        %3196 = vmatprep.subr.bf16.mxu0 0
        %3197 = vmatpush1.bf16.msra.mxu0 0
        %3198 = vmatprep.subr.bf16.mxu0 0
        %3199 = vmatpush1.bf16.msra.mxu0 0
        %3200 = vmatprep.subr.bf16.mxu0 0
        %3201 = vmatpush1.bf16.msra.mxu0 %v3154
        %3202 = vmatprep.subr.bf16.mxu0 0
        %3203 = vmatpush1.bf16.msra.mxu0 %v3153
        %3204 = vmatprep.subr.bf16.mxu0 0
        %3205 = vmatpush1.bf16.msra.mxu0 %v2822
        %3206 = vmatprep.subr.bf16.mxu0 0
        %3207 = vmatpush1.bf16.msra.mxu0 %v2821
        %3208 = vmatprep.subr.bf16.mxu0 0
        %3209 = vmatpush1.bf16.msra.mxu0 %v3152
        %3210 = vmatprep.subr.bf16.mxu0 0
        %3211 = vmatpush1.bf16.msra.mxu0 %v3151
        %3212 = vmatprep.subr.bf16.mxu0 0
        %3213 = vmatpush2.bf16.msra.mxu0 0
        %3214 = vmatprep.subr.bf16.mxu0 0
        %3215 = vmatpush2.bf16.msra.mxu0 0
        %3216 = vmatprep.subr.bf16.mxu0 0
        %3217 = vmatpush2.bf16.msra.mxu0 0
        %3218 = vmatprep.subr.bf16.mxu0 0
        %3219 = vmatpush2.bf16.msra.mxu0 0
        %3220 = vmatprep.subr.bf16.mxu0 0
        %3221 = vmatpush2.bf16.msra.mxu0 0
        %3222 = vmatprep.subr.bf16.mxu0 0
        %3223 = vmatpush2.bf16.msra.mxu0 0
        %3224 = vmatprep.subr.bf16.mxu0 0
        %3225 = vmatpush2.bf16.msra.mxu0 0
        %3226 = vmatprep.subr.bf16.mxu0 0
        %3227 = vmatpush2.bf16.msra.mxu0 0
        %3228 = vmatprep.mubr.bf16.mxu0 0
        %3229 = vmatmul.mubr.bf16.gmra.mxu0 %v3191
        %v3230 = vpop.f32.mrf.mxu0
        %v3231 = vadd.f32 %v3163, %v3230
        %v3232 = vpop.f32.mrf.mxu0
        %v3233 = vpop.f32.mrf.mxu0
        %v3234 = vadd.f32 %v3168, %v3233
        %v3235 = vpop.f32.mrf.mxu0
        %3236 = vmatprep.mubr.bf16.mxu0 0
        %3237 = vmatmul.mubr.bf16.gmra.mxu0 %v3194
        %v3238 = vpop.f32.mrf.mxu0
        %v3239 = vadd.f32 %v3173, %v3238
        %v3240 = vpop.f32.mrf.mxu0
        %v3241 = vpop.f32.mrf.mxu0
        %v3242 = vadd.f32 %v3178, %v3241
        %v3243 = vpop.f32.mrf.mxu0
        %3244 = vdwg.mxu0
        %vm3245 = vcmp.gt.f32.partialorder %v3231, 0.0
        %vm3246 = vcmp.gt.f32.partialorder %v3234, 0.0
        %vm3247 = vcmp.gt.f32.partialorder %v3239, 0.0
        %vm3248 = vcmp.gt.f32.partialorder %v3242, 0.0
        %v3249 = vmul.f32 %v3231, 0.25
        %v3250 = vmul.f32 %v3234, 0.25
        %v3251 = vmul.f32 %v3239, 0.25
        %v3252 = vmul.f32 %v3242, 0.25
        %v3253 = vsel %vm3245, %v3231, %v3249
        %v3254 = vsel %vm3246, %v3234, %v3250
        %v3255 = vsel %vm3247, %v3239, %v3251
        %v3256 = vsel %vm3248, %v3242, %v3252
        %v3257 = vld [vmem:[%s10] sm:$0xf]
        %v3258 = vld [vmem:[%s10 + $0x4] sm:$0xf]
        %v3259 = vld [vmem:[%s10 + $0x8] sm:$0xf]
        %v3260 = vld [vmem:[%s10 + $0xc] sm:$0xf]
        %v3261 = vpack.c.bf16 %v2568, %v2565
        %v3262 = vpack.c.bf16 %v2576, %v2573
        %s3263 = scalar_lea.vmem %s11, 96
        %v3264 = vld [vmem:[%s3263] sm:$0xff]
        %v3265 = vld [vmem:[%s3263 + $0x8] sm:$0xff]
        %v3266 = vld [vmem:[%s3263 + $0x10] sm:$0xff]
        %v3267 = vld [vmem:[%s3263 + $0x18] sm:$0xff]
        %3269 = vset.pattern.permute.xlu0 0
        %3270 = vperm.xlu0 %3269, %v3264
        %v3271 = vpop.permute.xlu0 %3270
        %3274 = vset.pattern.permute.xlu0 0
        %3275 = vperm.xlu0 %3274, %v3265
        %v3276 = vpop.permute.xlu0 %3275
        %3279 = vset.pattern.permute.xlu0 0
        %3280 = vperm.xlu0 %3279, %v3266
        %v3281 = vpop.permute.xlu0 %3280
        %3284 = vset.pattern.permute.xlu0 0
        %3285 = vperm.xlu0 %3284, %v3267
        %v3286 = vpop.permute.xlu0 %3285
        %v3292 = vunpack.c.l.b16 %v3257
        %v3293 = vunpack.c.l.b16 %v3258
        %v3294 = vunpack.c.l.b16 %v3259
        %v3295 = vunpack.c.l.b16 %v3260
        %v3296 = vpack.c.b16 %v3293, %v3292
        %v3297 = vpack.c.b16 %v3295, %v3294
        %v3299 = vsel %vm2736, %v3296, 0
        %v3302 = vsel %vm2736, %v3297, 0
        %3304 = vmatprep.subr.bf16.mxu0 0
        %3305 = vmatpush1.bf16.msra.mxu0 0
        %3306 = vmatprep.subr.bf16.mxu0 0
        %3307 = vmatpush1.bf16.msra.mxu0 0
        %3308 = vmatprep.subr.bf16.mxu0 0
        %3309 = vmatpush1.bf16.msra.mxu0 0
        %3310 = vmatprep.subr.bf16.mxu0 0
        %3311 = vmatpush1.bf16.msra.mxu0 0
        %3312 = vmatprep.subr.bf16.mxu0 0
        %3313 = vmatpush1.bf16.msra.mxu0 %v3049
        %3314 = vmatprep.subr.bf16.mxu0 0
        %3315 = vmatpush1.bf16.msra.mxu0 %v3048
        %3316 = vmatprep.subr.bf16.mxu0 0
        %3317 = vmatpush1.bf16.msra.mxu0 %v3262
        %3318 = vmatprep.subr.bf16.mxu0 0
        %3319 = vmatpush1.bf16.msra.mxu0 %v3261
        %3320 = vmatprep.subr.bf16.mxu0 0
        %3321 = vmatpush2.bf16.msra.mxu0 0
        %3322 = vmatprep.subr.bf16.mxu0 0
        %3323 = vmatpush2.bf16.msra.mxu0 0
        %3324 = vmatprep.subr.bf16.mxu0 0
        %3325 = vmatpush2.bf16.msra.mxu0 0
        %3326 = vmatprep.subr.bf16.mxu0 0
        %3327 = vmatpush2.bf16.msra.mxu0 0
        %3328 = vmatprep.subr.bf16.mxu0 0
        %3329 = vmatpush2.bf16.msra.mxu0 0
        %3330 = vmatprep.subr.bf16.mxu0 0
        %3331 = vmatpush2.bf16.msra.mxu0 0
        %3332 = vmatprep.subr.bf16.mxu0 0
        %3333 = vmatpush2.bf16.msra.mxu0 0
        %3334 = vmatprep.subr.bf16.mxu0 0
        %3335 = vmatpush2.bf16.msra.mxu0 0
        %3336 = vmatprep.mubr.bf16.mxu0 0
        %3337 = vmatmul.mubr.bf16.gmra.mxu0 %v3299
        %v3338 = vpop.f32.mrf.mxu0
        %v3339 = vadd.f32 %v3271, %v3338
        %v3340 = vpop.f32.mrf.mxu0
        %v3341 = vpop.f32.mrf.mxu0
        %v3342 = vadd.f32 %v3276, %v3341
        %v3343 = vpop.f32.mrf.mxu0
        %3344 = vmatprep.mubr.bf16.mxu0 0
        %3345 = vmatmul.mubr.bf16.gmra.mxu0 %v3302
        %v3346 = vpop.f32.mrf.mxu0
        %v3347 = vadd.f32 %v3281, %v3346
        %v3348 = vpop.f32.mrf.mxu0
        %v3349 = vpop.f32.mrf.mxu0
        %v3350 = vadd.f32 %v3286, %v3349
        %v3351 = vpop.f32.mrf.mxu0
        %3352 = vdwg.mxu0
        %vm3353 = vcmp.gt.f32.partialorder %v3339, 0.0
        %vm3354 = vcmp.gt.f32.partialorder %v3342, 0.0
        %vm3355 = vcmp.gt.f32.partialorder %v3347, 0.0
        %vm3356 = vcmp.gt.f32.partialorder %v3350, 0.0
        %v3357 = vmul.f32 %v3339, 0.25
        %v3358 = vmul.f32 %v3342, 0.25
        %v3359 = vmul.f32 %v3347, 0.25
        %v3360 = vmul.f32 %v3350, 0.25
        %v3361 = vsel %vm3353, %v3339, %v3357
        %v3362 = vsel %vm3354, %v3342, %v3358
        %v3363 = vsel %vm3355, %v3347, %v3359
        %v3364 = vsel %vm3356, %v3350, %v3360
        %v3365 = vld [vmem:[%s18] sm:$0xf]
        %v3366 = vld [vmem:[%s18 + $0x4] sm:$0xf]
        %v3367 = vld [vmem:[%s18 + $0x8] sm:$0xf]
        %v3368 = vld [vmem:[%s18 + $0xc] sm:$0xf]
        %v3369 = vld [vmem:[%s18 + $0x10] sm:$0xf]
        %v3370 = vld [vmem:[%s18 + $0x14] sm:$0xf]
        %v3371 = vld [vmem:[%s18 + $0x18] sm:$0xf]
        %v3372 = vld [vmem:[%s18 + $0x1c] sm:$0xf]
        %v3373 = vld [vmem:[%s18 + $0x20] sm:$0xf]
        %v3374 = vld [vmem:[%s18 + $0x24] sm:$0xf]
        %v3375 = vld [vmem:[%s18 + $0x28] sm:$0xf]
        %v3376 = vld [vmem:[%s18 + $0x2c] sm:$0xf]
        %v3377 = vld [vmem:[%s18 + $0x30] sm:$0xf]
        %v3378 = vld [vmem:[%s18 + $0x34] sm:$0xf]
        %v3379 = vld [vmem:[%s18 + $0x38] sm:$0xf]
        %v3380 = vld [vmem:[%s18 + $0x3c] sm:$0xf]
        %v3381 = vpack.c.bf16 %v3028, %v3027
        %v3382 = vpack.c.bf16 %v3030, %v3029
        %v3399 = vunpack.c.l.b16 %v3365
        %v3400 = vunpack.c.l.b16 %v3366
        %v3401 = vunpack.c.l.b16 %v3367
        %v3402 = vunpack.c.l.b16 %v3368
        %v3403 = vunpack.c.l.b16 %v3369
        %v3404 = vunpack.c.l.b16 %v3370
        %v3405 = vunpack.c.l.b16 %v3371
        %v3406 = vunpack.c.l.b16 %v3372
        %v3407 = vunpack.c.l.b16 %v3373
        %v3408 = vunpack.c.l.b16 %v3374
        %v3409 = vunpack.c.l.b16 %v3375
        %v3410 = vunpack.c.l.b16 %v3376
        %v3411 = vunpack.c.l.b16 %v3377
        %v3412 = vunpack.c.l.b16 %v3378
        %v3413 = vunpack.c.l.b16 %v3379
        %v3414 = vunpack.c.l.b16 %v3380
        %v3415 = vpack.c.b16 %v3400, %v3399
        %v3416 = vpack.c.b16 %v3402, %v3401
        %v3417 = vpack.c.b16 %v3404, %v3403
        %v3418 = vpack.c.b16 %v3406, %v3405
        %v3419 = vpack.c.b16 %v3408, %v3407
        %v3420 = vpack.c.b16 %v3410, %v3409
        %v3421 = vpack.c.b16 %v3412, %v3411
        %v3422 = vpack.c.b16 %v3414, %v3413
        %3431 = vmatprep.subr.bf16.mxu0 0
        %3432 = vmatpush1.bf16.msra.mxu0 %v3422
        %3433 = vmatprep.subr.bf16.mxu0 0
        %3434 = vmatpush1.bf16.msra.mxu0 %v3421
        %3435 = vmatprep.subr.bf16.mxu0 0
        %3436 = vmatpush1.bf16.msra.mxu0 %v3420
        %3437 = vmatprep.subr.bf16.mxu0 0
        %3438 = vmatpush1.bf16.msra.mxu0 %v3419
        %3439 = vmatprep.subr.bf16.mxu0 0
        %3440 = vmatpush1.bf16.msra.mxu0 %v3418
        %3441 = vmatprep.subr.bf16.mxu0 0
        %3442 = vmatpush1.bf16.msra.mxu0 %v3417
        %3443 = vmatprep.subr.bf16.mxu0 0
        %3444 = vmatpush1.bf16.msra.mxu0 %v3416
        %3445 = vmatprep.subr.bf16.mxu0 0
        %3446 = vmatpush1.bf16.msra.mxu0 %v3415
        %3447 = vmatprep.subr.bf16.mxu0 0
        %3448 = vmatpush2.bf16.msra.mxu0 0
        %3449 = vmatprep.subr.bf16.mxu0 0
        %3450 = vmatpush2.bf16.msra.mxu0 0
        %3451 = vmatprep.subr.bf16.mxu0 0
        %3452 = vmatpush2.bf16.msra.mxu0 0
        %3453 = vmatprep.subr.bf16.mxu0 0
        %3454 = vmatpush2.bf16.msra.mxu0 0
        %3455 = vmatprep.subr.bf16.mxu0 0
        %3456 = vmatpush2.bf16.msra.mxu0 0
        %3457 = vmatprep.subr.bf16.mxu0 0
        %3458 = vmatpush2.bf16.msra.mxu0 0
        %3459 = vmatprep.subr.bf16.mxu0 0
        %3460 = vmatpush2.bf16.msra.mxu0 0
        %3461 = vmatprep.subr.bf16.mxu0 0
        %3462 = vmatpush2.bf16.msra.mxu0 0
        %3463 = vmatprep.mubr.bf16.mxu0 0
        %3464 = vmatmul.mubr.bf16.gmra.mxu0 %v3381
        %v3465 = vpop.f32.mrf.mxu0
        %v3466 = vadd.f32 0.0, %v3465
        %v3467 = vpop.f32.mrf.mxu0
        %v3468 = vpop.f32.mrf.mxu0
        %v3469 = vadd.f32 0.0, %v3468
        %v3470 = vpop.f32.mrf.mxu0
        %3471 = vmatprep.mubr.bf16.mxu0 0
        %3472 = vmatmul.mubr.bf16.gmra.mxu0 %v3382
        %v3473 = vpop.f32.mrf.mxu0
        %v3474 = vadd.f32 0.0, %v3473
        %v3475 = vpop.f32.mrf.mxu0
        %v3476 = vpop.f32.mrf.mxu0
        %v3477 = vadd.f32 0.0, %v3476
        %v3478 = vpop.f32.mrf.mxu0
        %3479 = vdwg.mxu0
        %s3480 = scalar_lea.vmem %s18, 64
        %v3481 = vld [vmem:[%s3480] sm:$0xf]
        %v3482 = vld [vmem:[%s3480 + $0x4] sm:$0xf]
        %v3483 = vld [vmem:[%s3480 + $0x8] sm:$0xf]
        %v3484 = vld [vmem:[%s3480 + $0xc] sm:$0xf]
        %v3485 = vld [vmem:[%s3480 + $0x10] sm:$0xf]
        %v3486 = vld [vmem:[%s3480 + $0x14] sm:$0xf]
        %v3487 = vld [vmem:[%s3480 + $0x18] sm:$0xf]
        %v3488 = vld [vmem:[%s3480 + $0x1c] sm:$0xf]
        %v3489 = vld [vmem:[%s3480 + $0x20] sm:$0xf]
        %v3490 = vld [vmem:[%s3480 + $0x24] sm:$0xf]
        %v3491 = vld [vmem:[%s3480 + $0x28] sm:$0xf]
        %v3492 = vld [vmem:[%s3480 + $0x2c] sm:$0xf]
        %v3493 = vld [vmem:[%s3480 + $0x30] sm:$0xf]
        %v3494 = vld [vmem:[%s3480 + $0x34] sm:$0xf]
        %v3495 = vld [vmem:[%s3480 + $0x38] sm:$0xf]
        %v3496 = vld [vmem:[%s3480 + $0x3c] sm:$0xf]
        %v3497 = vpack.c.bf16 %v3254, %v3253
        %v3498 = vpack.c.bf16 %v3256, %v3255
        %v3515 = vunpack.c.l.b16 %v3481
        %v3516 = vunpack.c.l.b16 %v3482
        %v3517 = vunpack.c.l.b16 %v3483
        %v3518 = vunpack.c.l.b16 %v3484
        %v3519 = vunpack.c.l.b16 %v3485
        %v3520 = vunpack.c.l.b16 %v3486
        %v3521 = vunpack.c.l.b16 %v3487
        %v3522 = vunpack.c.l.b16 %v3488
        %v3523 = vunpack.c.l.b16 %v3489
        %v3524 = vunpack.c.l.b16 %v3490
        %v3525 = vunpack.c.l.b16 %v3491
        %v3526 = vunpack.c.l.b16 %v3492
        %v3527 = vunpack.c.l.b16 %v3493
        %v3528 = vunpack.c.l.b16 %v3494
        %v3529 = vunpack.c.l.b16 %v3495
        %v3530 = vunpack.c.l.b16 %v3496
        %v3531 = vpack.c.b16 %v3516, %v3515
        %v3532 = vpack.c.b16 %v3518, %v3517
        %v3533 = vpack.c.b16 %v3520, %v3519
        %v3534 = vpack.c.b16 %v3522, %v3521
        %v3535 = vpack.c.b16 %v3524, %v3523
        %v3536 = vpack.c.b16 %v3526, %v3525
        %v3537 = vpack.c.b16 %v3528, %v3527
        %v3538 = vpack.c.b16 %v3530, %v3529
        %3547 = vmatprep.subr.bf16.mxu0 0
        %3548 = vmatpush1.bf16.msra.mxu0 %v3538
        %3549 = vmatprep.subr.bf16.mxu0 0
        %3550 = vmatpush1.bf16.msra.mxu0 %v3537
        %3551 = vmatprep.subr.bf16.mxu0 0
        %3552 = vmatpush1.bf16.msra.mxu0 %v3536
        %3553 = vmatprep.subr.bf16.mxu0 0
        %3554 = vmatpush1.bf16.msra.mxu0 %v3535
        %3555 = vmatprep.subr.bf16.mxu0 0
        %3556 = vmatpush1.bf16.msra.mxu0 %v3534
        %3557 = vmatprep.subr.bf16.mxu0 0
        %3558 = vmatpush1.bf16.msra.mxu0 %v3533
        %3559 = vmatprep.subr.bf16.mxu0 0
        %3560 = vmatpush1.bf16.msra.mxu0 %v3532
        %3561 = vmatprep.subr.bf16.mxu0 0
        %3562 = vmatpush1.bf16.msra.mxu0 %v3531
        %3563 = vmatprep.subr.bf16.mxu0 0
        %3564 = vmatpush2.bf16.msra.mxu0 0
        %3565 = vmatprep.subr.bf16.mxu0 0
        %3566 = vmatpush2.bf16.msra.mxu0 0
        %3567 = vmatprep.subr.bf16.mxu0 0
        %3568 = vmatpush2.bf16.msra.mxu0 0
        %3569 = vmatprep.subr.bf16.mxu0 0
        %3570 = vmatpush2.bf16.msra.mxu0 0
        %3571 = vmatprep.subr.bf16.mxu0 0
        %3572 = vmatpush2.bf16.msra.mxu0 0
        %3573 = vmatprep.subr.bf16.mxu0 0
        %3574 = vmatpush2.bf16.msra.mxu0 0
        %3575 = vmatprep.subr.bf16.mxu0 0
        %3576 = vmatpush2.bf16.msra.mxu0 0
        %3577 = vmatprep.subr.bf16.mxu0 0
        %3578 = vmatpush2.bf16.msra.mxu0 0
        %3579 = vmatprep.mubr.bf16.mxu0 0
        %3580 = vmatmul.mubr.bf16.gmra.mxu0 %v3497
        %v3581 = vpop.f32.mrf.mxu0
        %v3582 = vadd.f32 0.0, %v3581
        %v3583 = vpop.f32.mrf.mxu0
        %v3584 = vpop.f32.mrf.mxu0
        %v3585 = vadd.f32 0.0, %v3584
        %v3586 = vpop.f32.mrf.mxu0
        %3587 = vmatprep.mubr.bf16.mxu0 0
        %3588 = vmatmul.mubr.bf16.gmra.mxu0 %v3498
        %v3589 = vpop.f32.mrf.mxu0
        %v3590 = vadd.f32 0.0, %v3589
        %v3591 = vpop.f32.mrf.mxu0
        %v3592 = vpop.f32.mrf.mxu0
        %v3593 = vadd.f32 0.0, %v3592
        %v3594 = vpop.f32.mrf.mxu0
        %3595 = vdwg.mxu0
        %s3596 = scalar_lea.vmem %s18, 128
        %v3597 = vld [vmem:[%s3596] sm:$0xf]
        %v3598 = vld [vmem:[%s3596 + $0x4] sm:$0xf]
        %v3599 = vld [vmem:[%s3596 + $0x8] sm:$0xf]
        %v3600 = vld [vmem:[%s3596 + $0xc] sm:$0xf]
        %v3601 = vld [vmem:[%s3596 + $0x10] sm:$0xf]
        %v3602 = vld [vmem:[%s3596 + $0x14] sm:$0xf]
        %v3603 = vld [vmem:[%s3596 + $0x18] sm:$0xf]
        %v3604 = vld [vmem:[%s3596 + $0x1c] sm:$0xf]
        %v3605 = vld [vmem:[%s3596 + $0x20] sm:$0xf]
        %v3606 = vld [vmem:[%s3596 + $0x24] sm:$0xf]
        %v3607 = vld [vmem:[%s3596 + $0x28] sm:$0xf]
        %v3608 = vld [vmem:[%s3596 + $0x2c] sm:$0xf]
        %v3609 = vld [vmem:[%s3596 + $0x30] sm:$0xf]
        %v3610 = vld [vmem:[%s3596 + $0x34] sm:$0xf]
        %v3611 = vld [vmem:[%s3596 + $0x38] sm:$0xf]
        %v3612 = vld [vmem:[%s3596 + $0x3c] sm:$0xf]
        %v3613 = vpack.c.bf16 %v3362, %v3361
        %v3614 = vpack.c.bf16 %v3364, %v3363
        %v3631 = vunpack.c.l.b16 %v3597
        %v3632 = vunpack.c.l.b16 %v3598
        %v3633 = vunpack.c.l.b16 %v3599
        %v3634 = vunpack.c.l.b16 %v3600
        %v3635 = vunpack.c.l.b16 %v3601
        %v3636 = vunpack.c.l.b16 %v3602
        %v3637 = vunpack.c.l.b16 %v3603
        %v3638 = vunpack.c.l.b16 %v3604
        %v3639 = vunpack.c.l.b16 %v3605
        %v3640 = vunpack.c.l.b16 %v3606
        %v3641 = vunpack.c.l.b16 %v3607
        %v3642 = vunpack.c.l.b16 %v3608
        %v3643 = vunpack.c.l.b16 %v3609
        %v3644 = vunpack.c.l.b16 %v3610
        %v3645 = vunpack.c.l.b16 %v3611
        %v3646 = vunpack.c.l.b16 %v3612
        %v3647 = vpack.c.b16 %v3632, %v3631
        %v3648 = vpack.c.b16 %v3634, %v3633
        %v3649 = vpack.c.b16 %v3636, %v3635
        %v3650 = vpack.c.b16 %v3638, %v3637
        %v3651 = vpack.c.b16 %v3640, %v3639
        %v3652 = vpack.c.b16 %v3642, %v3641
        %v3653 = vpack.c.b16 %v3644, %v3643
        %v3654 = vpack.c.b16 %v3646, %v3645
        %3663 = vmatprep.subr.bf16.mxu0 0
        %3664 = vmatpush1.bf16.msra.mxu0 %v3654
        %3665 = vmatprep.subr.bf16.mxu0 0
        %3666 = vmatpush1.bf16.msra.mxu0 %v3653
        %3667 = vmatprep.subr.bf16.mxu0 0
        %3668 = vmatpush1.bf16.msra.mxu0 %v3652
        %3669 = vmatprep.subr.bf16.mxu0 0
        %3670 = vmatpush1.bf16.msra.mxu0 %v3651
        %3671 = vmatprep.subr.bf16.mxu0 0
        %3672 = vmatpush1.bf16.msra.mxu0 %v3650
        %3673 = vmatprep.subr.bf16.mxu0 0
        %3674 = vmatpush1.bf16.msra.mxu0 %v3649
        %3675 = vmatprep.subr.bf16.mxu0 0
        %3676 = vmatpush1.bf16.msra.mxu0 %v3648
        %3677 = vmatprep.subr.bf16.mxu0 0
        %3678 = vmatpush1.bf16.msra.mxu0 %v3647
        %3679 = vmatprep.subr.bf16.mxu0 0
        %3680 = vmatpush2.bf16.msra.mxu0 0
        %3681 = vmatprep.subr.bf16.mxu0 0
        %3682 = vmatpush2.bf16.msra.mxu0 0
        %3683 = vmatprep.subr.bf16.mxu0 0
        %3684 = vmatpush2.bf16.msra.mxu0 0
        %3685 = vmatprep.subr.bf16.mxu0 0
        %3686 = vmatpush2.bf16.msra.mxu0 0
        %3687 = vmatprep.subr.bf16.mxu0 0
        %3688 = vmatpush2.bf16.msra.mxu0 0
        %3689 = vmatprep.subr.bf16.mxu0 0
        %3690 = vmatpush2.bf16.msra.mxu0 0
        %3691 = vmatprep.subr.bf16.mxu0 0
        %3692 = vmatpush2.bf16.msra.mxu0 0
        %3693 = vmatprep.subr.bf16.mxu0 0
        %3694 = vmatpush2.bf16.msra.mxu0 0
        %3695 = vmatprep.mubr.bf16.mxu0 0
        %3696 = vmatmul.mubr.bf16.gmra.mxu0 %v3613
        %v3697 = vpop.f32.mrf.mxu0
        %v3698 = vadd.f32 0.0, %v3697
        %v3699 = vpop.f32.mrf.mxu0
        %v3700 = vpop.f32.mrf.mxu0
        %v3701 = vadd.f32 0.0, %v3700
        %v3702 = vpop.f32.mrf.mxu0
        %3703 = vmatprep.mubr.bf16.mxu0 0
        %3704 = vmatmul.mubr.bf16.gmra.mxu0 %v3614
        %v3705 = vpop.f32.mrf.mxu0
        %v3706 = vadd.f32 0.0, %v3705
        %v3707 = vpop.f32.mrf.mxu0
        %v3708 = vpop.f32.mrf.mxu0
        %v3709 = vadd.f32 0.0, %v3708
        %v3710 = vpop.f32.mrf.mxu0
        %3711 = vdwg.mxu0
        %v3712 = vld [vmem:[%s12] sm:$0xf]
        %v3713 = vld [vmem:[%s12 + $0x4] sm:$0xf]
        %v3714 = vld [vmem:[%s12 + $0x8] sm:$0xf]
        %v3715 = vld [vmem:[%s12 + $0xc] sm:$0xf]
        %v3716 = vpack.c.bf16 %v2801, %v2800
        %v3717 = vpack.c.bf16 %v2803, %v2802
        %v3718 = vpack.c.bf16 %v3469, %v3466
        %v3719 = vpack.c.bf16 %v3477, %v3474
        %v3720 = vpack.c.bf16 %v3585, %v3582
        %v3721 = vpack.c.bf16 %v3593, %v3590
        %v3722 = vpack.c.bf16 %v3701, %v3698
        %v3723 = vpack.c.bf16 %v3709, %v3706
        %v3724 = vld [vmem:[%s13] sm:$0xff]
        %v3725 = vld [vmem:[%s13 + $0x8] sm:$0xff]
        %v3726 = vld [vmem:[%s13 + $0x10] sm:$0xff]
        %v3727 = vld [vmem:[%s13 + $0x18] sm:$0xff]
        %3729 = vset.pattern.permute.xlu0 0
        %3730 = vperm.xlu0 %3729, %v3724
        %v3731 = vpop.permute.xlu0 %3730
        %3734 = vset.pattern.permute.xlu0 0
        %3735 = vperm.xlu0 %3734, %v3725
        %v3736 = vpop.permute.xlu0 %3735
        %3739 = vset.pattern.permute.xlu0 0
        %3740 = vperm.xlu0 %3739, %v3726
        %v3741 = vpop.permute.xlu0 %3740
        %3744 = vset.pattern.permute.xlu0 0
        %3745 = vperm.xlu0 %3744, %v3727
        %v3746 = vpop.permute.xlu0 %3745
        %v3752 = vunpack.c.l.b16 %v3712
        %v3753 = vunpack.c.l.b16 %v3713
        %v3754 = vunpack.c.l.b16 %v3714
        %v3755 = vunpack.c.l.b16 %v3715
        %v3756 = vpack.c.b16 %v3753, %v3752
        %v3757 = vpack.c.b16 %v3755, %v3754
        %3760 = vmatprep.subr.bf16.mxu0 0
        %3761 = vmatpush1.bf16.msra.mxu0 %v3723
        %3762 = vmatprep.subr.bf16.mxu0 0
        %3763 = vmatpush1.bf16.msra.mxu0 %v3722
        %3764 = vmatprep.subr.bf16.mxu0 0
        %3765 = vmatpush1.bf16.msra.mxu0 %v3721
        %3766 = vmatprep.subr.bf16.mxu0 0
        %3767 = vmatpush1.bf16.msra.mxu0 %v3720
        %3768 = vmatprep.subr.bf16.mxu0 0
        %3769 = vmatpush1.bf16.msra.mxu0 %v3719
        %3770 = vmatprep.subr.bf16.mxu0 0
        %3771 = vmatpush1.bf16.msra.mxu0 %v3718
        %3772 = vmatprep.subr.bf16.mxu0 0
        %3773 = vmatpush1.bf16.msra.mxu0 %v3717
        %3774 = vmatprep.subr.bf16.mxu0 0
        %3775 = vmatpush1.bf16.msra.mxu0 %v3716
        %3776 = vmatprep.subr.bf16.mxu0 0
        %3777 = vmatpush2.bf16.msra.mxu0 0
        %3778 = vmatprep.subr.bf16.mxu0 0
        %3779 = vmatpush2.bf16.msra.mxu0 0
        %3780 = vmatprep.subr.bf16.mxu0 0
        %3781 = vmatpush2.bf16.msra.mxu0 0
        %3782 = vmatprep.subr.bf16.mxu0 0
        %3783 = vmatpush2.bf16.msra.mxu0 0
        %3784 = vmatprep.subr.bf16.mxu0 0
        %3785 = vmatpush2.bf16.msra.mxu0 0
        %3786 = vmatprep.subr.bf16.mxu0 0
        %3787 = vmatpush2.bf16.msra.mxu0 0
        %3788 = vmatprep.subr.bf16.mxu0 0
        %3789 = vmatpush2.bf16.msra.mxu0 0
        %3790 = vmatprep.subr.bf16.mxu0 0
        %3791 = vmatpush2.bf16.msra.mxu0 0
        %3792 = vmatprep.mubr.bf16.mxu0 0
        %3793 = vmatmul.mubr.bf16.gmra.mxu0 %v3756
        %v3794 = vpop.f32.mrf.mxu0
        %v3795 = vadd.f32 %v3731, %v3794
        %v3796 = vpop.f32.mrf.mxu0
        %v3797 = vpop.f32.mrf.mxu0
        %v3798 = vadd.f32 %v3736, %v3797
        %v3799 = vpop.f32.mrf.mxu0
        %3800 = vmatprep.mubr.bf16.mxu0 0
        %3801 = vmatmul.mubr.bf16.gmra.mxu0 %v3757
        %v3802 = vpop.f32.mrf.mxu0
        %v3803 = vadd.f32 %v3741, %v3802
        %v3804 = vpop.f32.mrf.mxu0
        %v3805 = vpop.f32.mrf.mxu0
        %v3806 = vadd.f32 %v3746, %v3805
        %v3807 = vpop.f32.mrf.mxu0
        %3808 = vdwg.mxu0
        %vm3809 = vcmp.gt.f32.partialorder %v3795, 0.0
        %vm3810 = vcmp.gt.f32.partialorder %v3798, 0.0
        %vm3811 = vcmp.gt.f32.partialorder %v3803, 0.0
        %vm3812 = vcmp.gt.f32.partialorder %v3806, 0.0
        %v3813 = vmul.f32 %v3795, 0.25
        %v3814 = vmul.f32 %v3798, 0.25
        %v3815 = vmul.f32 %v3803, 0.25
        %v3816 = vmul.f32 %v3806, 0.25
        %v3817 = vsel %vm3809, %v3795, %v3813
        %v3818 = vsel %vm3810, %v3798, %v3814
        %v3819 = vsel %vm3811, %v3803, %v3815
        %v3820 = vsel %vm3812, %v3806, %v3816
        %v3821 = vld [vmem:[%s14] sm:$0xf]
        %v3822 = vld [vmem:[%s14 + $0x4] sm:$0xf]
        %v3823 = vpack.c.bf16 %v3818, %v3817
        %v3824 = vpack.c.bf16 %v3820, %v3819
        %v3825 = vld [vmem:[%s15] sm:$0xff]
        %v3826 = vld [vmem:[%s15 + $0x8] sm:$0xff]
        %3828 = vset.pattern.permute.xlu0 0
        %3829 = vperm.xlu0 %3828, %v3825
        %v3830 = vpop.permute.xlu0 %3829
        %3833 = vset.pattern.permute.xlu0 0
        %3834 = vperm.xlu0 %3833, %v3826
        %v3835 = vpop.permute.xlu0 %3834
        %v3839 = vunpack.c.l.b16 %v3821
        %v3840 = vunpack.c.l.b16 %v3822
        %v3841 = vpack.c.b16 %v3840, %v3839
        %vm3842 = vcmask 261120
        %v3844 = vsel %vm3842, %v3841, 0
        %3846 = vmatprep.subr.bf16.mxu0 0
        %3847 = vmatpush1.bf16.msra.mxu0 0
        %3848 = vmatprep.subr.bf16.mxu0 0
        %3849 = vmatpush1.bf16.msra.mxu0 0
        %3850 = vmatprep.subr.bf16.mxu0 0
        %3851 = vmatpush1.bf16.msra.mxu0 0
        %3852 = vmatprep.subr.bf16.mxu0 0
        %3853 = vmatpush1.bf16.msra.mxu0 0
        %3854 = vmatprep.subr.bf16.mxu0 0
        %3855 = vmatpush1.bf16.msra.mxu0 0
        %3856 = vmatprep.subr.bf16.mxu0 0
        %3857 = vmatpush1.bf16.msra.mxu0 0
        %3858 = vmatprep.subr.bf16.mxu0 0
        %3859 = vmatpush1.bf16.msra.mxu0 %v3824
        %3860 = vmatprep.subr.bf16.mxu0 0
        %3861 = vmatpush1.bf16.msra.mxu0 %v3823
        %3862 = vmatprep.subr.bf16.mxu0 0
        %3863 = vmatpush2.bf16.msra.mxu0 0
        %3864 = vmatprep.subr.bf16.mxu0 0
        %3865 = vmatpush2.bf16.msra.mxu0 0
        %3866 = vmatprep.subr.bf16.mxu0 0
        %3867 = vmatpush2.bf16.msra.mxu0 0
        %3868 = vmatprep.subr.bf16.mxu0 0
        %3869 = vmatpush2.bf16.msra.mxu0 0
        %3870 = vmatprep.subr.bf16.mxu0 0
        %3871 = vmatpush2.bf16.msra.mxu0 0
        %3872 = vmatprep.subr.bf16.mxu0 0
        %3873 = vmatpush2.bf16.msra.mxu0 0
        %3874 = vmatprep.subr.bf16.mxu0 0
        %3875 = vmatpush2.bf16.msra.mxu0 0
        %3876 = vmatprep.subr.bf16.mxu0 0
        %3877 = vmatpush2.bf16.msra.mxu0 0
        %3878 = vmatprep.mubr.bf16.mxu0 0
        %3879 = vmatmul.mubr.bf16.gmra.mxu0 %v3844
        %v3880 = vpop.f32.mrf.mxu0
        %v3881 = vadd.f32 %v3830, %v3880
        %v3882 = vpop.f32.mrf.mxu0
        %v3883 = vpop.f32.mrf.mxu0
        %v3884 = vadd.f32 %v3835, %v3883
        %v3885 = vpop.f32.mrf.mxu0
        %3886 = vdwg.mxu0
        %v3887 = vadd.f32 %v604, %v3881
        %v3888 = vadd.f32 %v605, %v3884
        %3889 = vst [vmem:[%s595] sm:$0xff] %v3887
        %3890 = vst [vmem:[%s595 + $0x8] sm:$0xff] %v3888
        %s3891 = sand.u32 %s445, 1
        %s3892 = scalar_lea.sflag [#allocation3], %s3891
        %s3893 = sand.u32 %s445, 1
        %s3894 = smul.addr %s3893, 16
        %s3895 = scalar_lea.vmem [#allocation2], %s3894
        // Predicated region
        $region97: #{visual_subnetwork_forward.1} parent=95 // pred_check
          %p3896 = pneg %p455
        $region98: #{visual_subnetwork_forward.1} parent=95 // pred_check_branch
          %3898 = sbr.rel (%p3896) target = $region100
        $region99: #{visual_subnetwork_forward.1} parent=95 // pred_region
          %s3900 = ssub.s32 256, 256
          %3901 = vsyncadd %s3892, %s3900
          %s3902 = smul.addr %s33, 2
          %s3903 = smul.addr %s3902, 128
          %s3904 = scalar_lea.hbm %s19, %s3903
          %s3905 = sshll.u32 %s3895, 4
          %s3906 = int_to_ptr.vmem [resolvable:$true] %s3905
          %3911 = dma.vmem_to_hbm [thread:$0]  %s3906, 256, %s3904, %s3892, 128, 128, 8
        $region100: #{visual_subnetwork_forward.1} parent=95 // pred_fallthru
          _
      $region96: #{visual_subnetwork_forward.1} parent=5 // pred_fallthru
        _
      %p3912 = scmp.le.s32.totalorder 2, %s28
      // Predicated region
      $region101: #{visual_subnetwork_forward.1} parent=5 // pred_check
        %p3913 = pneg %p3912
      $region102: #{visual_subnetwork_forward.1} parent=5 // pred_check_branch
        %3915 = sbr.rel (%p3913) target = $region104
      $region103: #{visual_subnetwork_forward.1} parent=5 // pred_region
        %s3916 = ssub.s32 %s28, 2
        // Predicated region
        $region105: #{visual_subnetwork_forward.1} parent=103 // pred_check
          %p3917 = pneg %p461
        $region106: #{visual_subnetwork_forward.1} parent=103 // pred_check_branch
          %3919 = sbr.rel (%p3917) target = $region108
        $region107: #{visual_subnetwork_forward.1} parent=103 // pred_region
          %s3920 = sand.u32 %s446, 1
          %s3921 = scalar_lea.sflag [#allocation3], %s3920
          %s3922 = sand.u32 %s446, 1
          %s3923 = smul.addr %s3922, 16
          %s3924 = scalar_lea.vmem [#allocation2], %s3923
          %3925 = dma.done %s3921, 256
        $region108: #{visual_subnetwork_forward.1} parent=103 // pred_fallthru
          _
      $region104: #{visual_subnetwork_forward.1} parent=5 // pred_fallthru
        _
    $region6: #{visual_subnetwork_forward.1} parent=1 // loop_footer
      %s32 = sadd.s32 1, %s28
    $region7: #{visual_subnetwork_forward.1} parent=1 // loop_footer_branch
      %27 = sbr.rel target = $region3
    $region8: #{visual_subnetwork_forward.1} parent=1 // loop_exit
      _
    %3926 = vsyncpa [#allocation3], 1
    %s3927 = scalar_lea.sflag [#allocation3], 1
    %3928 = vsyncpa %s3927, 1

</llo_original>
